<compile_context>
chip_gen: v6e
topology: v6e:2x2x1
jax: 0.10.0
libtpu: 0.0.40
codegen_flags: <defaults>
</compile_context>

<pallas_src>
import math

import jax
import jax.numpy as jnp
from jax import lax
from jax.experimental import pallas as pl
from jax.experimental.pallas import tpu as pltpu


# ---------------------------------------------------------------------------
# Exact (erf-based) GELU matching torch.nn.functional.gelu default.
# erf via Abramowitz & Stegun 7.1.26 (|err| <= ~1e-4 with the approx reciprocal),
# lowers with only exp / arithmetic / EUP reciprocal on Mosaic.
# ---------------------------------------------------------------------------
def _erf(x):
    a1, a2, a3, a4, a5 = 0.254829592, -0.284496736, 1.421413741, -1.453152027, 1.061405429
    p = 0.3275911
    s = jnp.where(x >= 0.0, 1.0, -1.0)
    ax = jnp.abs(x)
    t = pl.reciprocal(1.0 + p * ax, approx=True)      # EUP slot, off the VPU chain
    poly = ((((a5 * t + a4) * t + a3) * t + a2) * t + a1) * t
    return s * (1.0 - poly * jnp.exp(-ax * ax))


def _gelu(x):
    return 0.5 * x * (1.0 + _erf(x * 0.7071067811865476))


# ---------------------------------------------------------------------------
# Fused kernel, grid=(3,):
#   step 0 extra: MultichannelLinear (+GELU) folded into dense1 -> x2 scratch
#   every step : one residual layer pair  h = gelu(x2@Wa+ba); x2 = gelu(h@Wb+bb)+x2
#                (pairs: dense2/dense8, dense4/dense5, dense6/dense7)
#   last step  : dense3 (transposed weight) + softmax(dim=1)
# ---------------------------------------------------------------------------
def _fused_kernel(x_ref, wpw_ref, bpw_ref, w1_ref, b1_ref,
                  wstk_ref, bstk_ref, w3_ref, b3_ref, o_ref, x2_sc):
    step = pl.program_id(0)
    last = pl.num_programs(0) - 1

    G, _, K = wpw_ref.shape          # (groups, 32, input_dim*project)
    B = x_ref.shape[0]
    H = w1_ref.shape[2]

    # ---- step 0: MultichannelLinear + GELU, folded into dense1 ------------
    # dense1(flatten(gelu(mcl))) == sum_g gelu(mcl_g) @ W1_rows[g*32:(g+1)*32]
    # (torch flatten(1) of the (B,G,32) MCL output is group-major).
    @pl.when(step == 0)
    def _():
        xb = x_ref[...].astype(jnp.bfloat16)                       # (B, G*K)
        acc = jnp.zeros((B, H), jnp.float32)
        for g in range(G):                                         # unrolled, G=9
            xg = xb[:, g * K:(g + 1) * K]                          # (B, K)
            hg = lax.dot_general(xg, wpw_ref[g],                   # (B, 32), W (32, K)
                                 (((1,), (1,)), ((), ())),
                                 preferred_element_type=jnp.float32) + bpw_ref[g]
            acc = acc + jnp.dot(_gelu(hg).astype(jnp.bfloat16), w1_ref[g],
                                preferred_element_type=jnp.float32)
        x2_sc[...] = _gelu(acc + b1_ref[...])                      # gelu(dense1(...))

    # ---- residual layer pair for this step (weights streamed per step) ----
    x2 = x2_sc[...]
    h = _gelu(jnp.dot(x2.astype(jnp.bfloat16), wstk_ref[0],
                      preferred_element_type=jnp.float32) + bstk_ref[0])
    x2_new = _gelu(jnp.dot(h.astype(jnp.bfloat16), wstk_ref[1],
                           preferred_element_type=jnp.float32) + bstk_ref[1]) + x2
    x2_sc[...] = x2_new

    # ---- last step: dense3 (stored (C, H)) + softmax over classes ---------
    @pl.when(step == last)
    def _():
        logits = lax.dot_general(x2_new, w3_ref[...],
                                 (((1,), (1,)), ((), ())),
                                 preferred_element_type=jnp.float32) + b3_ref[...]
        m = jnp.max(logits, axis=-1, keepdims=True)
        e = jnp.exp(logits - m)
        o_ref[...] = e / jnp.sum(e, axis=-1, keepdims=True)


# ---------------------------------------------------------------------------
# Parameter init: same distributions/bounds as the PyTorch module, stored
# pre-transposed / pre-stacked in the layout the kernel consumes directly.
# ---------------------------------------------------------------------------
def init_params(key, num_classes, input_dim, num_pcas, project, hidden_dim):
    groups = int(math.ceil(num_pcas / project))
    k_feat = input_dim * project
    flat_dim = groups * 32
    keys = iter(jax.random.split(key, 16))

    bnd = 1.0 / math.sqrt(k_feat)
    params = {
        # torch-native MCL layout (G, out=32, in=K); bf16 (weight-DMA bound kernel).
        "w_pw": jax.random.uniform(next(keys), (groups, 32, k_feat),
                                   jnp.float32, -bnd, bnd).astype(jnp.bfloat16),
        "b_pw": jax.random.uniform(next(keys), (groups, 1, 32), jnp.float32, -bnd, bnd),
    }

    # dense1 stored as (G, 32, H): block g == rows [g*32:(g+1)*32] of the (flat_dim, H)
    # pre-transposed nn.Linear weight. bf16.
    bd = 1.0 / math.sqrt(flat_dim)
    params["dense1_w"] = jax.random.uniform(next(keys), (groups, 32, hidden_dim),
                                            jnp.float32, -bd, bd).astype(jnp.bfloat16)
    params["dense1_b"] = jax.random.uniform(next(keys), (1, hidden_dim), jnp.float32, -bd, bd)

    # Six 512x512 weights stacked in layer order (dense2, dense8, dense4, dense5,
    # dense6, dense7), each pre-transposed to (in, out); bf16. Biases stacked f32.
    bd = 1.0 / math.sqrt(hidden_dim)
    params["dense_stack_w"] = jax.random.uniform(
        next(keys), (6, hidden_dim, hidden_dim), jnp.float32, -bd, bd).astype(jnp.bfloat16)
    params["dense_stack_b"] = jax.random.uniform(
        next(keys), (6, 1, hidden_dim), jnp.float32, -bd, bd)

    # dense3 stored transposed (num_classes, hidden): lane-dense rows.
    params["dense3_w"] = jax.random.uniform(next(keys), (num_classes, hidden_dim),
                                            jnp.float32, -bd, bd)
    params["dense3_b"] = jax.random.uniform(next(keys), (1, num_classes),
                                            jnp.float32, -bd, bd)
    return params


# ---------------------------------------------------------------------------
# Forward wrapper: only zero-padding + a contiguous reshape outside the kernel.
# ---------------------------------------------------------------------------
def ind_mlp_forward(x, params, project=32):
    B, num_pcas, input_dim = x.shape
    pad = (-num_pcas) % project
    if pad:
        x = jnp.pad(x, ((0, 0), (0, pad), (0, 0)))    # == F.pad zero-pad of trailing channels
    groups = (num_pcas + pad) // project
    K = input_dim * project
    # Row-major (B, padded_channels, input_dim) -> (B, G*K): identical element order to
    # torch's reshape(B, G, K) followed by the per-group matmul.
    x_flat = x.reshape(B, groups * K)

    H = params["dense1_w"].shape[2]
    num_classes = params["dense3_w"].shape[0]
    n_layers = params["dense_stack_w"].shape[0]
    n_steps = n_layers // 2                            # one even/odd layer pair per step

    def const_spec(a):
        nd = a.ndim
        return pl.BlockSpec(a.shape, lambda k: (0,) * nd)   # resident across all steps

    grid_spec = pltpu.PrefetchScalarGridSpec(
        num_scalar_prefetch=0,
        grid=(n_steps,),
        in_specs=[
            const_spec(x_flat),
            const_spec(params["w_pw"]),
            const_spec(params["b_pw"]),
            const_spec(params["dense1_w"]),
            const_spec(params["dense1_b"]),
            pl.BlockSpec((2, H, H), lambda k: (k, 0, 0)),     # streamed weight pair
            pl.BlockSpec((2, 1, H), lambda k: (k, 0, 0)),     # streamed bias pair
            const_spec(params["dense3_w"]),
            const_spec(params["dense3_b"]),
        ],
        out_specs=pl.BlockSpec((B, num_classes), lambda k: (0, 0)),
        scratch_shapes=[pltpu.VMEM((B, H), jnp.float32)],     # running x2
    )

    return pl.pallas_call(
        _fused_kernel,
        out_shape=jax.ShapeDtypeStruct((B, num_classes), jnp.float32),
        grid_spec=grid_spec,
        compiler_params=pltpu.CompilerParams(dimension_semantics=("arbitrary",)),
    )(x_flat, params["w_pw"], params["b_pw"],
      params["dense1_w"], params["dense1_b"],
      params["dense_stack_w"], params["dense_stack_b"],
      params["dense3_w"], params["dense3_b"])
    # TODO(synk): if hidden_dim is ever scaled up (>~2048), re-derive an N/K-tiled grid
    # for the dense layers (whole-layer weight blocks won't fit v7x's 64 MiB VMEM).


if __name__ == "__main__":
    num_classes, input_dim, num_pcas, project, hidden = 2, 8, 279, 32, 512

    key = jax.random.PRNGKey(0)
    kx, kp = jax.random.split(key)
    params = init_params(kp, num_classes, input_dim, num_pcas, project, hidden)
    x = jax.random.normal(kx, (2, num_pcas, input_dim), jnp.float32)

    fwd = jax.jit(ind_mlp_forward)        # params are traced args: no runtime transposes
    out = fwd(x, params)
    jax.block_until_ready(out)

    assert out.shape == (2, num_classes)
    assert bool(jnp.all(jnp.isfinite(out)))
    assert bool(jnp.allclose(jnp.sum(out, axis=1), 1.0, atol=1e-4))  # softmax rows sum to 1
    print("KERNEL_OK")
</pallas_src>

<mosaic_0001>
module attributes {stable_mosaic.version = 11 : i64} {
  func.func @_fused_kernel(%arg0: i32, %arg1: memref<2x2304xf32, #tpu.memory_space<vmem>>, %arg2: memref<9x32x256xbf16, #tpu.memory_space<vmem>>, %arg3: memref<9x1x32xf32, #tpu.memory_space<vmem>>, %arg4: memref<9x32x512xbf16, #tpu.memory_space<vmem>>, %arg5: memref<1x512xf32, #tpu.memory_space<vmem>>, %arg6: memref<2x512x512xbf16, #tpu.memory_space<vmem>>, %arg7: memref<2x1x512xf32, #tpu.memory_space<vmem>>, %arg8: memref<2x512xf32, #tpu.memory_space<vmem>>, %arg9: memref<1x2xf32, #tpu.memory_space<vmem>>, %arg10: memref<2x2xf32, #tpu.memory_space<vmem>>, %arg11: memref<2x512xf32, #tpu.memory_space<vmem>>) attributes {dimension_semantics = [#tpu.dimension_semantics<arbitrary>], iteration_bounds = array<i64: 3>, scalar_prefetch = 0 : i64, scratch_operands = 1 : i64, tpu.core_type = #tpu.core_type<tc>, window_params = [{pipeline_mode = #tpu.pipeline_mode<synchronous>, transform_indices = @transform_0, window_bounds = array<i64: 2, 2304>}, {pipeline_mode = #tpu.pipeline_mode<synchronous>, transform_indices = @transform_1, window_bounds = array<i64: 9, 32, 256>}, {pipeline_mode = #tpu.pipeline_mode<synchronous>, transform_indices = @transform_2, window_bounds = array<i64: 9, 1, 32>}, {pipeline_mode = #tpu.pipeline_mode<synchronous>, transform_indices = @transform_3, window_bounds = array<i64: 9, 32, 512>}, {pipeline_mode = #tpu.pipeline_mode<synchronous>, transform_indices = @transform_4, window_bounds = array<i64: 1, 512>}, {transform_indices = @transform_5, window_bounds = array<i64: 2, 512, 512>}, {transform_indices = @transform_6, window_bounds = array<i64: 2, 1, 512>}, {pipeline_mode = #tpu.pipeline_mode<synchronous>, transform_indices = @transform_7, window_bounds = array<i64: 2, 512>}, {pipeline_mode = #tpu.pipeline_mode<synchronous>, transform_indices = @transform_8, window_bounds = array<i64: 1, 2>}, {pipeline_mode = #tpu.pipeline_mode<synchronous>, transform_indices = @transform_9, window_bounds = array<i64: 2, 2>}]} {
    %c0_i32 = arith.constant 0 : i32
    %0 = arith.cmpi eq, %arg0, %c0_i32 : i32
    %1 = arith.extui %0 : i1 to i32
    %c0_i32_0 = arith.constant 0 : i32
    %2 = arith.cmpi ne, %1, %c0_i32_0 : i32
    scf.if %2 {
      %c0_47 = arith.constant 0 : index
      %c0_48 = arith.constant 0 : index
      %105 = vector.load %arg1[%c0_47, %c0_48] : memref<2x2304xf32, #tpu.memory_space<vmem>>, vector<2x2304xf32>
      %106 = arith.truncf %105 : vector<2x2304xf32> to vector<2x2304xbf16>
      %cst_49 = arith.constant 0.000000e+00 : f32
      %107 = vector.broadcast %cst_49 : f32 to vector<2x512xf32>
      %108 = vector.extract_strided_slice %106 {offsets = [0, 0], sizes = [2, 256], strides = [1, 1]} : vector<2x2304xbf16> to vector<2x256xbf16>
      %c0_50 = arith.constant 0 : index
      %c0_51 = arith.constant 0 : index
      %c0_52 = arith.constant 0 : index
      %109 = vector.load %arg2[%c0_50, %c0_51, %c0_52] : memref<9x32x256xbf16, #tpu.memory_space<vmem>>, vector<1x32x256xbf16>
      %110 = vector.shape_cast %109 : vector<1x32x256xbf16> to vector<32x256xbf16>
      %cst_53 = arith.constant dense<0.000000e+00> : vector<2x32xf32>
      %111 = tpu.matmul %108, %110, %cst_53 {dimension_numbers = #tpu.dot_dimension_numbers<[1], [1], [0], [0], [0, 0, 1, 0], [], []>} : vector<2x256xbf16>, vector<32x256xbf16>, vector<2x32xf32> -> vector<2x32xf32>
      %c0_54 = arith.constant 0 : index
      %c0_55 = arith.constant 0 : index
      %c0_56 = arith.constant 0 : index
      %112 = vector.load %arg3[%c0_54, %c0_55, %c0_56] : memref<9x1x32xf32, #tpu.memory_space<vmem>>, vector<1x1x32xf32>
      %113 = vector.shape_cast %112 : vector<1x1x32xf32> to vector<1x32xf32>
      %114 = vector.broadcast %113 : vector<1x32xf32> to vector<2x32xf32>
      %115 = arith.addf %111, %114 : vector<2x32xf32>
      %cst_57 = arith.constant 5.000000e-01 : f32
      %116 = vector.broadcast %cst_57 : f32 to vector<2x32xf32>
      %117 = arith.mulf %116, %115 : vector<2x32xf32>
      %cst_58 = arith.constant 0.707106769 : f32
      %118 = vector.broadcast %cst_58 : f32 to vector<2x32xf32>
      %119 = arith.mulf %115, %118 : vector<2x32xf32>
      %cst_59 = arith.constant 0.000000e+00 : f32
      %120 = vector.broadcast %cst_59 : f32 to vector<2x32xf32>
      %121 = arith.cmpf oge, %119, %120 : vector<2x32xf32>
      %cst_60 = arith.constant 1.000000e+00 : f32
      %cst_61 = arith.constant -1.000000e+00 : f32
      %122 = vector.broadcast %cst_60 : f32 to vector<2x32xf32>
      %123 = vector.broadcast %cst_61 : f32 to vector<2x32xf32>
      %124 = arith.select %121, %122, %123 : vector<2x32xi1>, vector<2x32xf32>
      %125 = math.absf %119 : vector<2x32xf32>
      %cst_62 = arith.constant 0.327591091 : f32
      %126 = vector.broadcast %cst_62 : f32 to vector<2x32xf32>
      %127 = arith.mulf %126, %125 : vector<2x32xf32>
      %cst_63 = arith.constant 1.000000e+00 : f32
      %128 = vector.broadcast %cst_63 : f32 to vector<2x32xf32>
      %129 = arith.addf %128, %127 : vector<2x32xf32>
      %130 = tpu.reciprocal %129 {approx = true} : vector<2x32xf32> -> vector<2x32xf32>
      %cst_64 = arith.constant 1.06140542 : f32
      %131 = vector.broadcast %cst_64 : f32 to vector<2x32xf32>
      %132 = arith.mulf %131, %130 : vector<2x32xf32>
      %cst_65 = arith.constant -1.45315206 : f32
      %133 = vector.broadcast %cst_65 : f32 to vector<2x32xf32>
      %134 = arith.addf %132, %133 : vector<2x32xf32>
      %135 = arith.mulf %134, %130 : vector<2x32xf32>
      %cst_66 = arith.constant 1.42141378 : f32
      %136 = vector.broadcast %cst_66 : f32 to vector<2x32xf32>
      %137 = arith.addf %135, %136 : vector<2x32xf32>
      %138 = arith.mulf %137, %130 : vector<2x32xf32>
      %cst_67 = arith.constant -0.284496725 : f32
      %139 = vector.broadcast %cst_67 : f32 to vector<2x32xf32>
      %140 = arith.addf %138, %139 : vector<2x32xf32>
      %141 = arith.mulf %140, %130 : vector<2x32xf32>
      %cst_68 = arith.constant 0.254829586 : f32
      %142 = vector.broadcast %cst_68 : f32 to vector<2x32xf32>
      %143 = arith.addf %141, %142 : vector<2x32xf32>
      %144 = arith.mulf %143, %130 : vector<2x32xf32>
      %cst_69 = arith.constant 0.000000e+00 : f32
      %145 = vector.broadcast %cst_69 : f32 to vector<2x32xf32>
      %146 = arith.subf %145, %125 : vector<2x32xf32>
      %147 = arith.mulf %146, %125 : vector<2x32xf32>
      %148 = math.exp %147 : vector<2x32xf32>
      %149 = arith.mulf %144, %148 : vector<2x32xf32>
      %cst_70 = arith.constant 1.000000e+00 : f32
      %150 = vector.broadcast %cst_70 : f32 to vector<2x32xf32>
      %151 = arith.subf %150, %149 : vector<2x32xf32>
      %152 = arith.mulf %124, %151 : vector<2x32xf32>
      %cst_71 = arith.constant 1.000000e+00 : f32
      %153 = vector.broadcast %cst_71 : f32 to vector<2x32xf32>
      %154 = arith.addf %153, %152 : vector<2x32xf32>
      %155 = arith.mulf %117, %154 : vector<2x32xf32>
      %156 = arith.truncf %155 : vector<2x32xf32> to vector<2x32xbf16>
      %c0_72 = arith.constant 0 : index
      %c0_73 = arith.constant 0 : index
      %c0_74 = arith.constant 0 : index
      %157 = vector.load %arg4[%c0_72, %c0_73, %c0_74] : memref<9x32x512xbf16, #tpu.memory_space<vmem>>, vector<1x32x512xbf16>
      %158 = vector.shape_cast %157 : vector<1x32x512xbf16> to vector<32x512xbf16>
      %cst_75 = arith.constant dense<0.000000e+00> : vector<2x512xf32>
      %159 = tpu.matmul %156, %158, %cst_75 {dimension_numbers = #tpu.dot_dimension_numbers<[1], [0], [0], [1], [0, 0, 1, 1], [], []>} : vector<2x32xbf16>, vector<32x512xbf16>, vector<2x512xf32> -> vector<2x512xf32>
      %160 = arith.addf %107, %159 : vector<2x512xf32>
      %161 = vector.extract_strided_slice %106 {offsets = [0, 256], sizes = [2, 256], strides = [1, 1]} : vector<2x2304xbf16> to vector<2x256xbf16>
      %c1_76 = arith.constant 1 : index
      %c0_77 = arith.constant 0 : index
      %c0_78 = arith.constant 0 : index
      %162 = vector.load %arg2[%c1_76, %c0_77, %c0_78] : memref<9x32x256xbf16, #tpu.memory_space<vmem>>, vector<1x32x256xbf16>
      %163 = vector.shape_cast %162 : vector<1x32x256xbf16> to vector<32x256xbf16>
      %cst_79 = arith.constant dense<0.000000e+00> : vector<2x32xf32>
      %164 = tpu.matmul %161, %163, %cst_79 {dimension_numbers = #tpu.dot_dimension_numbers<[1], [1], [0], [0], [0, 0, 1, 0], [], []>} : vector<2x256xbf16>, vector<32x256xbf16>, vector<2x32xf32> -> vector<2x32xf32>
      %c1_80 = arith.constant 1 : index
      %c0_81 = arith.constant 0 : index
      %c0_82 = arith.constant 0 : index
      %165 = vector.load %arg3[%c1_80, %c0_81, %c0_82] : memref<9x1x32xf32, #tpu.memory_space<vmem>>, vector<1x1x32xf32>
      %166 = vector.shape_cast %165 : vector<1x1x32xf32> to vector<1x32xf32>
      %167 = vector.broadcast %166 : vector<1x32xf32> to vector<2x32xf32>
      %168 = arith.addf %164, %167 : vector<2x32xf32>
      %cst_83 = arith.constant 5.000000e-01 : f32
      %169 = vector.broadcast %cst_83 : f32 to vector<2x32xf32>
      %170 = arith.mulf %169, %168 : vector<2x32xf32>
      %cst_84 = arith.constant 0.707106769 : f32
      %171 = vector.broadcast %cst_84 : f32 to vector<2x32xf32>
      %172 = arith.mulf %168, %171 : vector<2x32xf32>
      %cst_85 = arith.constant 0.000000e+00 : f32
      %173 = vector.broadcast %cst_85 : f32 to vector<2x32xf32>
      %174 = arith.cmpf oge, %172, %173 : vector<2x32xf32>
      %cst_86 = arith.constant 1.000000e+00 : f32
      %cst_87 = arith.constant -1.000000e+00 : f32
      %175 = vector.broadcast %cst_86 : f32 to vector<2x32xf32>
      %176 = vector.broadcast %cst_87 : f32 to vector<2x32xf32>
      %177 = arith.select %174, %175, %176 : vector<2x32xi1>, vector<2x32xf32>
      %178 = math.absf %172 : vector<2x32xf32>
      %cst_88 = arith.constant 0.327591091 : f32
      %179 = vector.broadcast %cst_88 : f32 to vector<2x32xf32>
      %180 = arith.mulf %179, %178 : vector<2x32xf32>
      %cst_89 = arith.constant 1.000000e+00 : f32
      %181 = vector.broadcast %cst_89 : f32 to vector<2x32xf32>
      %182 = arith.addf %181, %180 : vector<2x32xf32>
      %183 = tpu.reciprocal %182 {approx = true} : vector<2x32xf32> -> vector<2x32xf32>
      %cst_90 = arith.constant 1.06140542 : f32
      %184 = vector.broadcast %cst_90 : f32 to vector<2x32xf32>
      %185 = arith.mulf %184, %183 : vector<2x32xf32>
      %cst_91 = arith.constant -1.45315206 : f32
      %186 = vector.broadcast %cst_91 : f32 to vector<2x32xf32>
      %187 = arith.addf %185, %186 : vector<2x32xf32>
      %188 = arith.mulf %187, %183 : vector<2x32xf32>
      %cst_92 = arith.constant 1.42141378 : f32
      %189 = vector.broadcast %cst_92 : f32 to vector<2x32xf32>
      %190 = arith.addf %188, %189 : vector<2x32xf32>
      %191 = arith.mulf %190, %183 : vector<2x32xf32>
      %cst_93 = arith.constant -0.284496725 : f32
      %192 = vector.broadcast %cst_93 : f32 to vector<2x32xf32>
      %193 = arith.addf %191, %192 : vector<2x32xf32>
      %194 = arith.mulf %193, %183 : vector<2x32xf32>
      %cst_94 = arith.constant 0.254829586 : f32
      %195 = vector.broadcast %cst_94 : f32 to vector<2x32xf32>
      %196 = arith.addf %194, %195 : vector<2x32xf32>
      %197 = arith.mulf %196, %183 : vector<2x32xf32>
      %cst_95 = arith.constant 0.000000e+00 : f32
      %198 = vector.broadcast %cst_95 : f32 to vector<2x32xf32>
      %199 = arith.subf %198, %178 : vector<2x32xf32>
      %200 = arith.mulf %199, %178 : vector<2x32xf32>
      %201 = math.exp %200 : vector<2x32xf32>
      %202 = arith.mulf %197, %201 : vector<2x32xf32>
      %cst_96 = arith.constant 1.000000e+00 : f32
      %203 = vector.broadcast %cst_96 : f32 to vector<2x32xf32>
      %204 = arith.subf %203, %202 : vector<2x32xf32>
      %205 = arith.mulf %177, %204 : vector<2x32xf32>
      %cst_97 = arith.constant 1.000000e+00 : f32
      %206 = vector.broadcast %cst_97 : f32 to vector<2x32xf32>
      %207 = arith.addf %206, %205 : vector<2x32xf32>
      %208 = arith.mulf %170, %207 : vector<2x32xf32>
      %209 = arith.truncf %208 : vector<2x32xf32> to vector<2x32xbf16>
      %c1_98 = arith.constant 1 : index
      %c0_99 = arith.constant 0 : index
      %c0_100 = arith.constant 0 : index
      %210 = vector.load %arg4[%c1_98, %c0_99, %c0_100] : memref<9x32x512xbf16, #tpu.memory_space<vmem>>, vector<1x32x512xbf16>
      %211 = vector.shape_cast %210 : vector<1x32x512xbf16> to vector<32x512xbf16>
      %cst_101 = arith.constant dense<0.000000e+00> : vector<2x512xf32>
      %212 = tpu.matmul %209, %211, %cst_101 {dimension_numbers = #tpu.dot_dimension_numbers<[1], [0], [0], [1], [0, 0, 1, 1], [], []>} : vector<2x32xbf16>, vector<32x512xbf16>, vector<2x512xf32> -> vector<2x512xf32>
      %213 = arith.addf %160, %212 : vector<2x512xf32>
      %214 = vector.extract_strided_slice %106 {offsets = [0, 512], sizes = [2, 256], strides = [1, 1]} : vector<2x2304xbf16> to vector<2x256xbf16>
      %c2 = arith.constant 2 : index
      %c0_102 = arith.constant 0 : index
      %c0_103 = arith.constant 0 : index
      %215 = vector.load %arg2[%c2, %c0_102, %c0_103] : memref<9x32x256xbf16, #tpu.memory_space<vmem>>, vector<1x32x256xbf16>
      %216 = vector.shape_cast %215 : vector<1x32x256xbf16> to vector<32x256xbf16>
      %cst_104 = arith.constant dense<0.000000e+00> : vector<2x32xf32>
      %217 = tpu.matmul %214, %216, %cst_104 {dimension_numbers = #tpu.dot_dimension_numbers<[1], [1], [0], [0], [0, 0, 1, 0], [], []>} : vector<2x256xbf16>, vector<32x256xbf16>, vector<2x32xf32> -> vector<2x32xf32>
      %c2_105 = arith.constant 2 : index
      %c0_106 = arith.constant 0 : index
      %c0_107 = arith.constant 0 : index
      %218 = vector.load %arg3[%c2_105, %c0_106, %c0_107] : memref<9x1x32xf32, #tpu.memory_space<vmem>>, vector<1x1x32xf32>
      %219 = vector.shape_cast %218 : vector<1x1x32xf32> to vector<1x32xf32>
      %220 = vector.broadcast %219 : vector<1x32xf32> to vector<2x32xf32>
      %221 = arith.addf %217, %220 : vector<2x32xf32>
      %cst_108 = arith.constant 5.000000e-01 : f32
      %222 = vector.broadcast %cst_108 : f32 to vector<2x32xf32>
      %223 = arith.mulf %222, %221 : vector<2x32xf32>
      %cst_109 = arith.constant 0.707106769 : f32
      %224 = vector.broadcast %cst_109 : f32 to vector<2x32xf32>
      %225 = arith.mulf %221, %224 : vector<2x32xf32>
      %cst_110 = arith.constant 0.000000e+00 : f32
      %226 = vector.broadcast %cst_110 : f32 to vector<2x32xf32>
      %227 = arith.cmpf oge, %225, %226 : vector<2x32xf32>
      %cst_111 = arith.constant 1.000000e+00 : f32
      %cst_112 = arith.constant -1.000000e+00 : f32
      %228 = vector.broadcast %cst_111 : f32 to vector<2x32xf32>
      %229 = vector.broadcast %cst_112 : f32 to vector<2x32xf32>
      %230 = arith.select %227, %228, %229 : vector<2x32xi1>, vector<2x32xf32>
      %231 = math.absf %225 : vector<2x32xf32>
      %cst_113 = arith.constant 0.327591091 : f32
      %232 = vector.broadcast %cst_113 : f32 to vector<2x32xf32>
      %233 = arith.mulf %232, %231 : vector<2x32xf32>
      %cst_114 = arith.constant 1.000000e+00 : f32
      %234 = vector.broadcast %cst_114 : f32 to vector<2x32xf32>
      %235 = arith.addf %234, %233 : vector<2x32xf32>
      %236 = tpu.reciprocal %235 {approx = true} : vector<2x32xf32> -> vector<2x32xf32>
      %cst_115 = arith.constant 1.06140542 : f32
      %237 = vector.broadcast %cst_115 : f32 to vector<2x32xf32>
      %238 = arith.mulf %237, %236 : vector<2x32xf32>
      %cst_116 = arith.constant -1.45315206 : f32
      %239 = vector.broadcast %cst_116 : f32 to vector<2x32xf32>
      %240 = arith.addf %238, %239 : vector<2x32xf32>
      %241 = arith.mulf %240, %236 : vector<2x32xf32>
      %cst_117 = arith.constant 1.42141378 : f32
      %242 = vector.broadcast %cst_117 : f32 to vector<2x32xf32>
      %243 = arith.addf %241, %242 : vector<2x32xf32>
      %244 = arith.mulf %243, %236 : vector<2x32xf32>
      %cst_118 = arith.constant -0.284496725 : f32
      %245 = vector.broadcast %cst_118 : f32 to vector<2x32xf32>
      %246 = arith.addf %244, %245 : vector<2x32xf32>
      %247 = arith.mulf %246, %236 : vector<2x32xf32>
      %cst_119 = arith.constant 0.254829586 : f32
      %248 = vector.broadcast %cst_119 : f32 to vector<2x32xf32>
      %249 = arith.addf %247, %248 : vector<2x32xf32>
      %250 = arith.mulf %249, %236 : vector<2x32xf32>
      %cst_120 = arith.constant 0.000000e+00 : f32
      %251 = vector.broadcast %cst_120 : f32 to vector<2x32xf32>
      %252 = arith.subf %251, %231 : vector<2x32xf32>
      %253 = arith.mulf %252, %231 : vector<2x32xf32>
      %254 = math.exp %253 : vector<2x32xf32>
      %255 = arith.mulf %250, %254 : vector<2x32xf32>
      %cst_121 = arith.constant 1.000000e+00 : f32
      %256 = vector.broadcast %cst_121 : f32 to vector<2x32xf32>
      %257 = arith.subf %256, %255 : vector<2x32xf32>
      %258 = arith.mulf %230, %257 : vector<2x32xf32>
      %cst_122 = arith.constant 1.000000e+00 : f32
      %259 = vector.broadcast %cst_122 : f32 to vector<2x32xf32>
      %260 = arith.addf %259, %258 : vector<2x32xf32>
      %261 = arith.mulf %223, %260 : vector<2x32xf32>
      %262 = arith.truncf %261 : vector<2x32xf32> to vector<2x32xbf16>
      %c2_123 = arith.constant 2 : index
      %c0_124 = arith.constant 0 : index
      %c0_125 = arith.constant 0 : index
      %263 = vector.load %arg4[%c2_123, %c0_124, %c0_125] : memref<9x32x512xbf16, #tpu.memory_space<vmem>>, vector<1x32x512xbf16>
      %264 = vector.shape_cast %263 : vector<1x32x512xbf16> to vector<32x512xbf16>
      %cst_126 = arith.constant dense<0.000000e+00> : vector<2x512xf32>
      %265 = tpu.matmul %262, %264, %cst_126 {dimension_numbers = #tpu.dot_dimension_numbers<[1], [0], [0], [1], [0, 0, 1, 1], [], []>} : vector<2x32xbf16>, vector<32x512xbf16>, vector<2x512xf32> -> vector<2x512xf32>
      %266 = arith.addf %213, %265 : vector<2x512xf32>
      %267 = vector.extract_strided_slice %106 {offsets = [0, 768], sizes = [2, 256], strides = [1, 1]} : vector<2x2304xbf16> to vector<2x256xbf16>
      %c3 = arith.constant 3 : index
      %c0_127 = arith.constant 0 : index
      %c0_128 = arith.constant 0 : index
      %268 = vector.load %arg2[%c3, %c0_127, %c0_128] : memref<9x32x256xbf16, #tpu.memory_space<vmem>>, vector<1x32x256xbf16>
      %269 = vector.shape_cast %268 : vector<1x32x256xbf16> to vector<32x256xbf16>
      %cst_129 = arith.constant dense<0.000000e+00> : vector<2x32xf32>
      %270 = tpu.matmul %267, %269, %cst_129 {dimension_numbers = #tpu.dot_dimension_numbers<[1], [1], [0], [0], [0, 0, 1, 0], [], []>} : vector<2x256xbf16>, vector<32x256xbf16>, vector<2x32xf32> -> vector<2x32xf32>
      %c3_130 = arith.constant 3 : index
      %c0_131 = arith.constant 0 : index
      %c0_132 = arith.constant 0 : index
      %271 = vector.load %arg3[%c3_130, %c0_131, %c0_132] : memref<9x1x32xf32, #tpu.memory_space<vmem>>, vector<1x1x32xf32>
      %272 = vector.shape_cast %271 : vector<1x1x32xf32> to vector<1x32xf32>
      %273 = vector.broadcast %272 : vector<1x32xf32> to vector<2x32xf32>
      %274 = arith.addf %270, %273 : vector<2x32xf32>
      %cst_133 = arith.constant 5.000000e-01 : f32
      %275 = vector.broadcast %cst_133 : f32 to vector<2x32xf32>
      %276 = arith.mulf %275, %274 : vector<2x32xf32>
      %cst_134 = arith.constant 0.707106769 : f32
      %277 = vector.broadcast %cst_134 : f32 to vector<2x32xf32>
      %278 = arith.mulf %274, %277 : vector<2x32xf32>
      %cst_135 = arith.constant 0.000000e+00 : f32
      %279 = vector.broadcast %cst_135 : f32 to vector<2x32xf32>
      %280 = arith.cmpf oge, %278, %279 : vector<2x32xf32>
      %cst_136 = arith.constant 1.000000e+00 : f32
      %cst_137 = arith.constant -1.000000e+00 : f32
      %281 = vector.broadcast %cst_136 : f32 to vector<2x32xf32>
      %282 = vector.broadcast %cst_137 : f32 to vector<2x32xf32>
      %283 = arith.select %280, %281, %282 : vector<2x32xi1>, vector<2x32xf32>
      %284 = math.absf %278 : vector<2x32xf32>
      %cst_138 = arith.constant 0.327591091 : f32
      %285 = vector.broadcast %cst_138 : f32 to vector<2x32xf32>
      %286 = arith.mulf %285, %284 : vector<2x32xf32>
      %cst_139 = arith.constant 1.000000e+00 : f32
      %287 = vector.broadcast %cst_139 : f32 to vector<2x32xf32>
      %288 = arith.addf %287, %286 : vector<2x32xf32>
      %289 = tpu.reciprocal %288 {approx = true} : vector<2x32xf32> -> vector<2x32xf32>
      %cst_140 = arith.constant 1.06140542 : f32
      %290 = vector.broadcast %cst_140 : f32 to vector<2x32xf32>
      %291 = arith.mulf %290, %289 : vector<2x32xf32>
      %cst_141 = arith.constant -1.45315206 : f32
      %292 = vector.broadcast %cst_141 : f32 to vector<2x32xf32>
      %293 = arith.addf %291, %292 : vector<2x32xf32>
      %294 = arith.mulf %293, %289 : vector<2x32xf32>
      %cst_142 = arith.constant 1.42141378 : f32
      %295 = vector.broadcast %cst_142 : f32 to vector<2x32xf32>
      %296 = arith.addf %294, %295 : vector<2x32xf32>
      %297 = arith.mulf %296, %289 : vector<2x32xf32>
      %cst_143 = arith.constant -0.284496725 : f32
      %298 = vector.broadcast %cst_143 : f32 to vector<2x32xf32>
      %299 = arith.addf %297, %298 : vector<2x32xf32>
      %300 = arith.mulf %299, %289 : vector<2x32xf32>
      %cst_144 = arith.constant 0.254829586 : f32
      %301 = vector.broadcast %cst_144 : f32 to vector<2x32xf32>
      %302 = arith.addf %300, %301 : vector<2x32xf32>
      %303 = arith.mulf %302, %289 : vector<2x32xf32>
      %cst_145 = arith.constant 0.000000e+00 : f32
      %304 = vector.broadcast %cst_145 : f32 to vector<2x32xf32>
      %305 = arith.subf %304, %284 : vector<2x32xf32>
      %306 = arith.mulf %305, %284 : vector<2x32xf32>
      %307 = math.exp %306 : vector<2x32xf32>
      %308 = arith.mulf %303, %307 : vector<2x32xf32>
      %cst_146 = arith.constant 1.000000e+00 : f32
      %309 = vector.broadcast %cst_146 : f32 to vector<2x32xf32>
      %310 = arith.subf %309, %308 : vector<2x32xf32>
      %311 = arith.mulf %283, %310 : vector<2x32xf32>
      %cst_147 = arith.constant 1.000000e+00 : f32
      %312 = vector.broadcast %cst_147 : f32 to vector<2x32xf32>
      %313 = arith.addf %312, %311 : vector<2x32xf32>
      %314 = arith.mulf %276, %313 : vector<2x32xf32>
      %315 = arith.truncf %314 : vector<2x32xf32> to vector<2x32xbf16>
      %c3_148 = arith.constant 3 : index
      %c0_149 = arith.constant 0 : index
      %c0_150 = arith.constant 0 : index
      %316 = vector.load %arg4[%c3_148, %c0_149, %c0_150] : memref<9x32x512xbf16, #tpu.memory_space<vmem>>, vector<1x32x512xbf16>
      %317 = vector.shape_cast %316 : vector<1x32x512xbf16> to vector<32x512xbf16>
      %cst_151 = arith.constant dense<0.000000e+00> : vector<2x512xf32>
      %318 = tpu.matmul %315, %317, %cst_151 {dimension_numbers = #tpu.dot_dimension_numbers<[1], [0], [0], [1], [0, 0, 1, 1], [], []>} : vector<2x32xbf16>, vector<32x512xbf16>, vector<2x512xf32> -> vector<2x512xf32>
      %319 = arith.addf %266, %318 : vector<2x512xf32>
      %320 = vector.extract_strided_slice %106 {offsets = [0, 1024], sizes = [2, 256], strides = [1, 1]} : vector<2x2304xbf16> to vector<2x256xbf16>
      %c4 = arith.constant 4 : index
      %c0_152 = arith.constant 0 : index
      %c0_153 = arith.constant 0 : index
      %321 = vector.load %arg2[%c4, %c0_152, %c0_153] : memref<9x32x256xbf16, #tpu.memory_space<vmem>>, vector<1x32x256xbf16>
      %322 = vector.shape_cast %321 : vector<1x32x256xbf16> to vector<32x256xbf16>
      %cst_154 = arith.constant dense<0.000000e+00> : vector<2x32xf32>
      %323 = tpu.matmul %320, %322, %cst_154 {dimension_numbers = #tpu.dot_dimension_numbers<[1], [1], [0], [0], [0, 0, 1, 0], [], []>} : vector<2x256xbf16>, vector<32x256xbf16>, vector<2x32xf32> -> vector<2x32xf32>
      %c4_155 = arith.constant 4 : index
      %c0_156 = arith.constant 0 : index
      %c0_157 = arith.constant 0 : index
      %324 = vector.load %arg3[%c4_155, %c0_156, %c0_157] : memref<9x1x32xf32, #tpu.memory_space<vmem>>, vector<1x1x32xf32>
      %325 = vector.shape_cast %324 : vector<1x1x32xf32> to vector<1x32xf32>
      %326 = vector.broadcast %325 : vector<1x32xf32> to vector<2x32xf32>
      %327 = arith.addf %323, %326 : vector<2x32xf32>
      %cst_158 = arith.constant 5.000000e-01 : f32
      %328 = vector.broadcast %cst_158 : f32 to vector<2x32xf32>
      %329 = arith.mulf %328, %327 : vector<2x32xf32>
      %cst_159 = arith.constant 0.707106769 : f32
      %330 = vector.broadcast %cst_159 : f32 to vector<2x32xf32>
      %331 = arith.mulf %327, %330 : vector<2x32xf32>
      %cst_160 = arith.constant 0.000000e+00 : f32
      %332 = vector.broadcast %cst_160 : f32 to vector<2x32xf32>
      %333 = arith.cmpf oge, %331, %332 : vector<2x32xf32>
      %cst_161 = arith.constant 1.000000e+00 : f32
      %cst_162 = arith.constant -1.000000e+00 : f32
      %334 = vector.broadcast %cst_161 : f32 to vector<2x32xf32>
      %335 = vector.broadcast %cst_162 : f32 to vector<2x32xf32>
      %336 = arith.select %333, %334, %335 : vector<2x32xi1>, vector<2x32xf32>
      %337 = math.absf %331 : vector<2x32xf32>
      %cst_163 = arith.constant 0.327591091 : f32
      %338 = vector.broadcast %cst_163 : f32 to vector<2x32xf32>
      %339 = arith.mulf %338, %337 : vector<2x32xf32>
      %cst_164 = arith.constant 1.000000e+00 : f32
      %340 = vector.broadcast %cst_164 : f32 to vector<2x32xf32>
      %341 = arith.addf %340, %339 : vector<2x32xf32>
      %342 = tpu.reciprocal %341 {approx = true} : vector<2x32xf32> -> vector<2x32xf32>
      %cst_165 = arith.constant 1.06140542 : f32
      %343 = vector.broadcast %cst_165 : f32 to vector<2x32xf32>
      %344 = arith.mulf %343, %342 : vector<2x32xf32>
      %cst_166 = arith.constant -1.45315206 : f32
      %345 = vector.broadcast %cst_166 : f32 to vector<2x32xf32>
      %346 = arith.addf %344, %345 : vector<2x32xf32>
      %347 = arith.mulf %346, %342 : vector<2x32xf32>
      %cst_167 = arith.constant 1.42141378 : f32
      %348 = vector.broadcast %cst_167 : f32 to vector<2x32xf32>
      %349 = arith.addf %347, %348 : vector<2x32xf32>
      %350 = arith.mulf %349, %342 : vector<2x32xf32>
      %cst_168 = arith.constant -0.284496725 : f32
      %351 = vector.broadcast %cst_168 : f32 to vector<2x32xf32>
      %352 = arith.addf %350, %351 : vector<2x32xf32>
      %353 = arith.mulf %352, %342 : vector<2x32xf32>
      %cst_169 = arith.constant 0.254829586 : f32
      %354 = vector.broadcast %cst_169 : f32 to vector<2x32xf32>
      %355 = arith.addf %353, %354 : vector<2x32xf32>
      %356 = arith.mulf %355, %342 : vector<2x32xf32>
      %cst_170 = arith.constant 0.000000e+00 : f32
      %357 = vector.broadcast %cst_170 : f32 to vector<2x32xf32>
      %358 = arith.subf %357, %337 : vector<2x32xf32>
      %359 = arith.mulf %358, %337 : vector<2x32xf32>
      %360 = math.exp %359 : vector<2x32xf32>
      %361 = arith.mulf %356, %360 : vector<2x32xf32>
      %cst_171 = arith.constant 1.000000e+00 : f32
      %362 = vector.broadcast %cst_171 : f32 to vector<2x32xf32>
      %363 = arith.subf %362, %361 : vector<2x32xf32>
      %364 = arith.mulf %336, %363 : vector<2x32xf32>
      %cst_172 = arith.constant 1.000000e+00 : f32
      %365 = vector.broadcast %cst_172 : f32 to vector<2x32xf32>
      %366 = arith.addf %365, %364 : vector<2x32xf32>
      %367 = arith.mulf %329, %366 : vector<2x32xf32>
      %368 = arith.truncf %367 : vector<2x32xf32> to vector<2x32xbf16>
      %c4_173 = arith.constant 4 : index
      %c0_174 = arith.constant 0 : index
      %c0_175 = arith.constant 0 : index
      %369 = vector.load %arg4[%c4_173, %c0_174, %c0_175] : memref<9x32x512xbf16, #tpu.memory_space<vmem>>, vector<1x32x512xbf16>
      %370 = vector.shape_cast %369 : vector<1x32x512xbf16> to vector<32x512xbf16>
      %cst_176 = arith.constant dense<0.000000e+00> : vector<2x512xf32>
      %371 = tpu.matmul %368, %370, %cst_176 {dimension_numbers = #tpu.dot_dimension_numbers<[1], [0], [0], [1], [0, 0, 1, 1], [], []>} : vector<2x32xbf16>, vector<32x512xbf16>, vector<2x512xf32> -> vector<2x512xf32>
      %372 = arith.addf %319, %371 : vector<2x512xf32>
      %373 = vector.extract_strided_slice %106 {offsets = [0, 1280], sizes = [2, 256], strides = [1, 1]} : vector<2x2304xbf16> to vector<2x256xbf16>
      %c5 = arith.constant 5 : index
      %c0_177 = arith.constant 0 : index
      %c0_178 = arith.constant 0 : index
      %374 = vector.load %arg2[%c5, %c0_177, %c0_178] : memref<9x32x256xbf16, #tpu.memory_space<vmem>>, vector<1x32x256xbf16>
      %375 = vector.shape_cast %374 : vector<1x32x256xbf16> to vector<32x256xbf16>
      %cst_179 = arith.constant dense<0.000000e+00> : vector<2x32xf32>
      %376 = tpu.matmul %373, %375, %cst_179 {dimension_numbers = #tpu.dot_dimension_numbers<[1], [1], [0], [0], [0, 0, 1, 0], [], []>} : vector<2x256xbf16>, vector<32x256xbf16>, vector<2x32xf32> -> vector<2x32xf32>
      %c5_180 = arith.constant 5 : index
      %c0_181 = arith.constant 0 : index
      %c0_182 = arith.constant 0 : index
      %377 = vector.load %arg3[%c5_180, %c0_181, %c0_182] : memref<9x1x32xf32, #tpu.memory_space<vmem>>, vector<1x1x32xf32>
      %378 = vector.shape_cast %377 : vector<1x1x32xf32> to vector<1x32xf32>
      %379 = vector.broadcast %378 : vector<1x32xf32> to vector<2x32xf32>
      %380 = arith.addf %376, %379 : vector<2x32xf32>
      %cst_183 = arith.constant 5.000000e-01 : f32
      %381 = vector.broadcast %cst_183 : f32 to vector<2x32xf32>
      %382 = arith.mulf %381, %380 : vector<2x32xf32>
      %cst_184 = arith.constant 0.707106769 : f32
      %383 = vector.broadcast %cst_184 : f32 to vector<2x32xf32>
      %384 = arith.mulf %380, %383 : vector<2x32xf32>
      %cst_185 = arith.constant 0.000000e+00 : f32
      %385 = vector.broadcast %cst_185 : f32 to vector<2x32xf32>
      %386 = arith.cmpf oge, %384, %385 : vector<2x32xf32>
      %cst_186 = arith.constant 1.000000e+00 : f32
      %cst_187 = arith.constant -1.000000e+00 : f32
      %387 = vector.broadcast %cst_186 : f32 to vector<2x32xf32>
      %388 = vector.broadcast %cst_187 : f32 to vector<2x32xf32>
      %389 = arith.select %386, %387, %388 : vector<2x32xi1>, vector<2x32xf32>
      %390 = math.absf %384 : vector<2x32xf32>
      %cst_188 = arith.constant 0.327591091 : f32
      %391 = vector.broadcast %cst_188 : f32 to vector<2x32xf32>
      %392 = arith.mulf %391, %390 : vector<2x32xf32>
      %cst_189 = arith.constant 1.000000e+00 : f32
      %393 = vector.broadcast %cst_189 : f32 to vector<2x32xf32>
      %394 = arith.addf %393, %392 : vector<2x32xf32>
      %395 = tpu.reciprocal %394 {approx = true} : vector<2x32xf32> -> vector<2x32xf32>
      %cst_190 = arith.constant 1.06140542 : f32
      %396 = vector.broadcast %cst_190 : f32 to vector<2x32xf32>
      %397 = arith.mulf %396, %395 : vector<2x32xf32>
      %cst_191 = arith.constant -1.45315206 : f32
      %398 = vector.broadcast %cst_191 : f32 to vector<2x32xf32>
      %399 = arith.addf %397, %398 : vector<2x32xf32>
      %400 = arith.mulf %399, %395 : vector<2x32xf32>
      %cst_192 = arith.constant 1.42141378 : f32
      %401 = vector.broadcast %cst_192 : f32 to vector<2x32xf32>
      %402 = arith.addf %400, %401 : vector<2x32xf32>
      %403 = arith.mulf %402, %395 : vector<2x32xf32>
      %cst_193 = arith.constant -0.284496725 : f32
      %404 = vector.broadcast %cst_193 : f32 to vector<2x32xf32>
      %405 = arith.addf %403, %404 : vector<2x32xf32>
      %406 = arith.mulf %405, %395 : vector<2x32xf32>
      %cst_194 = arith.constant 0.254829586 : f32
      %407 = vector.broadcast %cst_194 : f32 to vector<2x32xf32>
      %408 = arith.addf %406, %407 : vector<2x32xf32>
      %409 = arith.mulf %408, %395 : vector<2x32xf32>
      %cst_195 = arith.constant 0.000000e+00 : f32
      %410 = vector.broadcast %cst_195 : f32 to vector<2x32xf32>
      %411 = arith.subf %410, %390 : vector<2x32xf32>
      %412 = arith.mulf %411, %390 : vector<2x32xf32>
      %413 = math.exp %412 : vector<2x32xf32>
      %414 = arith.mulf %409, %413 : vector<2x32xf32>
      %cst_196 = arith.constant 1.000000e+00 : f32
      %415 = vector.broadcast %cst_196 : f32 to vector<2x32xf32>
      %416 = arith.subf %415, %414 : vector<2x32xf32>
      %417 = arith.mulf %389, %416 : vector<2x32xf32>
      %cst_197 = arith.constant 1.000000e+00 : f32
      %418 = vector.broadcast %cst_197 : f32 to vector<2x32xf32>
      %419 = arith.addf %418, %417 : vector<2x32xf32>
      %420 = arith.mulf %382, %419 : vector<2x32xf32>
      %421 = arith.truncf %420 : vector<2x32xf32> to vector<2x32xbf16>
      %c5_198 = arith.constant 5 : index
      %c0_199 = arith.constant 0 : index
      %c0_200 = arith.constant 0 : index
      %422 = vector.load %arg4[%c5_198, %c0_199, %c0_200] : memref<9x32x512xbf16, #tpu.memory_space<vmem>>, vector<1x32x512xbf16>
      %423 = vector.shape_cast %422 : vector<1x32x512xbf16> to vector<32x512xbf16>
      %cst_201 = arith.constant dense<0.000000e+00> : vector<2x512xf32>
      %424 = tpu.matmul %421, %423, %cst_201 {dimension_numbers = #tpu.dot_dimension_numbers<[1], [0], [0], [1], [0, 0, 1, 1], [], []>} : vector<2x32xbf16>, vector<32x512xbf16>, vector<2x512xf32> -> vector<2x512xf32>
      %425 = arith.addf %372, %424 : vector<2x512xf32>
      %426 = vector.extract_strided_slice %106 {offsets = [0, 1536], sizes = [2, 256], strides = [1, 1]} : vector<2x2304xbf16> to vector<2x256xbf16>
      %c6 = arith.constant 6 : index
      %c0_202 = arith.constant 0 : index
      %c0_203 = arith.constant 0 : index
      %427 = vector.load %arg2[%c6, %c0_202, %c0_203] : memref<9x32x256xbf16, #tpu.memory_space<vmem>>, vector<1x32x256xbf16>
      %428 = vector.shape_cast %427 : vector<1x32x256xbf16> to vector<32x256xbf16>
      %cst_204 = arith.constant dense<0.000000e+00> : vector<2x32xf32>
      %429 = tpu.matmul %426, %428, %cst_204 {dimension_numbers = #tpu.dot_dimension_numbers<[1], [1], [0], [0], [0, 0, 1, 0], [], []>} : vector<2x256xbf16>, vector<32x256xbf16>, vector<2x32xf32> -> vector<2x32xf32>
      %c6_205 = arith.constant 6 : index
      %c0_206 = arith.constant 0 : index
      %c0_207 = arith.constant 0 : index
      %430 = vector.load %arg3[%c6_205, %c0_206, %c0_207] : memref<9x1x32xf32, #tpu.memory_space<vmem>>, vector<1x1x32xf32>
      %431 = vector.shape_cast %430 : vector<1x1x32xf32> to vector<1x32xf32>
      %432 = vector.broadcast %431 : vector<1x32xf32> to vector<2x32xf32>
      %433 = arith.addf %429, %432 : vector<2x32xf32>
      %cst_208 = arith.constant 5.000000e-01 : f32
      %434 = vector.broadcast %cst_208 : f32 to vector<2x32xf32>
      %435 = arith.mulf %434, %433 : vector<2x32xf32>
      %cst_209 = arith.constant 0.707106769 : f32
      %436 = vector.broadcast %cst_209 : f32 to vector<2x32xf32>
      %437 = arith.mulf %433, %436 : vector<2x32xf32>
      %cst_210 = arith.constant 0.000000e+00 : f32
      %438 = vector.broadcast %cst_210 : f32 to vector<2x32xf32>
      %439 = arith.cmpf oge, %437, %438 : vector<2x32xf32>
      %cst_211 = arith.constant 1.000000e+00 : f32
      %cst_212 = arith.constant -1.000000e+00 : f32
      %440 = vector.broadcast %cst_211 : f32 to vector<2x32xf32>
      %441 = vector.broadcast %cst_212 : f32 to vector<2x32xf32>
      %442 = arith.select %439, %440, %441 : vector<2x32xi1>, vector<2x32xf32>
      %443 = math.absf %437 : vector<2x32xf32>
      %cst_213 = arith.constant 0.327591091 : f32
      %444 = vector.broadcast %cst_213 : f32 to vector<2x32xf32>
      %445 = arith.mulf %444, %443 : vector<2x32xf32>
      %cst_214 = arith.constant 1.000000e+00 : f32
      %446 = vector.broadcast %cst_214 : f32 to vector<2x32xf32>
      %447 = arith.addf %446, %445 : vector<2x32xf32>
      %448 = tpu.reciprocal %447 {approx = true} : vector<2x32xf32> -> vector<2x32xf32>
      %cst_215 = arith.constant 1.06140542 : f32
      %449 = vector.broadcast %cst_215 : f32 to vector<2x32xf32>
      %450 = arith.mulf %449, %448 : vector<2x32xf32>
      %cst_216 = arith.constant -1.45315206 : f32
      %451 = vector.broadcast %cst_216 : f32 to vector<2x32xf32>
      %452 = arith.addf %450, %451 : vector<2x32xf32>
      %453 = arith.mulf %452, %448 : vector<2x32xf32>
      %cst_217 = arith.constant 1.42141378 : f32
      %454 = vector.broadcast %cst_217 : f32 to vector<2x32xf32>
      %455 = arith.addf %453, %454 : vector<2x32xf32>
      %456 = arith.mulf %455, %448 : vector<2x32xf32>
      %cst_218 = arith.constant -0.284496725 : f32
      %457 = vector.broadcast %cst_218 : f32 to vector<2x32xf32>
      %458 = arith.addf %456, %457 : vector<2x32xf32>
      %459 = arith.mulf %458, %448 : vector<2x32xf32>
      %cst_219 = arith.constant 0.254829586 : f32
      %460 = vector.broadcast %cst_219 : f32 to vector<2x32xf32>
      %461 = arith.addf %459, %460 : vector<2x32xf32>
      %462 = arith.mulf %461, %448 : vector<2x32xf32>
      %cst_220 = arith.constant 0.000000e+00 : f32
      %463 = vector.broadcast %cst_220 : f32 to vector<2x32xf32>
      %464 = arith.subf %463, %443 : vector<2x32xf32>
      %465 = arith.mulf %464, %443 : vector<2x32xf32>
      %466 = math.exp %465 : vector<2x32xf32>
      %467 = arith.mulf %462, %466 : vector<2x32xf32>
      %cst_221 = arith.constant 1.000000e+00 : f32
      %468 = vector.broadcast %cst_221 : f32 to vector<2x32xf32>
      %469 = arith.subf %468, %467 : vector<2x32xf32>
      %470 = arith.mulf %442, %469 : vector<2x32xf32>
      %cst_222 = arith.constant 1.000000e+00 : f32
      %471 = vector.broadcast %cst_222 : f32 to vector<2x32xf32>
      %472 = arith.addf %471, %470 : vector<2x32xf32>
      %473 = arith.mulf %435, %472 : vector<2x32xf32>
      %474 = arith.truncf %473 : vector<2x32xf32> to vector<2x32xbf16>
      %c6_223 = arith.constant 6 : index
      %c0_224 = arith.constant 0 : index
      %c0_225 = arith.constant 0 : index
      %475 = vector.load %arg4[%c6_223, %c0_224, %c0_225] : memref<9x32x512xbf16, #tpu.memory_space<vmem>>, vector<1x32x512xbf16>
      %476 = vector.shape_cast %475 : vector<1x32x512xbf16> to vector<32x512xbf16>
      %cst_226 = arith.constant dense<0.000000e+00> : vector<2x512xf32>
      %477 = tpu.matmul %474, %476, %cst_226 {dimension_numbers = #tpu.dot_dimension_numbers<[1], [0], [0], [1], [0, 0, 1, 1], [], []>} : vector<2x32xbf16>, vector<32x512xbf16>, vector<2x512xf32> -> vector<2x512xf32>
      %478 = arith.addf %425, %477 : vector<2x512xf32>
      %479 = vector.extract_strided_slice %106 {offsets = [0, 1792], sizes = [2, 256], strides = [1, 1]} : vector<2x2304xbf16> to vector<2x256xbf16>
      %c7 = arith.constant 7 : index
      %c0_227 = arith.constant 0 : index
      %c0_228 = arith.constant 0 : index
      %480 = vector.load %arg2[%c7, %c0_227, %c0_228] : memref<9x32x256xbf16, #tpu.memory_space<vmem>>, vector<1x32x256xbf16>
      %481 = vector.shape_cast %480 : vector<1x32x256xbf16> to vector<32x256xbf16>
      %cst_229 = arith.constant dense<0.000000e+00> : vector<2x32xf32>
      %482 = tpu.matmul %479, %481, %cst_229 {dimension_numbers = #tpu.dot_dimension_numbers<[1], [1], [0], [0], [0, 0, 1, 0], [], []>} : vector<2x256xbf16>, vector<32x256xbf16>, vector<2x32xf32> -> vector<2x32xf32>
      %c7_230 = arith.constant 7 : index
      %c0_231 = arith.constant 0 : index
      %c0_232 = arith.constant 0 : index
      %483 = vector.load %arg3[%c7_230, %c0_231, %c0_232] : memref<9x1x32xf32, #tpu.memory_space<vmem>>, vector<1x1x32xf32>
      %484 = vector.shape_cast %483 : vector<1x1x32xf32> to vector<1x32xf32>
      %485 = vector.broadcast %484 : vector<1x32xf32> to vector<2x32xf32>
      %486 = arith.addf %482, %485 : vector<2x32xf32>
      %cst_233 = arith.constant 5.000000e-01 : f32
      %487 = vector.broadcast %cst_233 : f32 to vector<2x32xf32>
      %488 = arith.mulf %487, %486 : vector<2x32xf32>
      %cst_234 = arith.constant 0.707106769 : f32
      %489 = vector.broadcast %cst_234 : f32 to vector<2x32xf32>
      %490 = arith.mulf %486, %489 : vector<2x32xf32>
      %cst_235 = arith.constant 0.000000e+00 : f32
      %491 = vector.broadcast %cst_235 : f32 to vector<2x32xf32>
      %492 = arith.cmpf oge, %490, %491 : vector<2x32xf32>
      %cst_236 = arith.constant 1.000000e+00 : f32
      %cst_237 = arith.constant -1.000000e+00 : f32
      %493 = vector.broadcast %cst_236 : f32 to vector<2x32xf32>
      %494 = vector.broadcast %cst_237 : f32 to vector<2x32xf32>
      %495 = arith.select %492, %493, %494 : vector<2x32xi1>, vector<2x32xf32>
      %496 = math.absf %490 : vector<2x32xf32>
      %cst_238 = arith.constant 0.327591091 : f32
      %497 = vector.broadcast %cst_238 : f32 to vector<2x32xf32>
      %498 = arith.mulf %497, %496 : vector<2x32xf32>
      %cst_239 = arith.constant 1.000000e+00 : f32
      %499 = vector.broadcast %cst_239 : f32 to vector<2x32xf32>
      %500 = arith.addf %499, %498 : vector<2x32xf32>
      %501 = tpu.reciprocal %500 {approx = true} : vector<2x32xf32> -> vector<2x32xf32>
      %cst_240 = arith.constant 1.06140542 : f32
      %502 = vector.broadcast %cst_240 : f32 to vector<2x32xf32>
      %503 = arith.mulf %502, %501 : vector<2x32xf32>
      %cst_241 = arith.constant -1.45315206 : f32
      %504 = vector.broadcast %cst_241 : f32 to vector<2x32xf32>
      %505 = arith.addf %503, %504 : vector<2x32xf32>
      %506 = arith.mulf %505, %501 : vector<2x32xf32>
      %cst_242 = arith.constant 1.42141378 : f32
      %507 = vector.broadcast %cst_242 : f32 to vector<2x32xf32>
      %508 = arith.addf %506, %507 : vector<2x32xf32>
      %509 = arith.mulf %508, %501 : vector<2x32xf32>
      %cst_243 = arith.constant -0.284496725 : f32
      %510 = vector.broadcast %cst_243 : f32 to vector<2x32xf32>
      %511 = arith.addf %509, %510 : vector<2x32xf32>
      %512 = arith.mulf %511, %501 : vector<2x32xf32>
      %cst_244 = arith.constant 0.254829586 : f32
      %513 = vector.broadcast %cst_244 : f32 to vector<2x32xf32>
      %514 = arith.addf %512, %513 : vector<2x32xf32>
      %515 = arith.mulf %514, %501 : vector<2x32xf32>
      %cst_245 = arith.constant 0.000000e+00 : f32
      %516 = vector.broadcast %cst_245 : f32 to vector<2x32xf32>
      %517 = arith.subf %516, %496 : vector<2x32xf32>
      %518 = arith.mulf %517, %496 : vector<2x32xf32>
      %519 = math.exp %518 : vector<2x32xf32>
      %520 = arith.mulf %515, %519 : vector<2x32xf32>
      %cst_246 = arith.constant 1.000000e+00 : f32
      %521 = vector.broadcast %cst_246 : f32 to vector<2x32xf32>
      %522 = arith.subf %521, %520 : vector<2x32xf32>
      %523 = arith.mulf %495, %522 : vector<2x32xf32>
      %cst_247 = arith.constant 1.000000e+00 : f32
      %524 = vector.broadcast %cst_247 : f32 to vector<2x32xf32>
      %525 = arith.addf %524, %523 : vector<2x32xf32>
      %526 = arith.mulf %488, %525 : vector<2x32xf32>
      %527 = arith.truncf %526 : vector<2x32xf32> to vector<2x32xbf16>
      %c7_248 = arith.constant 7 : index
      %c0_249 = arith.constant 0 : index
      %c0_250 = arith.constant 0 : index
      %528 = vector.load %arg4[%c7_248, %c0_249, %c0_250] : memref<9x32x512xbf16, #tpu.memory_space<vmem>>, vector<1x32x512xbf16>
      %529 = vector.shape_cast %528 : vector<1x32x512xbf16> to vector<32x512xbf16>
      %cst_251 = arith.constant dense<0.000000e+00> : vector<2x512xf32>
      %530 = tpu.matmul %527, %529, %cst_251 {dimension_numbers = #tpu.dot_dimension_numbers<[1], [0], [0], [1], [0, 0, 1, 1], [], []>} : vector<2x32xbf16>, vector<32x512xbf16>, vector<2x512xf32> -> vector<2x512xf32>
      %531 = arith.addf %478, %530 : vector<2x512xf32>
      %532 = vector.extract_strided_slice %106 {offsets = [0, 2048], sizes = [2, 256], strides = [1, 1]} : vector<2x2304xbf16> to vector<2x256xbf16>
      %c8 = arith.constant 8 : index
      %c0_252 = arith.constant 0 : index
      %c0_253 = arith.constant 0 : index
      %533 = vector.load %arg2[%c8, %c0_252, %c0_253] : memref<9x32x256xbf16, #tpu.memory_space<vmem>>, vector<1x32x256xbf16>
      %534 = vector.shape_cast %533 : vector<1x32x256xbf16> to vector<32x256xbf16>
      %cst_254 = arith.constant dense<0.000000e+00> : vector<2x32xf32>
      %535 = tpu.matmul %532, %534, %cst_254 {dimension_numbers = #tpu.dot_dimension_numbers<[1], [1], [0], [0], [0, 0, 1, 0], [], []>} : vector<2x256xbf16>, vector<32x256xbf16>, vector<2x32xf32> -> vector<2x32xf32>
      %c8_255 = arith.constant 8 : index
      %c0_256 = arith.constant 0 : index
      %c0_257 = arith.constant 0 : index
      %536 = vector.load %arg3[%c8_255, %c0_256, %c0_257] : memref<9x1x32xf32, #tpu.memory_space<vmem>>, vector<1x1x32xf32>
      %537 = vector.shape_cast %536 : vector<1x1x32xf32> to vector<1x32xf32>
      %538 = vector.broadcast %537 : vector<1x32xf32> to vector<2x32xf32>
      %539 = arith.addf %535, %538 : vector<2x32xf32>
      %cst_258 = arith.constant 5.000000e-01 : f32
      %540 = vector.broadcast %cst_258 : f32 to vector<2x32xf32>
      %541 = arith.mulf %540, %539 : vector<2x32xf32>
      %cst_259 = arith.constant 0.707106769 : f32
      %542 = vector.broadcast %cst_259 : f32 to vector<2x32xf32>
      %543 = arith.mulf %539, %542 : vector<2x32xf32>
      %cst_260 = arith.constant 0.000000e+00 : f32
      %544 = vector.broadcast %cst_260 : f32 to vector<2x32xf32>
      %545 = arith.cmpf oge, %543, %544 : vector<2x32xf32>
      %cst_261 = arith.constant 1.000000e+00 : f32
      %cst_262 = arith.constant -1.000000e+00 : f32
      %546 = vector.broadcast %cst_261 : f32 to vector<2x32xf32>
      %547 = vector.broadcast %cst_262 : f32 to vector<2x32xf32>
      %548 = arith.select %545, %546, %547 : vector<2x32xi1>, vector<2x32xf32>
      %549 = math.absf %543 : vector<2x32xf32>
      %cst_263 = arith.constant 0.327591091 : f32
      %550 = vector.broadcast %cst_263 : f32 to vector<2x32xf32>
      %551 = arith.mulf %550, %549 : vector<2x32xf32>
      %cst_264 = arith.constant 1.000000e+00 : f32
      %552 = vector.broadcast %cst_264 : f32 to vector<2x32xf32>
      %553 = arith.addf %552, %551 : vector<2x32xf32>
      %554 = tpu.reciprocal %553 {approx = true} : vector<2x32xf32> -> vector<2x32xf32>
      %cst_265 = arith.constant 1.06140542 : f32
      %555 = vector.broadcast %cst_265 : f32 to vector<2x32xf32>
      %556 = arith.mulf %555, %554 : vector<2x32xf32>
      %cst_266 = arith.constant -1.45315206 : f32
      %557 = vector.broadcast %cst_266 : f32 to vector<2x32xf32>
      %558 = arith.addf %556, %557 : vector<2x32xf32>
      %559 = arith.mulf %558, %554 : vector<2x32xf32>
      %cst_267 = arith.constant 1.42141378 : f32
      %560 = vector.broadcast %cst_267 : f32 to vector<2x32xf32>
      %561 = arith.addf %559, %560 : vector<2x32xf32>
      %562 = arith.mulf %561, %554 : vector<2x32xf32>
      %cst_268 = arith.constant -0.284496725 : f32
      %563 = vector.broadcast %cst_268 : f32 to vector<2x32xf32>
      %564 = arith.addf %562, %563 : vector<2x32xf32>
      %565 = arith.mulf %564, %554 : vector<2x32xf32>
      %cst_269 = arith.constant 0.254829586 : f32
      %566 = vector.broadcast %cst_269 : f32 to vector<2x32xf32>
      %567 = arith.addf %565, %566 : vector<2x32xf32>
      %568 = arith.mulf %567, %554 : vector<2x32xf32>
      %cst_270 = arith.constant 0.000000e+00 : f32
      %569 = vector.broadcast %cst_270 : f32 to vector<2x32xf32>
      %570 = arith.subf %569, %549 : vector<2x32xf32>
      %571 = arith.mulf %570, %549 : vector<2x32xf32>
      %572 = math.exp %571 : vector<2x32xf32>
      %573 = arith.mulf %568, %572 : vector<2x32xf32>
      %cst_271 = arith.constant 1.000000e+00 : f32
      %574 = vector.broadcast %cst_271 : f32 to vector<2x32xf32>
      %575 = arith.subf %574, %573 : vector<2x32xf32>
      %576 = arith.mulf %548, %575 : vector<2x32xf32>
      %cst_272 = arith.constant 1.000000e+00 : f32
      %577 = vector.broadcast %cst_272 : f32 to vector<2x32xf32>
      %578 = arith.addf %577, %576 : vector<2x32xf32>
      %579 = arith.mulf %541, %578 : vector<2x32xf32>
      %580 = arith.truncf %579 : vector<2x32xf32> to vector<2x32xbf16>
      %c8_273 = arith.constant 8 : index
      %c0_274 = arith.constant 0 : index
      %c0_275 = arith.constant 0 : index
      %581 = vector.load %arg4[%c8_273, %c0_274, %c0_275] : memref<9x32x512xbf16, #tpu.memory_space<vmem>>, vector<1x32x512xbf16>
      %582 = vector.shape_cast %581 : vector<1x32x512xbf16> to vector<32x512xbf16>
      %cst_276 = arith.constant dense<0.000000e+00> : vector<2x512xf32>
      %583 = tpu.matmul %580, %582, %cst_276 {dimension_numbers = #tpu.dot_dimension_numbers<[1], [0], [0], [1], [0, 0, 1, 1], [], []>} : vector<2x32xbf16>, vector<32x512xbf16>, vector<2x512xf32> -> vector<2x512xf32>
      %584 = arith.addf %531, %583 : vector<2x512xf32>
      %c0_277 = arith.constant 0 : index
      %c0_278 = arith.constant 0 : index
      %585 = vector.load %arg5[%c0_277, %c0_278] : memref<1x512xf32, #tpu.memory_space<vmem>>, vector<1x512xf32>
      %586 = vector.broadcast %585 : vector<1x512xf32> to vector<2x512xf32>
      %587 = arith.addf %584, %586 : vector<2x512xf32>
      %cst_279 = arith.constant 5.000000e-01 : f32
      %588 = vector.broadcast %cst_279 : f32 to vector<2x512xf32>
      %589 = arith.mulf %588, %587 : vector<2x512xf32>
      %cst_280 = arith.constant 0.707106769 : f32
      %590 = vector.broadcast %cst_280 : f32 to vector<2x512xf32>
      %591 = arith.mulf %587, %590 : vector<2x512xf32>
      %cst_281 = arith.constant 0.000000e+00 : f32
      %592 = vector.broadcast %cst_281 : f32 to vector<2x512xf32>
      %593 = arith.cmpf oge, %591, %592 : vector<2x512xf32>
      %cst_282 = arith.constant 1.000000e+00 : f32
      %cst_283 = arith.constant -1.000000e+00 : f32
      %594 = vector.broadcast %cst_282 : f32 to vector<2x512xf32>
      %595 = vector.broadcast %cst_283 : f32 to vector<2x512xf32>
      %596 = arith.select %593, %594, %595 : vector<2x512xi1>, vector<2x512xf32>
      %597 = math.absf %591 : vector<2x512xf32>
      %cst_284 = arith.constant 0.327591091 : f32
      %598 = vector.broadcast %cst_284 : f32 to vector<2x512xf32>
      %599 = arith.mulf %598, %597 : vector<2x512xf32>
      %cst_285 = arith.constant 1.000000e+00 : f32
      %600 = vector.broadcast %cst_285 : f32 to vector<2x512xf32>
      %601 = arith.addf %600, %599 : vector<2x512xf32>
      %602 = tpu.reciprocal %601 {approx = true} : vector<2x512xf32> -> vector<2x512xf32>
      %cst_286 = arith.constant 1.06140542 : f32
      %603 = vector.broadcast %cst_286 : f32 to vector<2x512xf32>
      %604 = arith.mulf %603, %602 : vector<2x512xf32>
      %cst_287 = arith.constant -1.45315206 : f32
      %605 = vector.broadcast %cst_287 : f32 to vector<2x512xf32>
      %606 = arith.addf %604, %605 : vector<2x512xf32>
      %607 = arith.mulf %606, %602 : vector<2x512xf32>
      %cst_288 = arith.constant 1.42141378 : f32
      %608 = vector.broadcast %cst_288 : f32 to vector<2x512xf32>
      %609 = arith.addf %607, %608 : vector<2x512xf32>
      %610 = arith.mulf %609, %602 : vector<2x512xf32>
      %cst_289 = arith.constant -0.284496725 : f32
      %611 = vector.broadcast %cst_289 : f32 to vector<2x512xf32>
      %612 = arith.addf %610, %611 : vector<2x512xf32>
      %613 = arith.mulf %612, %602 : vector<2x512xf32>
      %cst_290 = arith.constant 0.254829586 : f32
      %614 = vector.broadcast %cst_290 : f32 to vector<2x512xf32>
      %615 = arith.addf %613, %614 : vector<2x512xf32>
      %616 = arith.mulf %615, %602 : vector<2x512xf32>
      %cst_291 = arith.constant 0.000000e+00 : f32
      %617 = vector.broadcast %cst_291 : f32 to vector<2x512xf32>
      %618 = arith.subf %617, %597 : vector<2x512xf32>
      %619 = arith.mulf %618, %597 : vector<2x512xf32>
      %620 = math.exp %619 : vector<2x512xf32>
      %621 = arith.mulf %616, %620 : vector<2x512xf32>
      %cst_292 = arith.constant 1.000000e+00 : f32
      %622 = vector.broadcast %cst_292 : f32 to vector<2x512xf32>
      %623 = arith.subf %622, %621 : vector<2x512xf32>
      %624 = arith.mulf %596, %623 : vector<2x512xf32>
      %cst_293 = arith.constant 1.000000e+00 : f32
      %625 = vector.broadcast %cst_293 : f32 to vector<2x512xf32>
      %626 = arith.addf %625, %624 : vector<2x512xf32>
      %627 = arith.mulf %589, %626 : vector<2x512xf32>
      %c0_294 = arith.constant 0 : index
      %c0_295 = arith.constant 0 : index
      %628 = vector.load %arg11[%c0_294, %c0_295] : memref<2x512xf32, #tpu.memory_space<vmem>>, vector<2x512xf32>
      tpu.vector_store %arg11[%c0_294, %c0_295], %627 {strides = array<i32>} : memref<2x512xf32, #tpu.memory_space<vmem>>, vector<2x512xf32>,
    } else {
    }
    %c0 = arith.constant 0 : index
    %c0_1 = arith.constant 0 : index
    %3 = vector.load %arg11[%c0, %c0_1] : memref<2x512xf32, #tpu.memory_space<vmem>>, vector<2x512xf32>
    %4 = arith.truncf %3 : vector<2x512xf32> to vector<2x512xbf16>
    %c0_2 = arith.constant 0 : index
    %c0_3 = arith.constant 0 : index
    %c0_4 = arith.constant 0 : index
    %5 = vector.load %arg6[%c0_2, %c0_3, %c0_4] : memref<2x512x512xbf16, #tpu.memory_space<vmem>>, vector<1x512x512xbf16>
    %6 = vector.shape_cast %5 : vector<1x512x512xbf16> to vector<512x512xbf16>
    %cst = arith.constant dense<0.000000e+00> : vector<2x512xf32>
    %7 = tpu.matmul %4, %6, %cst {dimension_numbers = #tpu.dot_dimension_numbers<[1], [0], [0], [1], [0, 0, 1, 1], [], []>} : vector<2x512xbf16>, vector<512x512xbf16>, vector<2x512xf32> -> vector<2x512xf32>
    %c0_5 = arith.constant 0 : index
    %c0_6 = arith.constant 0 : index
    %c0_7 = arith.constant 0 : index
    %8 = vector.load %arg7[%c0_5, %c0_6, %c0_7] : memref<2x1x512xf32, #tpu.memory_space<vmem>>, vector<1x1x512xf32>
    %9 = vector.shape_cast %8 : vector<1x1x512xf32> to vector<1x512xf32>
    %10 = vector.broadcast %9 : vector<1x512xf32> to vector<2x512xf32>
    %11 = arith.addf %7, %10 : vector<2x512xf32>
    %cst_8 = arith.constant 5.000000e-01 : f32
    %12 = vector.broadcast %cst_8 : f32 to vector<2x512xf32>
    %13 = arith.mulf %12, %11 : vector<2x512xf32>
    %cst_9 = arith.constant 0.707106769 : f32
    %14 = vector.broadcast %cst_9 : f32 to vector<2x512xf32>
    %15 = arith.mulf %11, %14 : vector<2x512xf32>
    %cst_10 = arith.constant 0.000000e+00 : f32
    %16 = vector.broadcast %cst_10 : f32 to vector<2x512xf32>
    %17 = arith.cmpf oge, %15, %16 : vector<2x512xf32>
    %cst_11 = arith.constant 1.000000e+00 : f32
    %cst_12 = arith.constant -1.000000e+00 : f32
    %18 = vector.broadcast %cst_11 : f32 to vector<2x512xf32>
    %19 = vector.broadcast %cst_12 : f32 to vector<2x512xf32>
    %20 = arith.select %17, %18, %19 : vector<2x512xi1>, vector<2x512xf32>
    %21 = math.absf %15 : vector<2x512xf32>
    %cst_13 = arith.constant 0.327591091 : f32
    %22 = vector.broadcast %cst_13 : f32 to vector<2x512xf32>
    %23 = arith.mulf %22, %21 : vector<2x512xf32>
    %cst_14 = arith.constant 1.000000e+00 : f32
    %24 = vector.broadcast %cst_14 : f32 to vector<2x512xf32>
    %25 = arith.addf %24, %23 : vector<2x512xf32>
    %26 = tpu.reciprocal %25 {approx = true} : vector<2x512xf32> -> vector<2x512xf32>
    %cst_15 = arith.constant 1.06140542 : f32
    %27 = vector.broadcast %cst_15 : f32 to vector<2x512xf32>
    %28 = arith.mulf %27, %26 : vector<2x512xf32>
    %cst_16 = arith.constant -1.45315206 : f32
    %29 = vector.broadcast %cst_16 : f32 to vector<2x512xf32>
    %30 = arith.addf %28, %29 : vector<2x512xf32>
    %31 = arith.mulf %30, %26 : vector<2x512xf32>
    %cst_17 = arith.constant 1.42141378 : f32
    %32 = vector.broadcast %cst_17 : f32 to vector<2x512xf32>
    %33 = arith.addf %31, %32 : vector<2x512xf32>
    %34 = arith.mulf %33, %26 : vector<2x512xf32>
    %cst_18 = arith.constant -0.284496725 : f32
    %35 = vector.broadcast %cst_18 : f32 to vector<2x512xf32>
    %36 = arith.addf %34, %35 : vector<2x512xf32>
    %37 = arith.mulf %36, %26 : vector<2x512xf32>
    %cst_19 = arith.constant 0.254829586 : f32
    %38 = vector.broadcast %cst_19 : f32 to vector<2x512xf32>
    %39 = arith.addf %37, %38 : vector<2x512xf32>
    %40 = arith.mulf %39, %26 : vector<2x512xf32>
    %cst_20 = arith.constant 0.000000e+00 : f32
    %41 = vector.broadcast %cst_20 : f32 to vector<2x512xf32>
    %42 = arith.subf %41, %21 : vector<2x512xf32>
    %43 = arith.mulf %42, %21 : vector<2x512xf32>
    %44 = math.exp %43 : vector<2x512xf32>
    %45 = arith.mulf %40, %44 : vector<2x512xf32>
    %cst_21 = arith.constant 1.000000e+00 : f32
    %46 = vector.broadcast %cst_21 : f32 to vector<2x512xf32>
    %47 = arith.subf %46, %45 : vector<2x512xf32>
    %48 = arith.mulf %20, %47 : vector<2x512xf32>
    %cst_22 = arith.constant 1.000000e+00 : f32
    %49 = vector.broadcast %cst_22 : f32 to vector<2x512xf32>
    %50 = arith.addf %49, %48 : vector<2x512xf32>
    %51 = arith.mulf %13, %50 : vector<2x512xf32>
    %52 = arith.truncf %51 : vector<2x512xf32> to vector<2x512xbf16>
    %c1 = arith.constant 1 : index
    %c0_23 = arith.constant 0 : index
    %c0_24 = arith.constant 0 : index
    %53 = vector.load %arg6[%c1, %c0_23, %c0_24] : memref<2x512x512xbf16, #tpu.memory_space<vmem>>, vector<1x512x512xbf16>
    %54 = vector.shape_cast %53 : vector<1x512x512xbf16> to vector<512x512xbf16>
    %cst_25 = arith.constant dense<0.000000e+00> : vector<2x512xf32>
    %55 = tpu.matmul %52, %54, %cst_25 {dimension_numbers = #tpu.dot_dimension_numbers<[1], [0], [0], [1], [0, 0, 1, 1], [], []>} : vector<2x512xbf16>, vector<512x512xbf16>, vector<2x512xf32> -> vector<2x512xf32>
    %c1_26 = arith.constant 1 : index
    %c0_27 = arith.constant 0 : index
    %c0_28 = arith.constant 0 : index
    %56 = vector.load %arg7[%c1_26, %c0_27, %c0_28] : memref<2x1x512xf32, #tpu.memory_space<vmem>>, vector<1x1x512xf32>
    %57 = vector.shape_cast %56 : vector<1x1x512xf32> to vector<1x512xf32>
    %58 = vector.broadcast %57 : vector<1x512xf32> to vector<2x512xf32>
    %59 = arith.addf %55, %58 : vector<2x512xf32>
    %cst_29 = arith.constant 5.000000e-01 : f32
    %60 = vector.broadcast %cst_29 : f32 to vector<2x512xf32>
    %61 = arith.mulf %60, %59 : vector<2x512xf32>
    %cst_30 = arith.constant 0.707106769 : f32
    %62 = vector.broadcast %cst_30 : f32 to vector<2x512xf32>
    %63 = arith.mulf %59, %62 : vector<2x512xf32>
    %cst_31 = arith.constant 0.000000e+00 : f32
    %64 = vector.broadcast %cst_31 : f32 to vector<2x512xf32>
    %65 = arith.cmpf oge, %63, %64 : vector<2x512xf32>
    %cst_32 = arith.constant 1.000000e+00 : f32
    %cst_33 = arith.constant -1.000000e+00 : f32
    %66 = vector.broadcast %cst_32 : f32 to vector<2x512xf32>
    %67 = vector.broadcast %cst_33 : f32 to vector<2x512xf32>
    %68 = arith.select %65, %66, %67 : vector<2x512xi1>, vector<2x512xf32>
    %69 = math.absf %63 : vector<2x512xf32>
    %cst_34 = arith.constant 0.327591091 : f32
    %70 = vector.broadcast %cst_34 : f32 to vector<2x512xf32>
    %71 = arith.mulf %70, %69 : vector<2x512xf32>
    %cst_35 = arith.constant 1.000000e+00 : f32
    %72 = vector.broadcast %cst_35 : f32 to vector<2x512xf32>
    %73 = arith.addf %72, %71 : vector<2x512xf32>
    %74 = tpu.reciprocal %73 {approx = true} : vector<2x512xf32> -> vector<2x512xf32>
    %cst_36 = arith.constant 1.06140542 : f32
    %75 = vector.broadcast %cst_36 : f32 to vector<2x512xf32>
    %76 = arith.mulf %75, %74 : vector<2x512xf32>
    %cst_37 = arith.constant -1.45315206 : f32
    %77 = vector.broadcast %cst_37 : f32 to vector<2x512xf32>
    %78 = arith.addf %76, %77 : vector<2x512xf32>
    %79 = arith.mulf %78, %74 : vector<2x512xf32>
    %cst_38 = arith.constant 1.42141378 : f32
    %80 = vector.broadcast %cst_38 : f32 to vector<2x512xf32>
    %81 = arith.addf %79, %80 : vector<2x512xf32>
    %82 = arith.mulf %81, %74 : vector<2x512xf32>
    %cst_39 = arith.constant -0.284496725 : f32
    %83 = vector.broadcast %cst_39 : f32 to vector<2x512xf32>
    %84 = arith.addf %82, %83 : vector<2x512xf32>
    %85 = arith.mulf %84, %74 : vector<2x512xf32>
    %cst_40 = arith.constant 0.254829586 : f32
    %86 = vector.broadcast %cst_40 : f32 to vector<2x512xf32>
    %87 = arith.addf %85, %86 : vector<2x512xf32>
    %88 = arith.mulf %87, %74 : vector<2x512xf32>
    %cst_41 = arith.constant 0.000000e+00 : f32
    %89 = vector.broadcast %cst_41 : f32 to vector<2x512xf32>
    %90 = arith.subf %89, %69 : vector<2x512xf32>
    %91 = arith.mulf %90, %69 : vector<2x512xf32>
    %92 = math.exp %91 : vector<2x512xf32>
    %93 = arith.mulf %88, %92 : vector<2x512xf32>
    %cst_42 = arith.constant 1.000000e+00 : f32
    %94 = vector.broadcast %cst_42 : f32 to vector<2x512xf32>
    %95 = arith.subf %94, %93 : vector<2x512xf32>
    %96 = arith.mulf %68, %95 : vector<2x512xf32>
    %cst_43 = arith.constant 1.000000e+00 : f32
    %97 = vector.broadcast %cst_43 : f32 to vector<2x512xf32>
    %98 = arith.addf %97, %96 : vector<2x512xf32>
    %99 = arith.mulf %61, %98 : vector<2x512xf32>
    %100 = arith.addf %99, %3 : vector<2x512xf32>
    %c0_44 = arith.constant 0 : index
    %c0_45 = arith.constant 0 : index
    %101 = vector.load %arg11[%c0_44, %c0_45] : memref<2x512xf32, #tpu.memory_space<vmem>>, vector<2x512xf32>
    tpu.vector_store %arg11[%c0_44, %c0_45], %100 {strides = array<i32>} : memref<2x512xf32, #tpu.memory_space<vmem>>, vector<2x512xf32>,
    %c2_i32 = arith.constant 2 : i32
    %102 = arith.cmpi eq, %arg0, %c2_i32 : i32
    %103 = arith.extui %102 : i1 to i32
    %c0_i32_46 = arith.constant 0 : i32
    %104 = arith.cmpi ne, %103, %c0_i32_46 : i32
    scf.if %104 {
      %c0_47 = arith.constant 0 : index
      %c0_48 = arith.constant 0 : index
      %105 = vector.load %arg8[%c0_47, %c0_48] : memref<2x512xf32, #tpu.memory_space<vmem>>, vector<2x512xf32>
      %cst_49 = arith.constant dense<0.000000e+00> : vector<2x2xf32>
      %106 = tpu.matmul %100, %105, %cst_49 {dimension_numbers = #tpu.dot_dimension_numbers<[1], [1], [0], [0], [0, 0, 1, 0], [], []>} : vector<2x512xf32>, vector<2x512xf32>, vector<2x2xf32> -> vector<2x2xf32>
      %c0_50 = arith.constant 0 : index
      %c0_51 = arith.constant 0 : index
      %107 = vector.load %arg9[%c0_50, %c0_51] : memref<1x2xf32, #tpu.memory_space<vmem>>, vector<1x2xf32>
      %108 = vector.broadcast %107 : vector<1x2xf32> to vector<2x2xf32>
      %109 = arith.addf %106, %108 : vector<2x2xf32>
      %cst_52 = arith.constant dense<0xFF800000> : vector<2xf32>
      %110 = vector.multi_reduction <maximumf>, %109, %cst_52 [1] : vector<2x2xf32> to vector<2xf32>
      %111 = vector.shape_cast %110 : vector<2xf32> to vector<2x1xf32>
      %112 = vector.broadcast %111 : vector<2x1xf32> to vector<2x2xf32>
      %113 = arith.subf %109, %112 : vector<2x2xf32>
      %114 = math.exp %113 : vector<2x2xf32>
      %cst_53 = arith.constant dense<0.000000e+00> : vector<2xf32>
      %115 = vector.multi_reduction <add>, %114, %cst_53 [1] : vector<2x2xf32> to vector<2xf32>
      %116 = vector.shape_cast %115 : vector<2xf32> to vector<2x1xf32>
      %117 = vector.broadcast %116 : vector<2x1xf32> to vector<2x2xf32>
      %118 = arith.divf %114, %117 : vector<2x2xf32>
      %c0_54 = arith.constant 0 : index
      %c0_55 = arith.constant 0 : index
      %119 = vector.load %arg10[%c0_54, %c0_55] : memref<2x2xf32, #tpu.memory_space<vmem>>, vector<2x2xf32>
      tpu.vector_store %arg10[%c0_54, %c0_55], %118 {strides = array<i32>} : memref<2x2xf32, #tpu.memory_space<vmem>>, vector<2x2xf32>,
    } else {
    }
    return
  }
  func.func @transform_0(%arg0: i32) -> (i32, i32) {
    %c0_i32 = arith.constant 0 : i32
    %c0_i32_0 = arith.constant 0 : i32
    %c0_i32_1 = arith.constant 0 : i32
    return %c0_i32, %c0_i32_0 : i32, i32
  }
  func.func @transform_1(%arg0: i32) -> (i32, i32, i32) {
    %c0_i32 = arith.constant 0 : i32
    %c0_i32_0 = arith.constant 0 : i32
    %c0_i32_1 = arith.constant 0 : i32
    %c0_i32_2 = arith.constant 0 : i32
    return %c0_i32, %c0_i32_0, %c0_i32_1 : i32, i32, i32
  }
  func.func @transform_2(%arg0: i32) -> (i32, i32, i32) {
    %c0_i32 = arith.constant 0 : i32
    %c0_i32_0 = arith.constant 0 : i32
    %c0_i32_1 = arith.constant 0 : i32
    %c0_i32_2 = arith.constant 0 : i32
    return %c0_i32, %c0_i32_0, %c0_i32_1 : i32, i32, i32
  }
  func.func @transform_3(%arg0: i32) -> (i32, i32, i32) {
    %c0_i32 = arith.constant 0 : i32
    %c0_i32_0 = arith.constant 0 : i32
    %c0_i32_1 = arith.constant 0 : i32
    %c0_i32_2 = arith.constant 0 : i32
    return %c0_i32, %c0_i32_0, %c0_i32_1 : i32, i32, i32
  }
  func.func @transform_4(%arg0: i32) -> (i32, i32) {
    %c0_i32 = arith.constant 0 : i32
    %c0_i32_0 = arith.constant 0 : i32
    %c0_i32_1 = arith.constant 0 : i32
    return %c0_i32, %c0_i32_0 : i32, i32
  }
  func.func @transform_5(%arg0: i32) -> (i32, i32, i32) {
    %c0_i32 = arith.constant 0 : i32
    %c0_i32_0 = arith.constant 0 : i32
    %c0_i32_1 = arith.constant 0 : i32
    return %arg0, %c0_i32, %c0_i32_0 : i32, i32, i32
  }
  func.func @transform_6(%arg0: i32) -> (i32, i32, i32) {
    %c0_i32 = arith.constant 0 : i32
    %c0_i32_0 = arith.constant 0 : i32
    %c0_i32_1 = arith.constant 0 : i32
    return %arg0, %c0_i32, %c0_i32_0 : i32, i32, i32
  }
  func.func @transform_7(%arg0: i32) -> (i32, i32) {
    %c0_i32 = arith.constant 0 : i32
    %c0_i32_0 = arith.constant 0 : i32
    %c0_i32_1 = arith.constant 0 : i32
    return %c0_i32, %c0_i32_0 : i32, i32
  }
  func.func @transform_8(%arg0: i32) -> (i32, i32) {
    %c0_i32 = arith.constant 0 : i32
    %c0_i32_0 = arith.constant 0 : i32
    %c0_i32_1 = arith.constant 0 : i32
    return %c0_i32, %c0_i32_0 : i32, i32
  }
  func.func @transform_9(%arg0: i32) -> (i32, i32) {
    %c0_i32 = arith.constant 0 : i32
    %c0_i32_0 = arith.constant 0 : i32
    %c0_i32_1 = arith.constant 0 : i32
    return %c0_i32, %c0_i32_0 : i32, i32
  }
}

</mosaic_0001>

<llo_original>
// kernel: ind_mlp_forward.1
$region0: #{ind_mlp_forward.1}
  #allocation0 [shape = 'u32[]', space=smem, size = 0x4, offset = 0x4, fixed_abs, tag = 'smem constant byte address 0x4 - core index']
  #allocation1 [shape = 'u32[144,128]{1,0:T(1,128)}', space=vmem, size = 0x12000, scoped, tag = 'internal scratch']
  #allocation2 [shape = 'f32[2,512]{1,0:T(2,128)}', space=vmem, size = 0x1000, scoped, tag = 'scratch operand']
  %s0 = inlined_call_operand.vmem [shape: f32[2,2304], index: 0, kind: input, shape index: {}]
  %s1 = inlined_call_operand.hbm [shape: bf16[9,32,256], index: 1, kind: input, shape index: {}]
  %s2 = inlined_call_operand.hbm [shape: f32[9,1,32], index: 2, kind: input, shape index: {}]
  %s3 = inlined_call_operand.hbm [shape: bf16[9,32,512], index: 3, kind: input, shape index: {}]
  %s4 = inlined_call_operand.hbm [shape: f32[1,512], index: 4, kind: input, shape index: {}]
  %s5 = inlined_call_operand.hbm [shape: bf16[6,512,512], index: 5, kind: input, shape index: {}]
  %s6 = inlined_call_operand.hbm [shape: f32[6,1,512], index: 6, kind: input, shape index: {}]
  %s7 = inlined_call_operand.hbm [shape: f32[2,512], index: 7, kind: input, shape index: {}]
  %s8 = inlined_call_operand.hbm [shape: f32[1,2], index: 8, kind: input, shape index: {}]
  %s9 = inlined_call_operand.hbm [shape: f32[2,2], index: 9, kind: output, shape index: {}]
  %s10 = sld [smem:[#allocation0]]
  $region109: #{ind_mlp_forward.1} parent=0
    _
  %s12 = ssub.s32 1, %s10
  %s13 = scalar_select 0, %s12, %s10
  $region1: #{ind_mlp_forward.1} parent=0
    #allocation3 [shape = 'u8[147456]{0}', space=vmem, size = 0x24000, scoped, tag = 'input window, operand 1, single buffered']
    #allocation4 [shape = 's32[2]{0}', space=sflag, size = 0x8, scoped, tag = 'scoped memory for ind_mlp_forward.1']
    #allocation5 [shape = 's32[2]{0}', space=sflag, size = 0x8, scoped, tag = 'scoped memory for ind_mlp_forward.1']
    #allocation6 [shape = 'u8[4608]{0}', space=vmem, size = 0x1400, scoped, tag = 'input window, operand 2, single buffered']
    #allocation7 [shape = 's32[1]{0}', space=sflag, size = 0x4, scoped, tag = 'scoped memory for ind_mlp_forward.1']
    #allocation8 [shape = 'u8[294912]{0}', space=vmem, size = 0x48000, scoped, tag = 'input window, operand 3, single buffered']
    #allocation9 [shape = 'u8[2048]{0}', space=vmem, size = 0x800, scoped, tag = 'input window, operand 4, single buffered']
    #allocation10 [shape = 's32[1]{0}', space=sflag, size = 0x4, scoped, tag = 'scoped memory for ind_mlp_forward.1']
    #allocation11 [shape = 'u8[2097152]{0}', space=vmem, size = 0x200000, scoped, tag = 'input window, operand 5']
    #allocation12 [shape = 'u8[8192]{0}', space=vmem, size = 0x2000, scoped, tag = 'input window, operand 6']
    #allocation13 [shape = 'u8[4096]{0}', space=vmem, size = 0x1000, scoped, tag = 'input window, operand 7, single buffered']
    #allocation14 [shape = 'u8[512]{0}', space=vmem, size = 0x400, scoped, tag = 'input window, operand 8, single buffered']
    #allocation15 [shape = 'u8[1024]{0}', space=vmem, size = 0x400, scoped, tag = 'output window, operand 0, single buffered']
    %14 = vsyncpa [#allocation4], 0
    %15 = vsyncpa [#allocation7], 0
    %16 = vsyncpa [#allocation10], 0
    %17 = vsyncpa [#allocation5], 0
    loop: start=0, step=1, limit=5
    $region2: #{ind_mlp_forward.1} parent=1 // loop_pre_header
      _
    $region3: #{ind_mlp_forward.1} parent=1 // loop_header
      %s19 = sphi 0, %s23
      %p20 = scmp.ge.s32.totalorder %s19, 5
      %s27 = sphi 0, %s27
      %s29 = sphi 0, %s27
      %s30 = sphi 0, %s29
      %s44 = sphi 0, %s30
      %s48 = sphi 0, %s48
      %s50 = sphi 0, %s48
      %s51 = sphi 0, %s50
      %s65 = sphi 0, %s51
      %s69 = sphi 0, %s69
      %s71 = sphi 0, %s69
      %s72 = sphi 0, %s71
      %s86 = sphi 0, %s72
      %s90 = sphi 0, %s90
      %s92 = sphi 0, %s90
      %s93 = sphi 0, %s92
      %s107 = sphi 0, %s93
      %s111 = sphi 0, %s111
      %s113 = sphi 0, %s111
      %s114 = sphi 0, %s113
      %s128 = sphi 0, %s114
      %s134 = sphi 0, %s136
      %s137 = sphi 0, %s134
      %s138 = sphi 0, %s137
      %s154 = sphi 0, %s138
      %s160 = sphi 0, %s162
      %s163 = sphi 0, %s160
      %s164 = sphi 0, %s163
      %s180 = sphi 0, %s164
      %s184 = sphi 0, %s184
      %s186 = sphi 0, %s184
      %s187 = sphi 0, %s186
      %s201 = sphi 0, %s187
      %s205 = sphi 0, %s205
      %s207 = sphi 0, %s205
      %s208 = sphi 0, %s207
      %s222 = sphi 0, %s208
      %s226 = sphi 0, %s226
      %s228 = sphi 0, %s226
      %s229 = sphi 0, %s228
      %s243 = sphi 0, %s229
    $region4: #{ind_mlp_forward.1} parent=1 // loop_header_branch
      %22 = sbr.rel (%p20) target = $region8
    $region5: #{ind_mlp_forward.1} parent=1 // loop_body
      %s24 = ssub.s32 %s19, 1
      %s25 = ssub.s32 %s19, 2
      %s26 = sadd.s32 %s19, 1
      %s28 = sadd.s32 %s27, 1
      %p31 = scmp.eq.s32.totalorder %s19, 2
      %p32 = scmp.ne.s32.totalorder %s27, %s29
      %p33 = scmp.eq.s32.totalorder %s19, 0
      %p34 = por %p32, %p33
      %p35 = scmp.ne.s32.totalorder %s27, %s29
      %p36 = scmp.eq.s32.totalorder %s24, 2
      %p37 = por %p35, %p36
      %p38 = scmp.ne.s32.totalorder %s29, %s30
      %p39 = scmp.eq.s32.totalorder %s24, 0
      %p40 = por %p38, %p39
      %p41 = scmp.ne.s32.totalorder %s29, %s30
      %p42 = scmp.eq.s32.totalorder %s25, 2
      %p43 = por %p41, %p42
      %p45 = scmp.ne.s32.totalorder %s30, %s44
      %p46 = scmp.eq.s32.totalorder %s25, 0
      %p47 = por %p45, %p46
      %s49 = sadd.s32 %s48, 1
      %p52 = scmp.eq.s32.totalorder %s19, 2
      %p53 = scmp.ne.s32.totalorder %s48, %s50
      %p54 = scmp.eq.s32.totalorder %s19, 0
      %p55 = por %p53, %p54
      %p56 = scmp.ne.s32.totalorder %s48, %s50
      %p57 = scmp.eq.s32.totalorder %s24, 2
      %p58 = por %p56, %p57
      %p59 = scmp.ne.s32.totalorder %s50, %s51
      %p60 = scmp.eq.s32.totalorder %s24, 0
      %p61 = por %p59, %p60
      %p62 = scmp.ne.s32.totalorder %s50, %s51
      %p63 = scmp.eq.s32.totalorder %s25, 2
      %p64 = por %p62, %p63
      %p66 = scmp.ne.s32.totalorder %s51, %s65
      %p67 = scmp.eq.s32.totalorder %s25, 0
      %p68 = por %p66, %p67
      %s70 = sadd.s32 %s69, 1
      %p73 = scmp.eq.s32.totalorder %s19, 2
      %p74 = scmp.ne.s32.totalorder %s69, %s71
      %p75 = scmp.eq.s32.totalorder %s19, 0
      %p76 = por %p74, %p75
      %p77 = scmp.ne.s32.totalorder %s69, %s71
      %p78 = scmp.eq.s32.totalorder %s24, 2
      %p79 = por %p77, %p78
      %p80 = scmp.ne.s32.totalorder %s71, %s72
      %p81 = scmp.eq.s32.totalorder %s24, 0
      %p82 = por %p80, %p81
      %p83 = scmp.ne.s32.totalorder %s71, %s72
      %p84 = scmp.eq.s32.totalorder %s25, 2
      %p85 = por %p83, %p84
      %p87 = scmp.ne.s32.totalorder %s72, %s86
      %p88 = scmp.eq.s32.totalorder %s25, 0
      %p89 = por %p87, %p88
      %s91 = sadd.s32 %s90, 1
      %p94 = scmp.eq.s32.totalorder %s19, 2
      %p95 = scmp.ne.s32.totalorder %s90, %s92
      %p96 = scmp.eq.s32.totalorder %s19, 0
      %p97 = por %p95, %p96
      %p98 = scmp.ne.s32.totalorder %s90, %s92
      %p99 = scmp.eq.s32.totalorder %s24, 2
      %p100 = por %p98, %p99
      %p101 = scmp.ne.s32.totalorder %s92, %s93
      %p102 = scmp.eq.s32.totalorder %s24, 0
      %p103 = por %p101, %p102
      %p104 = scmp.ne.s32.totalorder %s92, %s93
      %p105 = scmp.eq.s32.totalorder %s25, 2
      %p106 = por %p104, %p105
      %p108 = scmp.ne.s32.totalorder %s93, %s107
      %p109 = scmp.eq.s32.totalorder %s25, 0
      %p110 = por %p108, %p109
      %s112 = sadd.s32 %s111, 1
      %p115 = scmp.eq.s32.totalorder %s19, 2
      %p116 = scmp.ne.s32.totalorder %s111, %s113
      %p117 = scmp.eq.s32.totalorder %s19, 0
      %p118 = por %p116, %p117
      %p119 = scmp.ne.s32.totalorder %s111, %s113
      %p120 = scmp.eq.s32.totalorder %s24, 2
      %p121 = por %p119, %p120
      %p122 = scmp.ne.s32.totalorder %s113, %s114
      %p123 = scmp.eq.s32.totalorder %s24, 0
      %p124 = por %p122, %p123
      %p125 = scmp.ne.s32.totalorder %s113, %s114
      %p126 = scmp.eq.s32.totalorder %s25, 2
      %p127 = por %p125, %p126
      %p129 = scmp.ne.s32.totalorder %s114, %s128
      %p130 = scmp.eq.s32.totalorder %s25, 0
      %p131 = por %p129, %p130
      %s132 = ssub.s32 %s19, %s26
      %p133 = scmp.eq.s32.totalorder %s132, 0
      %s135 = sadd.s32 %s134, 1
      %s136 = scalar_select %p133, %s134, %s135
      %p139 = pneg %p133
      %p140 = scmp.eq.s32.totalorder %s19, 2
      %p141 = por %p139, %p140
      %p142 = scmp.ne.s32.totalorder %s134, %s137
      %p143 = scmp.eq.s32.totalorder %s19, 0
      %p144 = por %p142, %p143
      %p145 = scmp.ne.s32.totalorder %s134, %s137
      %p146 = scmp.eq.s32.totalorder %s24, 2
      %p147 = por %p145, %p146
      %p148 = scmp.ne.s32.totalorder %s137, %s138
      %p149 = scmp.eq.s32.totalorder %s24, 0
      %p150 = por %p148, %p149
      %p151 = scmp.ne.s32.totalorder %s137, %s138
      %p152 = scmp.eq.s32.totalorder %s25, 2
      %p153 = por %p151, %p152
      %p155 = scmp.ne.s32.totalorder %s138, %s154
      %p156 = scmp.eq.s32.totalorder %s25, 0
      %p157 = por %p155, %p156
      %s158 = ssub.s32 %s19, %s26
      %p159 = scmp.eq.s32.totalorder %s158, 0
      %s161 = sadd.s32 %s160, 1
      %s162 = scalar_select %p159, %s160, %s161
      %p165 = pneg %p159
      %p166 = scmp.eq.s32.totalorder %s19, 2
      %p167 = por %p165, %p166
      %p168 = scmp.ne.s32.totalorder %s160, %s163
      %p169 = scmp.eq.s32.totalorder %s19, 0
      %p170 = por %p168, %p169
      %p171 = scmp.ne.s32.totalorder %s160, %s163
      %p172 = scmp.eq.s32.totalorder %s24, 2
      %p173 = por %p171, %p172
      %p174 = scmp.ne.s32.totalorder %s163, %s164
      %p175 = scmp.eq.s32.totalorder %s24, 0
      %p176 = por %p174, %p175
      %p177 = scmp.ne.s32.totalorder %s163, %s164
      %p178 = scmp.eq.s32.totalorder %s25, 2
      %p179 = por %p177, %p178
      %p181 = scmp.ne.s32.totalorder %s164, %s180
      %p182 = scmp.eq.s32.totalorder %s25, 0
      %p183 = por %p181, %p182
      %s185 = sadd.s32 %s184, 1
      %p188 = scmp.eq.s32.totalorder %s19, 2
      %p189 = scmp.ne.s32.totalorder %s184, %s186
      %p190 = scmp.eq.s32.totalorder %s19, 0
      %p191 = por %p189, %p190
      %p192 = scmp.ne.s32.totalorder %s184, %s186
      %p193 = scmp.eq.s32.totalorder %s24, 2
      %p194 = por %p192, %p193
      %p195 = scmp.ne.s32.totalorder %s186, %s187
      %p196 = scmp.eq.s32.totalorder %s24, 0
      %p197 = por %p195, %p196
      %p198 = scmp.ne.s32.totalorder %s186, %s187
      %p199 = scmp.eq.s32.totalorder %s25, 2
      %p200 = por %p198, %p199
      %p202 = scmp.ne.s32.totalorder %s187, %s201
      %p203 = scmp.eq.s32.totalorder %s25, 0
      %p204 = por %p202, %p203
      %s206 = sadd.s32 %s205, 1
      %p209 = scmp.eq.s32.totalorder %s19, 2
      %p210 = scmp.ne.s32.totalorder %s205, %s207
      %p211 = scmp.eq.s32.totalorder %s19, 0
      %p212 = por %p210, %p211
      %p213 = scmp.ne.s32.totalorder %s205, %s207
      %p214 = scmp.eq.s32.totalorder %s24, 2
      %p215 = por %p213, %p214
      %p216 = scmp.ne.s32.totalorder %s207, %s208
      %p217 = scmp.eq.s32.totalorder %s24, 0
      %p218 = por %p216, %p217
      %p219 = scmp.ne.s32.totalorder %s207, %s208
      %p220 = scmp.eq.s32.totalorder %s25, 2
      %p221 = por %p219, %p220
      %p223 = scmp.ne.s32.totalorder %s208, %s222
      %p224 = scmp.eq.s32.totalorder %s25, 0
      %p225 = por %p223, %p224
      %s227 = sadd.s32 %s226, 1
      %p230 = scmp.eq.s32.totalorder %s19, 2
      %p231 = scmp.ne.s32.totalorder %s226, %s228
      %p232 = scmp.eq.s32.totalorder %s19, 0
      %p233 = por %p231, %p232
      %p234 = scmp.ne.s32.totalorder %s226, %s228
      %p235 = scmp.eq.s32.totalorder %s24, 2
      %p236 = por %p234, %p235
      %p237 = scmp.ne.s32.totalorder %s228, %s229
      %p238 = scmp.eq.s32.totalorder %s24, 0
      %p239 = por %p237, %p238
      %p240 = scmp.ne.s32.totalorder %s228, %s229
      %p241 = scmp.eq.s32.totalorder %s25, 2
      %p242 = por %p240, %p241
      %p244 = scmp.ne.s32.totalorder %s229, %s243
      %p245 = scmp.eq.s32.totalorder %s25, 0
      %p246 = por %p244, %p245
      %p247 = scmp.le.s32.totalorder 1, %s19
      %p248 = scmp.lt.s32.totalorder %s19, 4
      %p249 = pnand %p247, %p248
      %p250 = pneg %p249
      // Predicated region
      $region9: #{ind_mlp_forward.1} parent=5 // pred_check
        _
      $region10: #{ind_mlp_forward.1} parent=5 // pred_check_branch
        %252 = sbr.rel (%p249) target = $region12
      $region11: #{ind_mlp_forward.1} parent=5 // pred_region
        %s253 = ssub.s32 %s19, 1
        // Predicated region
        $region13: #{ind_mlp_forward.1} parent=11 // pred_check
          %p254 = pneg %p40
        $region14: #{ind_mlp_forward.1} parent=11 // pred_check_branch
          %256 = sbr.rel (%p254) target = $region16
        $region15: #{ind_mlp_forward.1} parent=11 // pred_region
          _
        $region16: #{ind_mlp_forward.1} parent=11 // pred_fallthru
          _
        // Predicated region
        $region17: #{ind_mlp_forward.1} parent=11 // pred_check
          %p257 = pneg %p61
        $region18: #{ind_mlp_forward.1} parent=11 // pred_check_branch
          %259 = sbr.rel (%p257) target = $region20
        $region19: #{ind_mlp_forward.1} parent=11 // pred_region
          %s261 = ssub.s32 4608, 4608
          %262 = vsyncadd [#allocation4], %s261
          %s263 = sshll.u32 [#allocation3], 4
          %s264 = int_to_ptr.vmem [resolvable:$true] %s263
          %269 = dma.hbm_to_vmem [thread:$0]  %s1, 4608, %s264, [#allocation4], 128, 128, 8
        $region20: #{ind_mlp_forward.1} parent=11 // pred_fallthru
          _
        // Predicated region
        $region21: #{ind_mlp_forward.1} parent=11 // pred_check
          %p270 = pneg %p82
        $region22: #{ind_mlp_forward.1} parent=11 // pred_check_branch
          %272 = sbr.rel (%p270) target = $region24
        $region23: #{ind_mlp_forward.1} parent=11 // pred_region
          %s274 = ssub.s32 144, 144
          %275 = vsyncadd [#allocation7], %s274
          %s276 = sshll.u32 [#allocation6], 4
          %s277 = int_to_ptr.vmem [resolvable:$true] %s276
          %282 = dma.hbm_to_vmem [thread:$0]  %s2, 144, %s277, [#allocation7], 16, 16, 1
        $region24: #{ind_mlp_forward.1} parent=11 // pred_fallthru
          _
        // Predicated region
        $region25: #{ind_mlp_forward.1} parent=11 // pred_check
          %p283 = pneg %p103
        $region26: #{ind_mlp_forward.1} parent=11 // pred_check_branch
          %285 = sbr.rel (%p283) target = $region28
        $region27: #{ind_mlp_forward.1} parent=11 // pred_region
          %s287 = ssub.s32 9216, 9216
          %288 = vsyncadd [#allocation7], %s287
          %s289 = sshll.u32 [#allocation8], 4
          %s290 = int_to_ptr.vmem [resolvable:$true] %s289
          %295 = dma.hbm_to_vmem [thread:$0]  %s3, 9216, %s290, [#allocation7], 256, 256, 16
        $region28: #{ind_mlp_forward.1} parent=11 // pred_fallthru
          _
        // Predicated region
        $region29: #{ind_mlp_forward.1} parent=11 // pred_check
          %p296 = pneg %p124
        $region30: #{ind_mlp_forward.1} parent=11 // pred_check_branch
          %298 = sbr.rel (%p296) target = $region32
        $region31: #{ind_mlp_forward.1} parent=11 // pred_region
          %s300 = ssub.s32 64, 64
          %301 = vsyncadd [#allocation10], %s300
          %s303 = sshll.u32 [#allocation9], 4
          %s304 = int_to_ptr.vmem [resolvable:$true] %s303
          %306 = dma.hbm_to_vmem [thread:$0]  %s4, 64, %s304, [#allocation10]
        $region32: #{ind_mlp_forward.1} parent=11 // pred_fallthru
          _
        // Predicated region
        $region33: #{ind_mlp_forward.1} parent=11 // pred_check
          %p307 = pneg %p197
        $region34: #{ind_mlp_forward.1} parent=11 // pred_check_branch
          %309 = sbr.rel (%p307) target = $region36
        $region35: #{ind_mlp_forward.1} parent=11 // pred_region
          %s311 = ssub.s32 128, 128
          %312 = vsyncadd [#allocation7], %s311
          %s314 = sshll.u32 [#allocation13], 4
          %s315 = int_to_ptr.vmem [resolvable:$true] %s314
          %317 = dma.hbm_to_vmem [thread:$0]  %s7, 128, %s315, [#allocation7]
        $region36: #{ind_mlp_forward.1} parent=11 // pred_fallthru
          _
        // Predicated region
        $region37: #{ind_mlp_forward.1} parent=11 // pred_check
          %p318 = pneg %p218
        $region38: #{ind_mlp_forward.1} parent=11 // pred_check_branch
          %320 = sbr.rel (%p318) target = $region40
        $region39: #{ind_mlp_forward.1} parent=11 // pred_region
          %s322 = ssub.s32 16, 16
          %323 = vsyncadd [#allocation10], %s322
          %s325 = sshll.u32 [#allocation14], 4
          %s326 = int_to_ptr.vmem [resolvable:$true] %s325
          %328 = dma.hbm_to_vmem [thread:$0]  %s8, 16, %s326, [#allocation10]
        $region40: #{ind_mlp_forward.1} parent=11 // pred_fallthru
          _
      $region12: #{ind_mlp_forward.1} parent=5 // pred_fallthru
        _
      %p329 = scmp.lt.s32.totalorder %s19, 3
      // Predicated region
      $region41: #{ind_mlp_forward.1} parent=5 // pred_check
        %p330 = pneg %p329
      $region42: #{ind_mlp_forward.1} parent=5 // pred_check_branch
        %332 = sbr.rel (%p330) target = $region44
      $region43: #{ind_mlp_forward.1} parent=5 // pred_region
        // Predicated region
        $region45: #{ind_mlp_forward.1} parent=43 // pred_check
          %p333 = pneg %p144
        $region46: #{ind_mlp_forward.1} parent=43 // pred_check_branch
          %335 = sbr.rel (%p333) target = $region48
        $region47: #{ind_mlp_forward.1} parent=43 // pred_region
          %s336 = sand.u32 %s19, 1
          %s337 = scalar_lea.sflag [#allocation4], %s336
          %s338 = sand.u32 %s134, 1
          %s339 = smul.addr %s338, 2048
          %s340 = scalar_lea.vmem [#allocation11], %s339
          %s341 = smul.u32 2, %s19
          %s343 = ssub.s32 32768, 32768
          %344 = vsyncadd %s337, %s343
          %s345 = smul.addr %s341, 256
          %s346 = smul.addr %s345, 64
          %s347 = scalar_lea.hbm %s5, %s346
          %s348 = sshll.u32 %s340, 4
          %s349 = int_to_ptr.vmem [resolvable:$true] %s348
          %354 = dma.hbm_to_vmem [thread:$0]  %s347, 32768, %s349, %s337, 256, 256, 16
        $region48: #{ind_mlp_forward.1} parent=43 // pred_fallthru
          _
        // Predicated region
        $region49: #{ind_mlp_forward.1} parent=43 // pred_check
          %p355 = pneg %p170
        $region50: #{ind_mlp_forward.1} parent=43 // pred_check_branch
          %357 = sbr.rel (%p355) target = $region52
        $region51: #{ind_mlp_forward.1} parent=43 // pred_region
          %s358 = sand.u32 %s19, 1
          %s359 = scalar_lea.sflag [#allocation4], %s358
          %s360 = sand.u32 %s160, 1
          %s361 = smul.addr %s360, 8
          %s362 = scalar_lea.vmem [#allocation12], %s361
          %s363 = smul.u32 2, %s19
          %s365 = ssub.s32 128, 128
          %366 = vsyncadd %s359, %s365
          %s367 = smul.addr %s363, 4
          %s368 = smul.addr %s367, 16
          %s369 = scalar_lea.hbm %s6, %s368
          %s370 = sshll.u32 %s362, 4
          %s371 = int_to_ptr.vmem [resolvable:$true] %s370
          %376 = dma.hbm_to_vmem [thread:$0]  %s369, 128, %s371, %s359, 64, 64, 4
        $region52: #{ind_mlp_forward.1} parent=43 // pred_fallthru
          _
      $region44: #{ind_mlp_forward.1} parent=5 // pred_fallthru
        _
      %p377 = scmp.le.s32.totalorder 1, %s19
      %p378 = scmp.lt.s32.totalorder %s19, 4
      %p379 = pnand %p377, %p378
      %p380 = pneg %p379
      // Predicated region
      $region53: #{ind_mlp_forward.1} parent=5 // pred_check
        _
      $region54: #{ind_mlp_forward.1} parent=5 // pred_check_branch
        %382 = sbr.rel (%p379) target = $region56
      $region55: #{ind_mlp_forward.1} parent=5 // pred_region
        %s383 = ssub.s32 %s19, 1
        // Predicated region
        $region57: #{ind_mlp_forward.1} parent=55 // pred_check
          %p384 = pneg %p61
        $region58: #{ind_mlp_forward.1} parent=55 // pred_check_branch
          %386 = sbr.rel (%p384) target = $region60
        $region59: #{ind_mlp_forward.1} parent=55 // pred_region
          %387 = dma.done [#allocation4], 4608
        $region60: #{ind_mlp_forward.1} parent=55 // pred_fallthru
          _
        // Predicated region
        $region61: #{ind_mlp_forward.1} parent=55 // pred_check
          %p388 = pneg %p82
        $region62: #{ind_mlp_forward.1} parent=55 // pred_check_branch
          %390 = sbr.rel (%p388) target = $region64
        $region63: #{ind_mlp_forward.1} parent=55 // pred_region
          %391 = dma.done [#allocation7], 144
        $region64: #{ind_mlp_forward.1} parent=55 // pred_fallthru
          _
        // Predicated region
        $region65: #{ind_mlp_forward.1} parent=55 // pred_check
          %p392 = pneg %p103
        $region66: #{ind_mlp_forward.1} parent=55 // pred_check_branch
          %394 = sbr.rel (%p392) target = $region68
        $region67: #{ind_mlp_forward.1} parent=55 // pred_region
          %395 = dma.done [#allocation7], 9216
        $region68: #{ind_mlp_forward.1} parent=55 // pred_fallthru
          _
        // Predicated region
        $region69: #{ind_mlp_forward.1} parent=55 // pred_check
          %p396 = pneg %p124
        $region70: #{ind_mlp_forward.1} parent=55 // pred_check_branch
          %398 = sbr.rel (%p396) target = $region72
        $region71: #{ind_mlp_forward.1} parent=55 // pred_region
          %399 = dma.done [#allocation10], 64
        $region72: #{ind_mlp_forward.1} parent=55 // pred_fallthru
          _
        %s400 = sand.u32 %s24, 1
        %s401 = scalar_lea.sflag [#allocation4], %s400
        %s402 = sand.u32 %s137, 1
        %s403 = smul.addr %s402, 2048
        %s404 = scalar_lea.vmem [#allocation11], %s403
        // Predicated region
        $region73: #{ind_mlp_forward.1} parent=55 // pred_check
          %p405 = pneg %p150
        $region74: #{ind_mlp_forward.1} parent=55 // pred_check_branch
          %407 = sbr.rel (%p405) target = $region76
        $region75: #{ind_mlp_forward.1} parent=55 // pred_region
          %408 = dma.done %s401, 32768
        $region76: #{ind_mlp_forward.1} parent=55 // pred_fallthru
          _
        %s409 = sand.u32 %s24, 1
        %s410 = scalar_lea.sflag [#allocation4], %s409
        %s411 = sand.u32 %s163, 1
        %s412 = smul.addr %s411, 8
        %s413 = scalar_lea.vmem [#allocation12], %s412
        // Predicated region
        $region77: #{ind_mlp_forward.1} parent=55 // pred_check
          %p414 = pneg %p176
        $region78: #{ind_mlp_forward.1} parent=55 // pred_check_branch
          %416 = sbr.rel (%p414) target = $region80
        $region79: #{ind_mlp_forward.1} parent=55 // pred_region
          %417 = dma.done %s410, 128
        $region80: #{ind_mlp_forward.1} parent=55 // pred_fallthru
          _
        // Predicated region
        $region81: #{ind_mlp_forward.1} parent=55 // pred_check
          %p418 = pneg %p197
        $region82: #{ind_mlp_forward.1} parent=55 // pred_check_branch
          %420 = sbr.rel (%p418) target = $region84
        $region83: #{ind_mlp_forward.1} parent=55 // pred_region
          %421 = dma.done [#allocation7], 128
        $region84: #{ind_mlp_forward.1} parent=55 // pred_fallthru
          _
        // Predicated region
        $region85: #{ind_mlp_forward.1} parent=55 // pred_check
          %p422 = pneg %p218
        $region86: #{ind_mlp_forward.1} parent=55 // pred_check_branch
          %424 = sbr.rel (%p422) target = $region88
        $region87: #{ind_mlp_forward.1} parent=55 // pred_region
          %425 = dma.done [#allocation10], 16
        $region88: #{ind_mlp_forward.1} parent=55 // pred_fallthru
          _
        %p426 = pneg %p40
        %p427 = pneg %p37
        %p428 = pneg %p61
        %p429 = pneg %p58
        %p430 = pneg %p82
        %p431 = pneg %p79
        %p432 = pneg %p103
        %p433 = pneg %p100
        %p434 = pneg %p124
        %p435 = pneg %p121
        %s436 = sand.u32 %s24, 1
        %s437 = scalar_lea.sflag [#allocation4], %s436
        %s438 = sand.u32 %s137, 1
        %s439 = smul.addr %s438, 2048
        %s440 = scalar_lea.vmem [#allocation11], %s439
        %p441 = pneg %p150
        %p442 = pneg %p147
        %s443 = sand.u32 %s24, 1
        %s444 = scalar_lea.sflag [#allocation4], %s443
        %s445 = sand.u32 %s163, 1
        %s446 = smul.addr %s445, 8
        %s447 = scalar_lea.vmem [#allocation12], %s446
        %p448 = pneg %p176
        %p449 = pneg %p173
        %p450 = pneg %p197
        %p451 = pneg %p194
        %p452 = pneg %p218
        %p453 = pneg %p215
        %p454 = pneg %p239
        %p455 = pneg %p236
        %s456 = smul.u32 2, %s24
        %s457 = smul.u32 2, %s24
        %p459 = scmp.eq.s32.totalorder %s24, 0
        // Predicated region
        $region89: #{ind_mlp_forward.1} parent=55 // pred_check
          %p460 = pneg %p459
        $region90: #{ind_mlp_forward.1} parent=55 // pred_check_branch
          %462 = sbr.rel (%p460) target = $region92
        $region91: #{ind_mlp_forward.1} parent=55 // pred_region
          %v463 = vld [vmem:[%s0] sm:$0xff]
          %v464 = vld [vmem:[%s0 + $0x8] sm:$0xff]
          %v465 = vld [vmem:[%s0 + $0x10] sm:$0xff]
          %v466 = vld [vmem:[%s0 + $0x18] sm:$0xff]
          %v467 = vld [vmem:[%s0 + $0x20] sm:$0xf]
          %v473 = vcombine.high %v463, %v463
          %v475 = vunpack.c.l.s4 1983009808
          %v476 = vunpack.c.0.s8 %v475
          %v477 = vlaneseq
          %v478 = vshrl.u32 %v477, 7
          %v479 = vsub.s32 %v476, %v478
          %v480 = vrot.slane %v463, %v479
          %v482 = vunpack.c.l.s4 1983009808
          %v483 = vunpack.c.0.s8 %v482
          %v484 = vlaneseq
          %v485 = vshrl.u32 %v484, 7
          %v486 = vsub.s32 %v483, %v485
          %v487 = vrot.slane %v473, %v486
          %v488 = vcombine.high %v480, %v480
          %v489 = vcombine.high %v487, %v487
          %v490 = vcombine.high %v464, %v464
          %v492 = vunpack.c.l.s4 1983009808
          %v493 = vunpack.c.0.s8 %v492
          %v494 = vlaneseq
          %v495 = vshrl.u32 %v494, 7
          %v496 = vsub.s32 %v493, %v495
          %v497 = vrot.slane %v464, %v496
          %v499 = vunpack.c.l.s4 1983009808
          %v500 = vunpack.c.0.s8 %v499
          %v501 = vlaneseq
          %v502 = vshrl.u32 %v501, 7
          %v503 = vsub.s32 %v500, %v502
          %v504 = vrot.slane %v490, %v503
          %v505 = vcombine.high %v497, %v497
          %v506 = vcombine.high %v504, %v504
          %v507 = vcombine.high %v465, %v465
          %v509 = vunpack.c.l.s4 1983009808
          %v510 = vunpack.c.0.s8 %v509
          %v511 = vlaneseq
          %v512 = vshrl.u32 %v511, 7
          %v513 = vsub.s32 %v510, %v512
          %v514 = vrot.slane %v465, %v513
          %v516 = vunpack.c.l.s4 1983009808
          %v517 = vunpack.c.0.s8 %v516
          %v518 = vlaneseq
          %v519 = vshrl.u32 %v518, 7
          %v520 = vsub.s32 %v517, %v519
          %v521 = vrot.slane %v507, %v520
          %v522 = vcombine.high %v514, %v514
          %v523 = vcombine.high %v521, %v521
          %v524 = vcombine.high %v466, %v466
          %v526 = vunpack.c.l.s4 1983009808
          %v527 = vunpack.c.0.s8 %v526
          %v528 = vlaneseq
          %v529 = vshrl.u32 %v528, 7
          %v530 = vsub.s32 %v527, %v529
          %v531 = vrot.slane %v466, %v530
          %v533 = vunpack.c.l.s4 1983009808
          %v534 = vunpack.c.0.s8 %v533
          %v535 = vlaneseq
          %v536 = vshrl.u32 %v535, 7
          %v537 = vsub.s32 %v534, %v536
          %v538 = vrot.slane %v524, %v537
          %v539 = vcombine.high %v531, %v531
          %v540 = vcombine.high %v538, %v538
          %v542 = vunpack.c.l.s4 1983009808
          %v543 = vunpack.c.0.s8 %v542
          %v544 = vlaneseq
          %v545 = vshrl.u32 %v544, 7
          %v546 = vsub.s32 %v543, %v545
          %v547 = vrot.slane %v467, %v546
          %v548 = vcombine.high %v547, %v547
          %v567 = vpack.c.bf16 %v480, %v480
          %v568 = vpack.c.bf16 %v488, %v488
          %v569 = vpack.c.bf16 %v487, %v487
          %v570 = vpack.c.bf16 %v489, %v489
          %v571 = vpack.c.bf16 %v497, %v497
          %v572 = vpack.c.bf16 %v505, %v505
          %v573 = vpack.c.bf16 %v504, %v504
          %v574 = vpack.c.bf16 %v506, %v506
          %v575 = vpack.c.bf16 %v514, %v514
          %v576 = vpack.c.bf16 %v522, %v522
          %v577 = vpack.c.bf16 %v521, %v521
          %v578 = vpack.c.bf16 %v523, %v523
          %v579 = vpack.c.bf16 %v531, %v531
          %v580 = vpack.c.bf16 %v539, %v539
          %v581 = vpack.c.bf16 %v538, %v538
          %v582 = vpack.c.bf16 %v540, %v540
          %v583 = vpack.c.bf16 %v547, %v547
          %v584 = vpack.c.bf16 %v548, %v548
          %v585 = vld [vmem:[#allocation3] sm:$0xff]
          %v586 = vld [vmem:[#allocation3 + $0x8] sm:$0xff]
          %v587 = vld [vmem:[#allocation3 + $0x10] sm:$0xff]
          %v588 = vld [vmem:[#allocation3 + $0x18] sm:$0xff]
          %v589 = vld [vmem:[#allocation6] sm:$0x1]
          %v591 = vlaneseq
          %v592 = vshrl.u32 %v591, 7
          %v593 = vsub.s32 0, %v592
          %v594 = vrot.slane %v589, %v593
          %v600 = vunpack.c.l.b16 %v585
          %v601 = vunpack.c.h.b16 %v585
          %v602 = vunpack.c.l.b16 %v586
          %v603 = vunpack.c.h.b16 %v586
          %v604 = vunpack.c.l.b16 %v587
          %v605 = vunpack.c.h.b16 %v587
          %v606 = vunpack.c.l.b16 %v588
          %v607 = vunpack.c.h.b16 %v588
          %v608 = vpack.c.b16 %v602, %v600
          %v609 = vpack.c.b16 %v603, %v601
          %v610 = vpack.c.b16 %v606, %v604
          %v611 = vpack.c.b16 %v607, %v605
          %616 = vmatprep.subr.bf16.mxu0 0
          %617 = vmatpush1.bf16.xpose.msra.mxu0 0
          %618 = vmatprep.subr.bf16.mxu0 0
          %619 = vmatpush1.bf16.xpose.msra.mxu0 0
          %620 = vmatprep.subr.bf16.mxu0 0
          %621 = vmatpush1.bf16.xpose.msra.mxu0 0
          %622 = vmatprep.subr.bf16.mxu0 0
          %623 = vmatpush1.bf16.xpose.msra.mxu0 0
          %624 = vmatprep.subr.bf16.mxu0 0
          %625 = vmatpush1.bf16.xpose.msra.mxu0 0
          %626 = vmatprep.subr.bf16.mxu0 0
          %627 = vmatpush1.bf16.xpose.msra.mxu0 0
          %628 = vmatprep.subr.bf16.mxu0 %v611
          %629 = vmatpush1.bf16.xpose.msra.mxu0 %v610
          %630 = vmatprep.subr.bf16.mxu0 %v609
          %631 = vmatpush1.bf16.xpose.msra.mxu0 %v608
          %632 = vmatprep.subr.bf16.mxu0 0
          %633 = vmatpush2.bf16.xpose.msra.mxu0 0
          %634 = vmatprep.subr.bf16.mxu0 0
          %635 = vmatpush2.bf16.xpose.msra.mxu0 0
          %636 = vmatprep.subr.bf16.mxu0 0
          %637 = vmatpush2.bf16.xpose.msra.mxu0 0
          %638 = vmatprep.subr.bf16.mxu0 0
          %639 = vmatpush2.bf16.xpose.msra.mxu0 0
          %640 = vmatprep.subr.bf16.mxu0 0
          %641 = vmatpush2.bf16.xpose.msra.mxu0 0
          %642 = vmatprep.subr.bf16.mxu0 0
          %643 = vmatpush2.bf16.xpose.msra.mxu0 0
          %644 = vmatprep.subr.bf16.mxu0 0
          %645 = vmatpush2.bf16.xpose.msra.mxu0 0
          %646 = vmatprep.subr.bf16.mxu0 0
          %647 = vmatpush2.bf16.xpose.msra.mxu0 0
          %648 = vmatprep.mubr.bf16.mxu0 %v568
          %649 = vmatmul.mubr.bf16.gmra.mxu0 %v567
          %v650 = vpop.f32.mrf.mxu0
          %v651 = vadd.f32 %v594, %v650
          %v652 = vpop.f32.mrf.mxu0
          %v653 = vpop.f32.mrf.mxu0
          %v654 = vpop.f32.mrf.mxu0
          %655 = vdwg.mxu0
          %v656 = vmul.f32 %v651, 0.5
          %v657 = vmul.f32 %v651, 0.70710677
          %vm658 = vcmp.ge.f32.partialorder %v657, 0.0
          %v659 = vsel %vm658, 1.0, -1.0
          %v660 = vand.u32 2147483647, %v657
          %v661 = vmul.f32 %v660, 0.3275911
          %v662 = vadd.f32 %v661, 1.0
          %v663 = vrcp.pop %v662
          %v664 = vmul.f32 %v663, 1.0614054
          %v665 = vadd.f32 %v664, -1.4531521
          %v666 = vmul.f32 %v665, %v663
          %v667 = vadd.f32 %v666, 1.4214138
          %v668 = vmul.f32 %v667, %v663
          %v669 = vadd.f32 %v668, -0.28449672
          %v670 = vmul.f32 %v669, %v663
          %v671 = vadd.f32 %v670, 0.2548296
          %v672 = vmul.f32 %v671, %v663
          %v673 = vsub.f32 0.0, %v660
          %v674 = vmul.f32 %v673, %v660
          %v675 = vmul.f32 %v674, 1.442695
          %v676 = vpow.pop %v675
          %v677 = vmul.f32 %v672, %v676
          %v678 = vsub.f32 1.0, %v677
          %v679 = vmul.f32 %v659, %v678
          %v680 = vadd.f32 %v679, 1.0
          %v681 = vmul.f32 %v656, %v680
          %v682 = vpack.c.bf16 %v681, %v681
          %v683 = vld [vmem:[#allocation8] sm:$0xff]
          %v684 = vld [vmem:[#allocation8 + $0x8] sm:$0xff]
          %v685 = vld [vmem:[#allocation8 + $0x10] sm:$0xff]
          %v686 = vld [vmem:[#allocation8 + $0x18] sm:$0xff]
          %v687 = vld [vmem:[#allocation8 + $0x20] sm:$0xff]
          %v688 = vld [vmem:[#allocation8 + $0x28] sm:$0xff]
          %v689 = vld [vmem:[#allocation8 + $0x30] sm:$0xff]
          %v690 = vld [vmem:[#allocation8 + $0x38] sm:$0xff]
          %s691 = scalar_lea.vmem [#allocation3], 32
          %v692 = vld [vmem:[%s691] sm:$0xff]
          %v693 = vld [vmem:[%s691 + $0x8] sm:$0xff]
          %v694 = vld [vmem:[%s691 + $0x10] sm:$0xff]
          %v695 = vld [vmem:[%s691 + $0x18] sm:$0xff]
          %s696 = scalar_lea.vmem [#allocation6], 1
          %v697 = vld [vmem:[%s696] sm:$0x1]
          %v699 = vlaneseq
          %v700 = vshrl.u32 %v699, 7
          %v701 = vsub.s32 0, %v700
          %v702 = vrot.slane %v697, %v701
          %v708 = vunpack.c.l.b16 %v692
          %v709 = vunpack.c.h.b16 %v692
          %v710 = vunpack.c.l.b16 %v693
          %v711 = vunpack.c.h.b16 %v693
          %v712 = vunpack.c.l.b16 %v694
          %v713 = vunpack.c.h.b16 %v694
          %v714 = vunpack.c.l.b16 %v695
          %v715 = vunpack.c.h.b16 %v695
          %v716 = vpack.c.b16 %v710, %v708
          %v717 = vpack.c.b16 %v711, %v709
          %v718 = vpack.c.b16 %v714, %v712
          %v719 = vpack.c.b16 %v715, %v713
          %724 = vmatprep.subr.bf16.mxu0 0
          %725 = vmatpush1.bf16.xpose.msra.mxu0 0
          %726 = vmatprep.subr.bf16.mxu0 0
          %727 = vmatpush1.bf16.xpose.msra.mxu0 0
          %728 = vmatprep.subr.bf16.mxu0 0
          %729 = vmatpush1.bf16.xpose.msra.mxu0 0
          %730 = vmatprep.subr.bf16.mxu0 0
          %731 = vmatpush1.bf16.xpose.msra.mxu0 0
          %732 = vmatprep.subr.bf16.mxu0 0
          %733 = vmatpush1.bf16.xpose.msra.mxu0 0
          %734 = vmatprep.subr.bf16.mxu0 0
          %735 = vmatpush1.bf16.xpose.msra.mxu0 0
          %736 = vmatprep.subr.bf16.mxu0 %v719
          %737 = vmatpush1.bf16.xpose.msra.mxu0 %v718
          %738 = vmatprep.subr.bf16.mxu0 %v717
          %739 = vmatpush1.bf16.xpose.msra.mxu0 %v716
          %740 = vmatprep.subr.bf16.mxu0 0
          %741 = vmatpush2.bf16.xpose.msra.mxu0 0
          %742 = vmatprep.subr.bf16.mxu0 0
          %743 = vmatpush2.bf16.xpose.msra.mxu0 0
          %744 = vmatprep.subr.bf16.mxu0 0
          %745 = vmatpush2.bf16.xpose.msra.mxu0 0
          %746 = vmatprep.subr.bf16.mxu0 0
          %747 = vmatpush2.bf16.xpose.msra.mxu0 0
          %748 = vmatprep.subr.bf16.mxu0 0
          %749 = vmatpush2.bf16.xpose.msra.mxu0 0
          %750 = vmatprep.subr.bf16.mxu0 0
          %751 = vmatpush2.bf16.xpose.msra.mxu0 0
          %752 = vmatprep.subr.bf16.mxu0 0
          %753 = vmatpush2.bf16.xpose.msra.mxu0 0
          %754 = vmatprep.subr.bf16.mxu0 0
          %755 = vmatpush2.bf16.xpose.msra.mxu0 0
          %756 = vmatprep.mubr.bf16.mxu0 %v570
          %757 = vmatmul.mubr.bf16.gmra.mxu0 %v569
          %v758 = vpop.f32.mrf.mxu0
          %v759 = vadd.f32 %v702, %v758
          %v760 = vpop.f32.mrf.mxu0
          %v761 = vpop.f32.mrf.mxu0
          %v762 = vpop.f32.mrf.mxu0
          %763 = vdwg.mxu0
          %v764 = vmul.f32 %v759, 0.5
          %v765 = vmul.f32 %v759, 0.70710677
          %vm766 = vcmp.ge.f32.partialorder %v765, 0.0
          %v767 = vsel %vm766, 1.0, -1.0
          %v768 = vand.u32 2147483647, %v765
          %v769 = vmul.f32 %v768, 0.3275911
          %v770 = vadd.f32 %v769, 1.0
          %v771 = vrcp.pop %v770
          %v772 = vmul.f32 %v771, 1.0614054
          %v773 = vadd.f32 %v772, -1.4531521
          %v774 = vmul.f32 %v773, %v771
          %v775 = vadd.f32 %v774, 1.4214138
          %v776 = vmul.f32 %v775, %v771
          %v777 = vadd.f32 %v776, -0.28449672
          %v778 = vmul.f32 %v777, %v771
          %v779 = vadd.f32 %v778, 0.2548296
          %v780 = vmul.f32 %v779, %v771
          %v781 = vsub.f32 0.0, %v768
          %v782 = vmul.f32 %v781, %v768
          %v783 = vmul.f32 %v782, 1.442695
          %v784 = vpow.pop %v783
          %v785 = vmul.f32 %v780, %v784
          %v786 = vsub.f32 1.0, %v785
          %v787 = vmul.f32 %v767, %v786
          %v788 = vadd.f32 %v787, 1.0
          %v789 = vmul.f32 %v764, %v788
          %v790 = vpack.c.bf16 %v789, %v789
          %s791 = scalar_lea.vmem [#allocation8], 64
          %v792 = vld [vmem:[%s791] sm:$0xff]
          %v793 = vld [vmem:[%s791 + $0x8] sm:$0xff]
          %v794 = vld [vmem:[%s791 + $0x10] sm:$0xff]
          %v795 = vld [vmem:[%s791 + $0x18] sm:$0xff]
          %v796 = vld [vmem:[%s791 + $0x20] sm:$0xff]
          %v797 = vld [vmem:[%s791 + $0x28] sm:$0xff]
          %v798 = vld [vmem:[%s791 + $0x30] sm:$0xff]
          %v799 = vld [vmem:[%s791 + $0x38] sm:$0xff]
          %v808 = vunpack.c.l.b16 %v792
          %v809 = vunpack.c.h.b16 %v792
          %v810 = vunpack.c.l.b16 %v793
          %v811 = vunpack.c.h.b16 %v793
          %v812 = vunpack.c.l.b16 %v794
          %v813 = vunpack.c.h.b16 %v794
          %v814 = vunpack.c.l.b16 %v795
          %v815 = vunpack.c.h.b16 %v795
          %v816 = vunpack.c.l.b16 %v796
          %v817 = vunpack.c.h.b16 %v796
          %v818 = vunpack.c.l.b16 %v797
          %v819 = vunpack.c.h.b16 %v797
          %v820 = vunpack.c.l.b16 %v798
          %v821 = vunpack.c.h.b16 %v798
          %v822 = vunpack.c.l.b16 %v799
          %v823 = vunpack.c.h.b16 %v799
          %v824 = vpack.c.b16 %v812, %v808
          %v825 = vpack.c.b16 %v813, %v809
          %v826 = vpack.c.b16 %v814, %v810
          %v827 = vpack.c.b16 %v815, %v811
          %v828 = vpack.c.b16 %v820, %v816
          %v829 = vpack.c.b16 %v821, %v817
          %v830 = vpack.c.b16 %v822, %v818
          %v831 = vpack.c.b16 %v823, %v819
          %vm840 = vcmask 261120
          %v842 = vsel %vm840, %v790, 0
          %844 = vmatprep.subr.bf16.mxu0 0
          %845 = vmatpush1.bf16.msra.mxu0 0
          %846 = vmatprep.subr.bf16.mxu0 0
          %847 = vmatpush1.bf16.msra.mxu0 0
          %848 = vmatprep.subr.bf16.mxu0 0
          %849 = vmatpush1.bf16.msra.mxu0 0
          %850 = vmatprep.subr.bf16.mxu0 0
          %851 = vmatpush1.bf16.msra.mxu0 0
          %852 = vmatprep.subr.bf16.mxu0 0
          %853 = vmatpush1.bf16.msra.mxu0 0
          %854 = vmatprep.subr.bf16.mxu0 0
          %855 = vmatpush1.bf16.msra.mxu0 0
          %856 = vmatprep.subr.bf16.mxu0 %v829
          %857 = vmatpush1.bf16.msra.mxu0 %v828
          %858 = vmatprep.subr.bf16.mxu0 %v825
          %859 = vmatpush1.bf16.msra.mxu0 %v824
          %860 = vmatprep.subr.bf16.mxu0 0
          %861 = vmatpush2.bf16.msra.mxu0 0
          %862 = vmatprep.subr.bf16.mxu0 0
          %863 = vmatpush2.bf16.msra.mxu0 0
          %864 = vmatprep.subr.bf16.mxu0 0
          %865 = vmatpush2.bf16.msra.mxu0 0
          %866 = vmatprep.subr.bf16.mxu0 0
          %867 = vmatpush2.bf16.msra.mxu0 0
          %868 = vmatprep.subr.bf16.mxu0 0
          %869 = vmatpush2.bf16.msra.mxu0 0
          %870 = vmatprep.subr.bf16.mxu0 0
          %871 = vmatpush2.bf16.msra.mxu0 0
          %872 = vmatprep.subr.bf16.mxu0 0
          %873 = vmatpush2.bf16.msra.mxu0 0
          %874 = vmatprep.subr.bf16.mxu0 0
          %875 = vmatpush2.bf16.msra.mxu0 0
          %876 = vmatprep.mubr.bf16.mxu0 0
          %877 = vmatmul.mubr.bf16.gmra.mxu0 %v842
          %v878 = vpop.f32.mrf.mxu0
          %v879 = vadd.f32 0.0, %v878
          %v880 = vpop.f32.mrf.mxu0
          %v881 = vadd.f32 0.0, %v880
          %v882 = vpop.f32.mrf.mxu0
          %v883 = vpop.f32.mrf.mxu0
          %884 = vdwg.mxu0
          %885 = vmatprep.subr.bf16.mxu0 0
          %886 = vmatpush1.bf16.msra.mxu0 0
          %887 = vmatprep.subr.bf16.mxu0 0
          %888 = vmatpush1.bf16.msra.mxu0 0
          %889 = vmatprep.subr.bf16.mxu0 0
          %890 = vmatpush1.bf16.msra.mxu0 0
          %891 = vmatprep.subr.bf16.mxu0 0
          %892 = vmatpush1.bf16.msra.mxu0 0
          %893 = vmatprep.subr.bf16.mxu0 0
          %894 = vmatpush1.bf16.msra.mxu0 0
          %895 = vmatprep.subr.bf16.mxu0 0
          %896 = vmatpush1.bf16.msra.mxu0 0
          %897 = vmatprep.subr.bf16.mxu0 %v831
          %898 = vmatpush1.bf16.msra.mxu0 %v830
          %899 = vmatprep.subr.bf16.mxu0 %v827
          %900 = vmatpush1.bf16.msra.mxu0 %v826
          %901 = vmatprep.subr.bf16.mxu0 0
          %902 = vmatpush2.bf16.msra.mxu0 0
          %903 = vmatprep.subr.bf16.mxu0 0
          %904 = vmatpush2.bf16.msra.mxu0 0
          %905 = vmatprep.subr.bf16.mxu0 0
          %906 = vmatpush2.bf16.msra.mxu0 0
          %907 = vmatprep.subr.bf16.mxu0 0
          %908 = vmatpush2.bf16.msra.mxu0 0
          %909 = vmatprep.subr.bf16.mxu0 0
          %910 = vmatpush2.bf16.msra.mxu0 0
          %911 = vmatprep.subr.bf16.mxu0 0
          %912 = vmatpush2.bf16.msra.mxu0 0
          %913 = vmatprep.subr.bf16.mxu0 0
          %914 = vmatpush2.bf16.msra.mxu0 0
          %915 = vmatprep.subr.bf16.mxu0 0
          %916 = vmatpush2.bf16.msra.mxu0 0
          %917 = vmatprep.mubr.bf16.mxu0 0
          %918 = vmatmul.mubr.bf16.gmra.mxu0 %v842
          %v919 = vpop.f32.mrf.mxu0
          %v920 = vadd.f32 0.0, %v919
          %v921 = vpop.f32.mrf.mxu0
          %v922 = vadd.f32 0.0, %v921
          %v923 = vpop.f32.mrf.mxu0
          %v924 = vpop.f32.mrf.mxu0
          %925 = vdwg.mxu0
          %v934 = vunpack.c.l.b16 %v683
          %v935 = vunpack.c.h.b16 %v683
          %v936 = vunpack.c.l.b16 %v684
          %v937 = vunpack.c.h.b16 %v684
          %v938 = vunpack.c.l.b16 %v685
          %v939 = vunpack.c.h.b16 %v685
          %v940 = vunpack.c.l.b16 %v686
          %v941 = vunpack.c.h.b16 %v686
          %v942 = vunpack.c.l.b16 %v687
          %v943 = vunpack.c.h.b16 %v687
          %v944 = vunpack.c.l.b16 %v688
          %v945 = vunpack.c.h.b16 %v688
          %v946 = vunpack.c.l.b16 %v689
          %v947 = vunpack.c.h.b16 %v689
          %v948 = vunpack.c.l.b16 %v690
          %v949 = vunpack.c.h.b16 %v690
          %v950 = vpack.c.b16 %v938, %v934
          %v951 = vpack.c.b16 %v939, %v935
          %v952 = vpack.c.b16 %v940, %v936
          %v953 = vpack.c.b16 %v941, %v937
          %v954 = vpack.c.b16 %v946, %v942
          %v955 = vpack.c.b16 %v947, %v943
          %v956 = vpack.c.b16 %v948, %v944
          %v957 = vpack.c.b16 %v949, %v945
          %v967 = vsel %vm840, %v682, 0
          %969 = vmatprep.subr.bf16.mxu0 0
          %970 = vmatpush1.bf16.msra.mxu0 0
          %971 = vmatprep.subr.bf16.mxu0 0
          %972 = vmatpush1.bf16.msra.mxu0 0
          %973 = vmatprep.subr.bf16.mxu0 0
          %974 = vmatpush1.bf16.msra.mxu0 0
          %975 = vmatprep.subr.bf16.mxu0 0
          %976 = vmatpush1.bf16.msra.mxu0 0
          %977 = vmatprep.subr.bf16.mxu0 0
          %978 = vmatpush1.bf16.msra.mxu0 0
          %979 = vmatprep.subr.bf16.mxu0 0
          %980 = vmatpush1.bf16.msra.mxu0 0
          %981 = vmatprep.subr.bf16.mxu0 %v955
          %982 = vmatpush1.bf16.msra.mxu0 %v954
          %983 = vmatprep.subr.bf16.mxu0 %v951
          %984 = vmatpush1.bf16.msra.mxu0 %v950
          %985 = vmatprep.subr.bf16.mxu0 0
          %986 = vmatpush2.bf16.msra.mxu0 0
          %987 = vmatprep.subr.bf16.mxu0 0
          %988 = vmatpush2.bf16.msra.mxu0 0
          %989 = vmatprep.subr.bf16.mxu0 0
          %990 = vmatpush2.bf16.msra.mxu0 0
          %991 = vmatprep.subr.bf16.mxu0 0
          %992 = vmatpush2.bf16.msra.mxu0 0
          %993 = vmatprep.subr.bf16.mxu0 0
          %994 = vmatpush2.bf16.msra.mxu0 0
          %995 = vmatprep.subr.bf16.mxu0 0
          %996 = vmatpush2.bf16.msra.mxu0 0
          %997 = vmatprep.subr.bf16.mxu0 0
          %998 = vmatpush2.bf16.msra.mxu0 0
          %999 = vmatprep.subr.bf16.mxu0 0
          %1000 = vmatpush2.bf16.msra.mxu0 0
          %1001 = vmatprep.mubr.bf16.mxu0 0
          %1002 = vmatmul.mubr.bf16.gmra.mxu0 %v967
          %v1003 = vpop.f32.mrf.mxu0
          %v1004 = vadd.f32 %v879, %v1003
          %v1005 = vpop.f32.mrf.mxu0
          %v1006 = vadd.f32 %v881, %v1005
          %v1007 = vpop.f32.mrf.mxu0
          %v1008 = vpop.f32.mrf.mxu0
          %1009 = vdwg.mxu0
          %1010 = vmatprep.subr.bf16.mxu0 0
          %1011 = vmatpush1.bf16.msra.mxu0 0
          %1012 = vmatprep.subr.bf16.mxu0 0
          %1013 = vmatpush1.bf16.msra.mxu0 0
          %1014 = vmatprep.subr.bf16.mxu0 0
          %1015 = vmatpush1.bf16.msra.mxu0 0
          %1016 = vmatprep.subr.bf16.mxu0 0
          %1017 = vmatpush1.bf16.msra.mxu0 0
          %1018 = vmatprep.subr.bf16.mxu0 0
          %1019 = vmatpush1.bf16.msra.mxu0 0
          %1020 = vmatprep.subr.bf16.mxu0 0
          %1021 = vmatpush1.bf16.msra.mxu0 0
          %1022 = vmatprep.subr.bf16.mxu0 %v957
          %1023 = vmatpush1.bf16.msra.mxu0 %v956
          %1024 = vmatprep.subr.bf16.mxu0 %v953
          %1025 = vmatpush1.bf16.msra.mxu0 %v952
          %1026 = vmatprep.subr.bf16.mxu0 0
          %1027 = vmatpush2.bf16.msra.mxu0 0
          %1028 = vmatprep.subr.bf16.mxu0 0
          %1029 = vmatpush2.bf16.msra.mxu0 0
          %1030 = vmatprep.subr.bf16.mxu0 0
          %1031 = vmatpush2.bf16.msra.mxu0 0
          %1032 = vmatprep.subr.bf16.mxu0 0
          %1033 = vmatpush2.bf16.msra.mxu0 0
          %1034 = vmatprep.subr.bf16.mxu0 0
          %1035 = vmatpush2.bf16.msra.mxu0 0
          %1036 = vmatprep.subr.bf16.mxu0 0
          %1037 = vmatpush2.bf16.msra.mxu0 0
          %1038 = vmatprep.subr.bf16.mxu0 0
          %1039 = vmatpush2.bf16.msra.mxu0 0
          %1040 = vmatprep.subr.bf16.mxu0 0
          %1041 = vmatpush2.bf16.msra.mxu0 0
          %1042 = vmatprep.mubr.bf16.mxu0 0
          %1043 = vmatmul.mubr.bf16.gmra.mxu0 %v967
          %v1044 = vpop.f32.mrf.mxu0
          %v1045 = vadd.f32 %v920, %v1044
          %v1046 = vpop.f32.mrf.mxu0
          %v1047 = vadd.f32 %v922, %v1046
          %v1048 = vpop.f32.mrf.mxu0
          %v1049 = vpop.f32.mrf.mxu0
          %1050 = vdwg.mxu0
          %s1051 = scalar_lea.vmem [#allocation3], 64
          %v1052 = vld [vmem:[%s1051] sm:$0xff]
          %v1053 = vld [vmem:[%s1051 + $0x8] sm:$0xff]
          %v1054 = vld [vmem:[%s1051 + $0x10] sm:$0xff]
          %v1055 = vld [vmem:[%s1051 + $0x18] sm:$0xff]
          %s1056 = scalar_lea.vmem [#allocation6], 2
          %v1057 = vld [vmem:[%s1056] sm:$0x1]
          %v1059 = vlaneseq
          %v1060 = vshrl.u32 %v1059, 7
          %v1061 = vsub.s32 0, %v1060
          %v1062 = vrot.slane %v1057, %v1061
          %v1068 = vunpack.c.l.b16 %v1052
          %v1069 = vunpack.c.h.b16 %v1052
          %v1070 = vunpack.c.l.b16 %v1053
          %v1071 = vunpack.c.h.b16 %v1053
          %v1072 = vunpack.c.l.b16 %v1054
          %v1073 = vunpack.c.h.b16 %v1054
          %v1074 = vunpack.c.l.b16 %v1055
          %v1075 = vunpack.c.h.b16 %v1055
          %v1076 = vpack.c.b16 %v1070, %v1068
          %v1077 = vpack.c.b16 %v1071, %v1069
          %v1078 = vpack.c.b16 %v1074, %v1072
          %v1079 = vpack.c.b16 %v1075, %v1073
          %1084 = vmatprep.subr.bf16.mxu0 0
          %1085 = vmatpush1.bf16.xpose.msra.mxu0 0
          %1086 = vmatprep.subr.bf16.mxu0 0
          %1087 = vmatpush1.bf16.xpose.msra.mxu0 0
          %1088 = vmatprep.subr.bf16.mxu0 0
          %1089 = vmatpush1.bf16.xpose.msra.mxu0 0
          %1090 = vmatprep.subr.bf16.mxu0 0
          %1091 = vmatpush1.bf16.xpose.msra.mxu0 0
          %1092 = vmatprep.subr.bf16.mxu0 0
          %1093 = vmatpush1.bf16.xpose.msra.mxu0 0
          %1094 = vmatprep.subr.bf16.mxu0 0
          %1095 = vmatpush1.bf16.xpose.msra.mxu0 0
          %1096 = vmatprep.subr.bf16.mxu0 %v1079
          %1097 = vmatpush1.bf16.xpose.msra.mxu0 %v1078
          %1098 = vmatprep.subr.bf16.mxu0 %v1077
          %1099 = vmatpush1.bf16.xpose.msra.mxu0 %v1076
          %1100 = vmatprep.subr.bf16.mxu0 0
          %1101 = vmatpush2.bf16.xpose.msra.mxu0 0
          %1102 = vmatprep.subr.bf16.mxu0 0
          %1103 = vmatpush2.bf16.xpose.msra.mxu0 0
          %1104 = vmatprep.subr.bf16.mxu0 0
          %1105 = vmatpush2.bf16.xpose.msra.mxu0 0
          %1106 = vmatprep.subr.bf16.mxu0 0
          %1107 = vmatpush2.bf16.xpose.msra.mxu0 0
          %1108 = vmatprep.subr.bf16.mxu0 0
          %1109 = vmatpush2.bf16.xpose.msra.mxu0 0
          %1110 = vmatprep.subr.bf16.mxu0 0
          %1111 = vmatpush2.bf16.xpose.msra.mxu0 0
          %1112 = vmatprep.subr.bf16.mxu0 0
          %1113 = vmatpush2.bf16.xpose.msra.mxu0 0
          %1114 = vmatprep.subr.bf16.mxu0 0
          %1115 = vmatpush2.bf16.xpose.msra.mxu0 0
          %1116 = vmatprep.mubr.bf16.mxu0 %v572
          %1117 = vmatmul.mubr.bf16.gmra.mxu0 %v571
          %v1118 = vpop.f32.mrf.mxu0
          %v1119 = vadd.f32 %v1062, %v1118
          %v1120 = vpop.f32.mrf.mxu0
          %v1121 = vpop.f32.mrf.mxu0
          %v1122 = vpop.f32.mrf.mxu0
          %1123 = vdwg.mxu0
          %v1124 = vmul.f32 %v1119, 0.5
          %v1125 = vmul.f32 %v1119, 0.70710677
          %vm1126 = vcmp.ge.f32.partialorder %v1125, 0.0
          %v1127 = vsel %vm1126, 1.0, -1.0
          %v1128 = vand.u32 2147483647, %v1125
          %v1129 = vmul.f32 %v1128, 0.3275911
          %v1130 = vadd.f32 %v1129, 1.0
          %v1131 = vrcp.pop %v1130
          %v1132 = vmul.f32 %v1131, 1.0614054
          %v1133 = vadd.f32 %v1132, -1.4531521
          %v1134 = vmul.f32 %v1133, %v1131
          %v1135 = vadd.f32 %v1134, 1.4214138
          %v1136 = vmul.f32 %v1135, %v1131
          %v1137 = vadd.f32 %v1136, -0.28449672
          %v1138 = vmul.f32 %v1137, %v1131
          %v1139 = vadd.f32 %v1138, 0.2548296
          %v1140 = vmul.f32 %v1139, %v1131
          %v1141 = vsub.f32 0.0, %v1128
          %v1142 = vmul.f32 %v1141, %v1128
          %v1143 = vmul.f32 %v1142, 1.442695
          %v1144 = vpow.pop %v1143
          %v1145 = vmul.f32 %v1140, %v1144
          %v1146 = vsub.f32 1.0, %v1145
          %v1147 = vmul.f32 %v1127, %v1146
          %v1148 = vadd.f32 %v1147, 1.0
          %v1149 = vmul.f32 %v1124, %v1148
          %v1150 = vpack.c.bf16 %v1149, %v1149
          %s1151 = scalar_lea.vmem [#allocation8], 128
          %v1152 = vld [vmem:[%s1151] sm:$0xff]
          %v1153 = vld [vmem:[%s1151 + $0x8] sm:$0xff]
          %v1154 = vld [vmem:[%s1151 + $0x10] sm:$0xff]
          %v1155 = vld [vmem:[%s1151 + $0x18] sm:$0xff]
          %v1156 = vld [vmem:[%s1151 + $0x20] sm:$0xff]
          %v1157 = vld [vmem:[%s1151 + $0x28] sm:$0xff]
          %v1158 = vld [vmem:[%s1151 + $0x30] sm:$0xff]
          %v1159 = vld [vmem:[%s1151 + $0x38] sm:$0xff]
          %v1168 = vunpack.c.l.b16 %v1152
          %v1169 = vunpack.c.h.b16 %v1152
          %v1170 = vunpack.c.l.b16 %v1153
          %v1171 = vunpack.c.h.b16 %v1153
          %v1172 = vunpack.c.l.b16 %v1154
          %v1173 = vunpack.c.h.b16 %v1154
          %v1174 = vunpack.c.l.b16 %v1155
          %v1175 = vunpack.c.h.b16 %v1155
          %v1176 = vunpack.c.l.b16 %v1156
          %v1177 = vunpack.c.h.b16 %v1156
          %v1178 = vunpack.c.l.b16 %v1157
          %v1179 = vunpack.c.h.b16 %v1157
          %v1180 = vunpack.c.l.b16 %v1158
          %v1181 = vunpack.c.h.b16 %v1158
          %v1182 = vunpack.c.l.b16 %v1159
          %v1183 = vunpack.c.h.b16 %v1159
          %v1184 = vpack.c.b16 %v1172, %v1168
          %v1185 = vpack.c.b16 %v1173, %v1169
          %v1186 = vpack.c.b16 %v1174, %v1170
          %v1187 = vpack.c.b16 %v1175, %v1171
          %v1188 = vpack.c.b16 %v1180, %v1176
          %v1189 = vpack.c.b16 %v1181, %v1177
          %v1190 = vpack.c.b16 %v1182, %v1178
          %v1191 = vpack.c.b16 %v1183, %v1179
          %v1201 = vsel %vm840, %v1150, 0
          %1203 = vmatprep.subr.bf16.mxu0 0
          %1204 = vmatpush1.bf16.msra.mxu0 0
          %1205 = vmatprep.subr.bf16.mxu0 0
          %1206 = vmatpush1.bf16.msra.mxu0 0
          %1207 = vmatprep.subr.bf16.mxu0 0
          %1208 = vmatpush1.bf16.msra.mxu0 0
          %1209 = vmatprep.subr.bf16.mxu0 0
          %1210 = vmatpush1.bf16.msra.mxu0 0
          %1211 = vmatprep.subr.bf16.mxu0 0
          %1212 = vmatpush1.bf16.msra.mxu0 0
          %1213 = vmatprep.subr.bf16.mxu0 0
          %1214 = vmatpush1.bf16.msra.mxu0 0
          %1215 = vmatprep.subr.bf16.mxu0 %v1189
          %1216 = vmatpush1.bf16.msra.mxu0 %v1188
          %1217 = vmatprep.subr.bf16.mxu0 %v1185
          %1218 = vmatpush1.bf16.msra.mxu0 %v1184
          %1219 = vmatprep.subr.bf16.mxu0 0
          %1220 = vmatpush2.bf16.msra.mxu0 0
          %1221 = vmatprep.subr.bf16.mxu0 0
          %1222 = vmatpush2.bf16.msra.mxu0 0
          %1223 = vmatprep.subr.bf16.mxu0 0
          %1224 = vmatpush2.bf16.msra.mxu0 0
          %1225 = vmatprep.subr.bf16.mxu0 0
          %1226 = vmatpush2.bf16.msra.mxu0 0
          %1227 = vmatprep.subr.bf16.mxu0 0
          %1228 = vmatpush2.bf16.msra.mxu0 0
          %1229 = vmatprep.subr.bf16.mxu0 0
          %1230 = vmatpush2.bf16.msra.mxu0 0
          %1231 = vmatprep.subr.bf16.mxu0 0
          %1232 = vmatpush2.bf16.msra.mxu0 0
          %1233 = vmatprep.subr.bf16.mxu0 0
          %1234 = vmatpush2.bf16.msra.mxu0 0
          %1235 = vmatprep.mubr.bf16.mxu0 0
          %1236 = vmatmul.mubr.bf16.gmra.mxu0 %v1201
          %v1237 = vpop.f32.mrf.mxu0
          %v1238 = vadd.f32 0.0, %v1237
          %v1239 = vpop.f32.mrf.mxu0
          %v1240 = vadd.f32 0.0, %v1239
          %v1241 = vpop.f32.mrf.mxu0
          %v1242 = vpop.f32.mrf.mxu0
          %1243 = vdwg.mxu0
          %1244 = vmatprep.subr.bf16.mxu0 0
          %1245 = vmatpush1.bf16.msra.mxu0 0
          %1246 = vmatprep.subr.bf16.mxu0 0
          %1247 = vmatpush1.bf16.msra.mxu0 0
          %1248 = vmatprep.subr.bf16.mxu0 0
          %1249 = vmatpush1.bf16.msra.mxu0 0
          %1250 = vmatprep.subr.bf16.mxu0 0
          %1251 = vmatpush1.bf16.msra.mxu0 0
          %1252 = vmatprep.subr.bf16.mxu0 0
          %1253 = vmatpush1.bf16.msra.mxu0 0
          %1254 = vmatprep.subr.bf16.mxu0 0
          %1255 = vmatpush1.bf16.msra.mxu0 0
          %1256 = vmatprep.subr.bf16.mxu0 %v1191
          %1257 = vmatpush1.bf16.msra.mxu0 %v1190
          %1258 = vmatprep.subr.bf16.mxu0 %v1187
          %1259 = vmatpush1.bf16.msra.mxu0 %v1186
          %1260 = vmatprep.subr.bf16.mxu0 0
          %1261 = vmatpush2.bf16.msra.mxu0 0
          %1262 = vmatprep.subr.bf16.mxu0 0
          %1263 = vmatpush2.bf16.msra.mxu0 0
          %1264 = vmatprep.subr.bf16.mxu0 0
          %1265 = vmatpush2.bf16.msra.mxu0 0
          %1266 = vmatprep.subr.bf16.mxu0 0
          %1267 = vmatpush2.bf16.msra.mxu0 0
          %1268 = vmatprep.subr.bf16.mxu0 0
          %1269 = vmatpush2.bf16.msra.mxu0 0
          %1270 = vmatprep.subr.bf16.mxu0 0
          %1271 = vmatpush2.bf16.msra.mxu0 0
          %1272 = vmatprep.subr.bf16.mxu0 0
          %1273 = vmatpush2.bf16.msra.mxu0 0
          %1274 = vmatprep.subr.bf16.mxu0 0
          %1275 = vmatpush2.bf16.msra.mxu0 0
          %1276 = vmatprep.mubr.bf16.mxu0 0
          %1277 = vmatmul.mubr.bf16.gmra.mxu0 %v1201
          %v1278 = vpop.f32.mrf.mxu0
          %v1279 = vadd.f32 0.0, %v1278
          %v1280 = vpop.f32.mrf.mxu0
          %v1281 = vadd.f32 0.0, %v1280
          %v1282 = vpop.f32.mrf.mxu0
          %v1283 = vpop.f32.mrf.mxu0
          %1284 = vdwg.mxu0
          %v1285 = vadd.f32 %v1004, %v1238
          %v1286 = vadd.f32 %v1006, %v1240
          %v1287 = vadd.f32 %v1045, %v1279
          %v1288 = vadd.f32 %v1047, %v1281
          %s1289 = scalar_lea.vmem [#allocation3], 96
          %v1290 = vld [vmem:[%s1289] sm:$0xff]
          %v1291 = vld [vmem:[%s1289 + $0x8] sm:$0xff]
          %v1292 = vld [vmem:[%s1289 + $0x10] sm:$0xff]
          %v1293 = vld [vmem:[%s1289 + $0x18] sm:$0xff]
          %s1294 = scalar_lea.vmem [#allocation6], 3
          %v1295 = vld [vmem:[%s1294] sm:$0x1]
          %v1297 = vlaneseq
          %v1298 = vshrl.u32 %v1297, 7
          %v1299 = vsub.s32 0, %v1298
          %v1300 = vrot.slane %v1295, %v1299
          %v1306 = vunpack.c.l.b16 %v1290
          %v1307 = vunpack.c.h.b16 %v1290
          %v1308 = vunpack.c.l.b16 %v1291
          %v1309 = vunpack.c.h.b16 %v1291
          %v1310 = vunpack.c.l.b16 %v1292
          %v1311 = vunpack.c.h.b16 %v1292
          %v1312 = vunpack.c.l.b16 %v1293
          %v1313 = vunpack.c.h.b16 %v1293
          %v1314 = vpack.c.b16 %v1308, %v1306
          %v1315 = vpack.c.b16 %v1309, %v1307
          %v1316 = vpack.c.b16 %v1312, %v1310
          %v1317 = vpack.c.b16 %v1313, %v1311
          %1322 = vmatprep.subr.bf16.mxu0 0
          %1323 = vmatpush1.bf16.xpose.msra.mxu0 0
          %1324 = vmatprep.subr.bf16.mxu0 0
          %1325 = vmatpush1.bf16.xpose.msra.mxu0 0
          %1326 = vmatprep.subr.bf16.mxu0 0
          %1327 = vmatpush1.bf16.xpose.msra.mxu0 0
          %1328 = vmatprep.subr.bf16.mxu0 0
          %1329 = vmatpush1.bf16.xpose.msra.mxu0 0
          %1330 = vmatprep.subr.bf16.mxu0 0
          %1331 = vmatpush1.bf16.xpose.msra.mxu0 0
          %1332 = vmatprep.subr.bf16.mxu0 0
          %1333 = vmatpush1.bf16.xpose.msra.mxu0 0
          %1334 = vmatprep.subr.bf16.mxu0 %v1317
          %1335 = vmatpush1.bf16.xpose.msra.mxu0 %v1316
          %1336 = vmatprep.subr.bf16.mxu0 %v1315
          %1337 = vmatpush1.bf16.xpose.msra.mxu0 %v1314
          %1338 = vmatprep.subr.bf16.mxu0 0
          %1339 = vmatpush2.bf16.xpose.msra.mxu0 0
          %1340 = vmatprep.subr.bf16.mxu0 0
          %1341 = vmatpush2.bf16.xpose.msra.mxu0 0
          %1342 = vmatprep.subr.bf16.mxu0 0
          %1343 = vmatpush2.bf16.xpose.msra.mxu0 0
          %1344 = vmatprep.subr.bf16.mxu0 0
          %1345 = vmatpush2.bf16.xpose.msra.mxu0 0
          %1346 = vmatprep.subr.bf16.mxu0 0
          %1347 = vmatpush2.bf16.xpose.msra.mxu0 0
          %1348 = vmatprep.subr.bf16.mxu0 0
          %1349 = vmatpush2.bf16.xpose.msra.mxu0 0
          %1350 = vmatprep.subr.bf16.mxu0 0
          %1351 = vmatpush2.bf16.xpose.msra.mxu0 0
          %1352 = vmatprep.subr.bf16.mxu0 0
          %1353 = vmatpush2.bf16.xpose.msra.mxu0 0
          %1354 = vmatprep.mubr.bf16.mxu0 %v574
          %1355 = vmatmul.mubr.bf16.gmra.mxu0 %v573
          %v1356 = vpop.f32.mrf.mxu0
          %v1357 = vadd.f32 %v1300, %v1356
          %v1358 = vpop.f32.mrf.mxu0
          %v1359 = vpop.f32.mrf.mxu0
          %v1360 = vpop.f32.mrf.mxu0
          %1361 = vdwg.mxu0
          %v1362 = vmul.f32 %v1357, 0.5
          %v1363 = vmul.f32 %v1357, 0.70710677
          %vm1364 = vcmp.ge.f32.partialorder %v1363, 0.0
          %v1365 = vsel %vm1364, 1.0, -1.0
          %v1366 = vand.u32 2147483647, %v1363
          %v1367 = vmul.f32 %v1366, 0.3275911
          %v1368 = vadd.f32 %v1367, 1.0
          %v1369 = vrcp.pop %v1368
          %v1370 = vmul.f32 %v1369, 1.0614054
          %v1371 = vadd.f32 %v1370, -1.4531521
          %v1372 = vmul.f32 %v1371, %v1369
          %v1373 = vadd.f32 %v1372, 1.4214138
          %v1374 = vmul.f32 %v1373, %v1369
          %v1375 = vadd.f32 %v1374, -0.28449672
          %v1376 = vmul.f32 %v1375, %v1369
          %v1377 = vadd.f32 %v1376, 0.2548296
          %v1378 = vmul.f32 %v1377, %v1369
          %v1379 = vsub.f32 0.0, %v1366
          %v1380 = vmul.f32 %v1379, %v1366
          %v1381 = vmul.f32 %v1380, 1.442695
          %v1382 = vpow.pop %v1381
          %v1383 = vmul.f32 %v1378, %v1382
          %v1384 = vsub.f32 1.0, %v1383
          %v1385 = vmul.f32 %v1365, %v1384
          %v1386 = vadd.f32 %v1385, 1.0
          %v1387 = vmul.f32 %v1362, %v1386
          %v1388 = vpack.c.bf16 %v1387, %v1387
          %s1389 = scalar_lea.vmem [#allocation8], 192
          %v1390 = vld [vmem:[%s1389] sm:$0xff]
          %v1391 = vld [vmem:[%s1389 + $0x8] sm:$0xff]
          %v1392 = vld [vmem:[%s1389 + $0x10] sm:$0xff]
          %v1393 = vld [vmem:[%s1389 + $0x18] sm:$0xff]
          %v1394 = vld [vmem:[%s1389 + $0x20] sm:$0xff]
          %v1395 = vld [vmem:[%s1389 + $0x28] sm:$0xff]
          %v1396 = vld [vmem:[%s1389 + $0x30] sm:$0xff]
          %v1397 = vld [vmem:[%s1389 + $0x38] sm:$0xff]
          %v1406 = vunpack.c.l.b16 %v1390
          %v1407 = vunpack.c.h.b16 %v1390
          %v1408 = vunpack.c.l.b16 %v1391
          %v1409 = vunpack.c.h.b16 %v1391
          %v1410 = vunpack.c.l.b16 %v1392
          %v1411 = vunpack.c.h.b16 %v1392
          %v1412 = vunpack.c.l.b16 %v1393
          %v1413 = vunpack.c.h.b16 %v1393
          %v1414 = vunpack.c.l.b16 %v1394
          %v1415 = vunpack.c.h.b16 %v1394
          %v1416 = vunpack.c.l.b16 %v1395
          %v1417 = vunpack.c.h.b16 %v1395
          %v1418 = vunpack.c.l.b16 %v1396
          %v1419 = vunpack.c.h.b16 %v1396
          %v1420 = vunpack.c.l.b16 %v1397
          %v1421 = vunpack.c.h.b16 %v1397
          %v1422 = vpack.c.b16 %v1410, %v1406
          %v1423 = vpack.c.b16 %v1411, %v1407
          %v1424 = vpack.c.b16 %v1412, %v1408
          %v1425 = vpack.c.b16 %v1413, %v1409
          %v1426 = vpack.c.b16 %v1418, %v1414
          %v1427 = vpack.c.b16 %v1419, %v1415
          %v1428 = vpack.c.b16 %v1420, %v1416
          %v1429 = vpack.c.b16 %v1421, %v1417
          %v1439 = vsel %vm840, %v1388, 0
          %1441 = vmatprep.subr.bf16.mxu0 0
          %1442 = vmatpush1.bf16.msra.mxu0 0
          %1443 = vmatprep.subr.bf16.mxu0 0
          %1444 = vmatpush1.bf16.msra.mxu0 0
          %1445 = vmatprep.subr.bf16.mxu0 0
          %1446 = vmatpush1.bf16.msra.mxu0 0
          %1447 = vmatprep.subr.bf16.mxu0 0
          %1448 = vmatpush1.bf16.msra.mxu0 0
          %1449 = vmatprep.subr.bf16.mxu0 0
          %1450 = vmatpush1.bf16.msra.mxu0 0
          %1451 = vmatprep.subr.bf16.mxu0 0
          %1452 = vmatpush1.bf16.msra.mxu0 0
          %1453 = vmatprep.subr.bf16.mxu0 %v1427
          %1454 = vmatpush1.bf16.msra.mxu0 %v1426
          %1455 = vmatprep.subr.bf16.mxu0 %v1423
          %1456 = vmatpush1.bf16.msra.mxu0 %v1422
          %1457 = vmatprep.subr.bf16.mxu0 0
          %1458 = vmatpush2.bf16.msra.mxu0 0
          %1459 = vmatprep.subr.bf16.mxu0 0
          %1460 = vmatpush2.bf16.msra.mxu0 0
          %1461 = vmatprep.subr.bf16.mxu0 0
          %1462 = vmatpush2.bf16.msra.mxu0 0
          %1463 = vmatprep.subr.bf16.mxu0 0
          %1464 = vmatpush2.bf16.msra.mxu0 0
          %1465 = vmatprep.subr.bf16.mxu0 0
          %1466 = vmatpush2.bf16.msra.mxu0 0
          %1467 = vmatprep.subr.bf16.mxu0 0
          %1468 = vmatpush2.bf16.msra.mxu0 0
          %1469 = vmatprep.subr.bf16.mxu0 0
          %1470 = vmatpush2.bf16.msra.mxu0 0
          %1471 = vmatprep.subr.bf16.mxu0 0
          %1472 = vmatpush2.bf16.msra.mxu0 0
          %1473 = vmatprep.mubr.bf16.mxu0 0
          %1474 = vmatmul.mubr.bf16.gmra.mxu0 %v1439
          %v1475 = vpop.f32.mrf.mxu0
          %v1476 = vadd.f32 0.0, %v1475
          %v1477 = vpop.f32.mrf.mxu0
          %v1478 = vadd.f32 0.0, %v1477
          %v1479 = vpop.f32.mrf.mxu0
          %v1480 = vpop.f32.mrf.mxu0
          %1481 = vdwg.mxu0
          %1482 = vmatprep.subr.bf16.mxu0 0
          %1483 = vmatpush1.bf16.msra.mxu0 0
          %1484 = vmatprep.subr.bf16.mxu0 0
          %1485 = vmatpush1.bf16.msra.mxu0 0
          %1486 = vmatprep.subr.bf16.mxu0 0
          %1487 = vmatpush1.bf16.msra.mxu0 0
          %1488 = vmatprep.subr.bf16.mxu0 0
          %1489 = vmatpush1.bf16.msra.mxu0 0
          %1490 = vmatprep.subr.bf16.mxu0 0
          %1491 = vmatpush1.bf16.msra.mxu0 0
          %1492 = vmatprep.subr.bf16.mxu0 0
          %1493 = vmatpush1.bf16.msra.mxu0 0
          %1494 = vmatprep.subr.bf16.mxu0 %v1429
          %1495 = vmatpush1.bf16.msra.mxu0 %v1428
          %1496 = vmatprep.subr.bf16.mxu0 %v1425
          %1497 = vmatpush1.bf16.msra.mxu0 %v1424
          %1498 = vmatprep.subr.bf16.mxu0 0
          %1499 = vmatpush2.bf16.msra.mxu0 0
          %1500 = vmatprep.subr.bf16.mxu0 0
          %1501 = vmatpush2.bf16.msra.mxu0 0
          %1502 = vmatprep.subr.bf16.mxu0 0
          %1503 = vmatpush2.bf16.msra.mxu0 0
          %1504 = vmatprep.subr.bf16.mxu0 0
          %1505 = vmatpush2.bf16.msra.mxu0 0
          %1506 = vmatprep.subr.bf16.mxu0 0
          %1507 = vmatpush2.bf16.msra.mxu0 0
          %1508 = vmatprep.subr.bf16.mxu0 0
          %1509 = vmatpush2.bf16.msra.mxu0 0
          %1510 = vmatprep.subr.bf16.mxu0 0
          %1511 = vmatpush2.bf16.msra.mxu0 0
          %1512 = vmatprep.subr.bf16.mxu0 0
          %1513 = vmatpush2.bf16.msra.mxu0 0
          %1514 = vmatprep.mubr.bf16.mxu0 0
          %1515 = vmatmul.mubr.bf16.gmra.mxu0 %v1439
          %v1516 = vpop.f32.mrf.mxu0
          %v1517 = vadd.f32 0.0, %v1516
          %v1518 = vpop.f32.mrf.mxu0
          %v1519 = vadd.f32 0.0, %v1518
          %v1520 = vpop.f32.mrf.mxu0
          %v1521 = vpop.f32.mrf.mxu0
          %1522 = vdwg.mxu0
          %v1523 = vadd.f32 %v1285, %v1476
          %v1524 = vadd.f32 %v1286, %v1478
          %v1525 = vadd.f32 %v1287, %v1517
          %v1526 = vadd.f32 %v1288, %v1519
          %s1527 = scalar_lea.vmem [#allocation3], 128
          %v1528 = vld [vmem:[%s1527] sm:$0xff]
          %v1529 = vld [vmem:[%s1527 + $0x8] sm:$0xff]
          %v1530 = vld [vmem:[%s1527 + $0x10] sm:$0xff]
          %v1531 = vld [vmem:[%s1527 + $0x18] sm:$0xff]
          %s1532 = scalar_lea.vmem [#allocation6], 4
          %v1533 = vld [vmem:[%s1532] sm:$0x1]
          %v1535 = vlaneseq
          %v1536 = vshrl.u32 %v1535, 7
          %v1537 = vsub.s32 0, %v1536
          %v1538 = vrot.slane %v1533, %v1537
          %v1544 = vunpack.c.l.b16 %v1528
          %v1545 = vunpack.c.h.b16 %v1528
          %v1546 = vunpack.c.l.b16 %v1529
          %v1547 = vunpack.c.h.b16 %v1529
          %v1548 = vunpack.c.l.b16 %v1530
          %v1549 = vunpack.c.h.b16 %v1530
          %v1550 = vunpack.c.l.b16 %v1531
          %v1551 = vunpack.c.h.b16 %v1531
          %v1552 = vpack.c.b16 %v1546, %v1544
          %v1553 = vpack.c.b16 %v1547, %v1545
          %v1554 = vpack.c.b16 %v1550, %v1548
          %v1555 = vpack.c.b16 %v1551, %v1549
          %1560 = vmatprep.subr.bf16.mxu0 0
          %1561 = vmatpush1.bf16.xpose.msra.mxu0 0
          %1562 = vmatprep.subr.bf16.mxu0 0
          %1563 = vmatpush1.bf16.xpose.msra.mxu0 0
          %1564 = vmatprep.subr.bf16.mxu0 0
          %1565 = vmatpush1.bf16.xpose.msra.mxu0 0
          %1566 = vmatprep.subr.bf16.mxu0 0
          %1567 = vmatpush1.bf16.xpose.msra.mxu0 0
          %1568 = vmatprep.subr.bf16.mxu0 0
          %1569 = vmatpush1.bf16.xpose.msra.mxu0 0
          %1570 = vmatprep.subr.bf16.mxu0 0
          %1571 = vmatpush1.bf16.xpose.msra.mxu0 0
          %1572 = vmatprep.subr.bf16.mxu0 %v1555
          %1573 = vmatpush1.bf16.xpose.msra.mxu0 %v1554
          %1574 = vmatprep.subr.bf16.mxu0 %v1553
          %1575 = vmatpush1.bf16.xpose.msra.mxu0 %v1552
          %1576 = vmatprep.subr.bf16.mxu0 0
          %1577 = vmatpush2.bf16.xpose.msra.mxu0 0
          %1578 = vmatprep.subr.bf16.mxu0 0
          %1579 = vmatpush2.bf16.xpose.msra.mxu0 0
          %1580 = vmatprep.subr.bf16.mxu0 0
          %1581 = vmatpush2.bf16.xpose.msra.mxu0 0
          %1582 = vmatprep.subr.bf16.mxu0 0
          %1583 = vmatpush2.bf16.xpose.msra.mxu0 0
          %1584 = vmatprep.subr.bf16.mxu0 0
          %1585 = vmatpush2.bf16.xpose.msra.mxu0 0
          %1586 = vmatprep.subr.bf16.mxu0 0
          %1587 = vmatpush2.bf16.xpose.msra.mxu0 0
          %1588 = vmatprep.subr.bf16.mxu0 0
          %1589 = vmatpush2.bf16.xpose.msra.mxu0 0
          %1590 = vmatprep.subr.bf16.mxu0 0
          %1591 = vmatpush2.bf16.xpose.msra.mxu0 0
          %1592 = vmatprep.mubr.bf16.mxu0 %v576
          %1593 = vmatmul.mubr.bf16.gmra.mxu0 %v575
          %v1594 = vpop.f32.mrf.mxu0
          %v1595 = vadd.f32 %v1538, %v1594
          %v1596 = vpop.f32.mrf.mxu0
          %v1597 = vpop.f32.mrf.mxu0
          %v1598 = vpop.f32.mrf.mxu0
          %1599 = vdwg.mxu0
          %v1600 = vmul.f32 %v1595, 0.5
          %v1601 = vmul.f32 %v1595, 0.70710677
          %vm1602 = vcmp.ge.f32.partialorder %v1601, 0.0
          %v1603 = vsel %vm1602, 1.0, -1.0
          %v1604 = vand.u32 2147483647, %v1601
          %v1605 = vmul.f32 %v1604, 0.3275911
          %v1606 = vadd.f32 %v1605, 1.0
          %v1607 = vrcp.pop %v1606
          %v1608 = vmul.f32 %v1607, 1.0614054
          %v1609 = vadd.f32 %v1608, -1.4531521
          %v1610 = vmul.f32 %v1609, %v1607
          %v1611 = vadd.f32 %v1610, 1.4214138
          %v1612 = vmul.f32 %v1611, %v1607
          %v1613 = vadd.f32 %v1612, -0.28449672
          %v1614 = vmul.f32 %v1613, %v1607
          %v1615 = vadd.f32 %v1614, 0.2548296
          %v1616 = vmul.f32 %v1615, %v1607
          %v1617 = vsub.f32 0.0, %v1604
          %v1618 = vmul.f32 %v1617, %v1604
          %v1619 = vmul.f32 %v1618, 1.442695
          %v1620 = vpow.pop %v1619
          %v1621 = vmul.f32 %v1616, %v1620
          %v1622 = vsub.f32 1.0, %v1621
          %v1623 = vmul.f32 %v1603, %v1622
          %v1624 = vadd.f32 %v1623, 1.0
          %v1625 = vmul.f32 %v1600, %v1624
          %v1626 = vpack.c.bf16 %v1625, %v1625
          %s1627 = scalar_lea.vmem [#allocation8], 256
          %v1628 = vld [vmem:[%s1627] sm:$0xff]
          %v1629 = vld [vmem:[%s1627 + $0x8] sm:$0xff]
          %v1630 = vld [vmem:[%s1627 + $0x10] sm:$0xff]
          %v1631 = vld [vmem:[%s1627 + $0x18] sm:$0xff]
          %v1632 = vld [vmem:[%s1627 + $0x20] sm:$0xff]
          %v1633 = vld [vmem:[%s1627 + $0x28] sm:$0xff]
          %v1634 = vld [vmem:[%s1627 + $0x30] sm:$0xff]
          %v1635 = vld [vmem:[%s1627 + $0x38] sm:$0xff]
          %v1644 = vunpack.c.l.b16 %v1628
          %v1645 = vunpack.c.h.b16 %v1628
          %v1646 = vunpack.c.l.b16 %v1629
          %v1647 = vunpack.c.h.b16 %v1629
          %v1648 = vunpack.c.l.b16 %v1630
          %v1649 = vunpack.c.h.b16 %v1630
          %v1650 = vunpack.c.l.b16 %v1631
          %v1651 = vunpack.c.h.b16 %v1631
          %v1652 = vunpack.c.l.b16 %v1632
          %v1653 = vunpack.c.h.b16 %v1632
          %v1654 = vunpack.c.l.b16 %v1633
          %v1655 = vunpack.c.h.b16 %v1633
          %v1656 = vunpack.c.l.b16 %v1634
          %v1657 = vunpack.c.h.b16 %v1634
          %v1658 = vunpack.c.l.b16 %v1635
          %v1659 = vunpack.c.h.b16 %v1635
          %v1660 = vpack.c.b16 %v1648, %v1644
          %v1661 = vpack.c.b16 %v1649, %v1645
          %v1662 = vpack.c.b16 %v1650, %v1646
          %v1663 = vpack.c.b16 %v1651, %v1647
          %v1664 = vpack.c.b16 %v1656, %v1652
          %v1665 = vpack.c.b16 %v1657, %v1653
          %v1666 = vpack.c.b16 %v1658, %v1654
          %v1667 = vpack.c.b16 %v1659, %v1655
          %v1677 = vsel %vm840, %v1626, 0
          %1679 = vmatprep.subr.bf16.mxu0 0
          %1680 = vmatpush1.bf16.msra.mxu0 0
          %1681 = vmatprep.subr.bf16.mxu0 0
          %1682 = vmatpush1.bf16.msra.mxu0 0
          %1683 = vmatprep.subr.bf16.mxu0 0
          %1684 = vmatpush1.bf16.msra.mxu0 0
          %1685 = vmatprep.subr.bf16.mxu0 0
          %1686 = vmatpush1.bf16.msra.mxu0 0
          %1687 = vmatprep.subr.bf16.mxu0 0
          %1688 = vmatpush1.bf16.msra.mxu0 0
          %1689 = vmatprep.subr.bf16.mxu0 0
          %1690 = vmatpush1.bf16.msra.mxu0 0
          %1691 = vmatprep.subr.bf16.mxu0 %v1665
          %1692 = vmatpush1.bf16.msra.mxu0 %v1664
          %1693 = vmatprep.subr.bf16.mxu0 %v1661
          %1694 = vmatpush1.bf16.msra.mxu0 %v1660
          %1695 = vmatprep.subr.bf16.mxu0 0
          %1696 = vmatpush2.bf16.msra.mxu0 0
          %1697 = vmatprep.subr.bf16.mxu0 0
          %1698 = vmatpush2.bf16.msra.mxu0 0
          %1699 = vmatprep.subr.bf16.mxu0 0
          %1700 = vmatpush2.bf16.msra.mxu0 0
          %1701 = vmatprep.subr.bf16.mxu0 0
          %1702 = vmatpush2.bf16.msra.mxu0 0
          %1703 = vmatprep.subr.bf16.mxu0 0
          %1704 = vmatpush2.bf16.msra.mxu0 0
          %1705 = vmatprep.subr.bf16.mxu0 0
          %1706 = vmatpush2.bf16.msra.mxu0 0
          %1707 = vmatprep.subr.bf16.mxu0 0
          %1708 = vmatpush2.bf16.msra.mxu0 0
          %1709 = vmatprep.subr.bf16.mxu0 0
          %1710 = vmatpush2.bf16.msra.mxu0 0
          %1711 = vmatprep.mubr.bf16.mxu0 0
          %1712 = vmatmul.mubr.bf16.gmra.mxu0 %v1677
          %v1713 = vpop.f32.mrf.mxu0
          %v1714 = vadd.f32 0.0, %v1713
          %v1715 = vpop.f32.mrf.mxu0
          %v1716 = vadd.f32 0.0, %v1715
          %v1717 = vpop.f32.mrf.mxu0
          %v1718 = vpop.f32.mrf.mxu0
          %1719 = vdwg.mxu0
          %1720 = vmatprep.subr.bf16.mxu0 0
          %1721 = vmatpush1.bf16.msra.mxu0 0
          %1722 = vmatprep.subr.bf16.mxu0 0
          %1723 = vmatpush1.bf16.msra.mxu0 0
          %1724 = vmatprep.subr.bf16.mxu0 0
          %1725 = vmatpush1.bf16.msra.mxu0 0
          %1726 = vmatprep.subr.bf16.mxu0 0
          %1727 = vmatpush1.bf16.msra.mxu0 0
          %1728 = vmatprep.subr.bf16.mxu0 0
          %1729 = vmatpush1.bf16.msra.mxu0 0
          %1730 = vmatprep.subr.bf16.mxu0 0
          %1731 = vmatpush1.bf16.msra.mxu0 0
          %1732 = vmatprep.subr.bf16.mxu0 %v1667
          %1733 = vmatpush1.bf16.msra.mxu0 %v1666
          %1734 = vmatprep.subr.bf16.mxu0 %v1663
          %1735 = vmatpush1.bf16.msra.mxu0 %v1662
          %1736 = vmatprep.subr.bf16.mxu0 0
          %1737 = vmatpush2.bf16.msra.mxu0 0
          %1738 = vmatprep.subr.bf16.mxu0 0
          %1739 = vmatpush2.bf16.msra.mxu0 0
          %1740 = vmatprep.subr.bf16.mxu0 0
          %1741 = vmatpush2.bf16.msra.mxu0 0
          %1742 = vmatprep.subr.bf16.mxu0 0
          %1743 = vmatpush2.bf16.msra.mxu0 0
          %1744 = vmatprep.subr.bf16.mxu0 0
          %1745 = vmatpush2.bf16.msra.mxu0 0
          %1746 = vmatprep.subr.bf16.mxu0 0
          %1747 = vmatpush2.bf16.msra.mxu0 0
          %1748 = vmatprep.subr.bf16.mxu0 0
          %1749 = vmatpush2.bf16.msra.mxu0 0
          %1750 = vmatprep.subr.bf16.mxu0 0
          %1751 = vmatpush2.bf16.msra.mxu0 0
          %1752 = vmatprep.mubr.bf16.mxu0 0
          %1753 = vmatmul.mubr.bf16.gmra.mxu0 %v1677
          %v1754 = vpop.f32.mrf.mxu0
          %v1755 = vadd.f32 0.0, %v1754
          %v1756 = vpop.f32.mrf.mxu0
          %v1757 = vadd.f32 0.0, %v1756
          %v1758 = vpop.f32.mrf.mxu0
          %v1759 = vpop.f32.mrf.mxu0
          %1760 = vdwg.mxu0
          %v1761 = vadd.f32 %v1523, %v1714
          %v1762 = vadd.f32 %v1524, %v1716
          %v1763 = vadd.f32 %v1525, %v1755
          %v1764 = vadd.f32 %v1526, %v1757
          %s1765 = scalar_lea.vmem [#allocation3], 160
          %v1766 = vld [vmem:[%s1765] sm:$0xff]
          %v1767 = vld [vmem:[%s1765 + $0x8] sm:$0xff]
          %v1768 = vld [vmem:[%s1765 + $0x10] sm:$0xff]
          %v1769 = vld [vmem:[%s1765 + $0x18] sm:$0xff]
          %s1770 = scalar_lea.vmem [#allocation6], 5
          %v1771 = vld [vmem:[%s1770] sm:$0x1]
          %v1773 = vlaneseq
          %v1774 = vshrl.u32 %v1773, 7
          %v1775 = vsub.s32 0, %v1774
          %v1776 = vrot.slane %v1771, %v1775
          %v1782 = vunpack.c.l.b16 %v1766
          %v1783 = vunpack.c.h.b16 %v1766
          %v1784 = vunpack.c.l.b16 %v1767
          %v1785 = vunpack.c.h.b16 %v1767
          %v1786 = vunpack.c.l.b16 %v1768
          %v1787 = vunpack.c.h.b16 %v1768
          %v1788 = vunpack.c.l.b16 %v1769
          %v1789 = vunpack.c.h.b16 %v1769
          %v1790 = vpack.c.b16 %v1784, %v1782
          %v1791 = vpack.c.b16 %v1785, %v1783
          %v1792 = vpack.c.b16 %v1788, %v1786
          %v1793 = vpack.c.b16 %v1789, %v1787
          %1798 = vmatprep.subr.bf16.mxu0 0
          %1799 = vmatpush1.bf16.xpose.msra.mxu0 0
          %1800 = vmatprep.subr.bf16.mxu0 0
          %1801 = vmatpush1.bf16.xpose.msra.mxu0 0
          %1802 = vmatprep.subr.bf16.mxu0 0
          %1803 = vmatpush1.bf16.xpose.msra.mxu0 0
          %1804 = vmatprep.subr.bf16.mxu0 0
          %1805 = vmatpush1.bf16.xpose.msra.mxu0 0
          %1806 = vmatprep.subr.bf16.mxu0 0
          %1807 = vmatpush1.bf16.xpose.msra.mxu0 0
          %1808 = vmatprep.subr.bf16.mxu0 0
          %1809 = vmatpush1.bf16.xpose.msra.mxu0 0
          %1810 = vmatprep.subr.bf16.mxu0 %v1793
          %1811 = vmatpush1.bf16.xpose.msra.mxu0 %v1792
          %1812 = vmatprep.subr.bf16.mxu0 %v1791
          %1813 = vmatpush1.bf16.xpose.msra.mxu0 %v1790
          %1814 = vmatprep.subr.bf16.mxu0 0
          %1815 = vmatpush2.bf16.xpose.msra.mxu0 0
          %1816 = vmatprep.subr.bf16.mxu0 0
          %1817 = vmatpush2.bf16.xpose.msra.mxu0 0
          %1818 = vmatprep.subr.bf16.mxu0 0
          %1819 = vmatpush2.bf16.xpose.msra.mxu0 0
          %1820 = vmatprep.subr.bf16.mxu0 0
          %1821 = vmatpush2.bf16.xpose.msra.mxu0 0
          %1822 = vmatprep.subr.bf16.mxu0 0
          %1823 = vmatpush2.bf16.xpose.msra.mxu0 0
          %1824 = vmatprep.subr.bf16.mxu0 0
          %1825 = vmatpush2.bf16.xpose.msra.mxu0 0
          %1826 = vmatprep.subr.bf16.mxu0 0
          %1827 = vmatpush2.bf16.xpose.msra.mxu0 0
          %1828 = vmatprep.subr.bf16.mxu0 0
          %1829 = vmatpush2.bf16.xpose.msra.mxu0 0
          %1830 = vmatprep.mubr.bf16.mxu0 %v578
          %1831 = vmatmul.mubr.bf16.gmra.mxu0 %v577
          %v1832 = vpop.f32.mrf.mxu0
          %v1833 = vadd.f32 %v1776, %v1832
          %v1834 = vpop.f32.mrf.mxu0
          %v1835 = vpop.f32.mrf.mxu0
          %v1836 = vpop.f32.mrf.mxu0
          %1837 = vdwg.mxu0
          %v1838 = vmul.f32 %v1833, 0.5
          %v1839 = vmul.f32 %v1833, 0.70710677
          %vm1840 = vcmp.ge.f32.partialorder %v1839, 0.0
          %v1841 = vsel %vm1840, 1.0, -1.0
          %v1842 = vand.u32 2147483647, %v1839
          %v1843 = vmul.f32 %v1842, 0.3275911
          %v1844 = vadd.f32 %v1843, 1.0
          %v1845 = vrcp.pop %v1844
          %v1846 = vmul.f32 %v1845, 1.0614054
          %v1847 = vadd.f32 %v1846, -1.4531521
          %v1848 = vmul.f32 %v1847, %v1845
          %v1849 = vadd.f32 %v1848, 1.4214138
          %v1850 = vmul.f32 %v1849, %v1845
          %v1851 = vadd.f32 %v1850, -0.28449672
          %v1852 = vmul.f32 %v1851, %v1845
          %v1853 = vadd.f32 %v1852, 0.2548296
          %v1854 = vmul.f32 %v1853, %v1845
          %v1855 = vsub.f32 0.0, %v1842
          %v1856 = vmul.f32 %v1855, %v1842
          %v1857 = vmul.f32 %v1856, 1.442695
          %v1858 = vpow.pop %v1857
          %v1859 = vmul.f32 %v1854, %v1858
          %v1860 = vsub.f32 1.0, %v1859
          %v1861 = vmul.f32 %v1841, %v1860
          %v1862 = vadd.f32 %v1861, 1.0
          %v1863 = vmul.f32 %v1838, %v1862
          %v1864 = vpack.c.bf16 %v1863, %v1863
          %s1865 = scalar_lea.vmem [#allocation8], 320
          %v1866 = vld [vmem:[%s1865] sm:$0xff]
          %v1867 = vld [vmem:[%s1865 + $0x8] sm:$0xff]
          %v1868 = vld [vmem:[%s1865 + $0x10] sm:$0xff]
          %v1869 = vld [vmem:[%s1865 + $0x18] sm:$0xff]
          %v1870 = vld [vmem:[%s1865 + $0x20] sm:$0xff]
          %v1871 = vld [vmem:[%s1865 + $0x28] sm:$0xff]
          %v1872 = vld [vmem:[%s1865 + $0x30] sm:$0xff]
          %v1873 = vld [vmem:[%s1865 + $0x38] sm:$0xff]
          %v1882 = vunpack.c.l.b16 %v1866
          %v1883 = vunpack.c.h.b16 %v1866
          %v1884 = vunpack.c.l.b16 %v1867
          %v1885 = vunpack.c.h.b16 %v1867
          %v1886 = vunpack.c.l.b16 %v1868
          %v1887 = vunpack.c.h.b16 %v1868
          %v1888 = vunpack.c.l.b16 %v1869
          %v1889 = vunpack.c.h.b16 %v1869
          %v1890 = vunpack.c.l.b16 %v1870
          %v1891 = vunpack.c.h.b16 %v1870
          %v1892 = vunpack.c.l.b16 %v1871
          %v1893 = vunpack.c.h.b16 %v1871
          %v1894 = vunpack.c.l.b16 %v1872
          %v1895 = vunpack.c.h.b16 %v1872
          %v1896 = vunpack.c.l.b16 %v1873
          %v1897 = vunpack.c.h.b16 %v1873
          %v1898 = vpack.c.b16 %v1886, %v1882
          %v1899 = vpack.c.b16 %v1887, %v1883
          %v1900 = vpack.c.b16 %v1888, %v1884
          %v1901 = vpack.c.b16 %v1889, %v1885
          %v1902 = vpack.c.b16 %v1894, %v1890
          %v1903 = vpack.c.b16 %v1895, %v1891
          %v1904 = vpack.c.b16 %v1896, %v1892
          %v1905 = vpack.c.b16 %v1897, %v1893
          %v1915 = vsel %vm840, %v1864, 0
          %1917 = vmatprep.subr.bf16.mxu0 0
          %1918 = vmatpush1.bf16.msra.mxu0 0
          %1919 = vmatprep.subr.bf16.mxu0 0
          %1920 = vmatpush1.bf16.msra.mxu0 0
          %1921 = vmatprep.subr.bf16.mxu0 0
          %1922 = vmatpush1.bf16.msra.mxu0 0
          %1923 = vmatprep.subr.bf16.mxu0 0
          %1924 = vmatpush1.bf16.msra.mxu0 0
          %1925 = vmatprep.subr.bf16.mxu0 0
          %1926 = vmatpush1.bf16.msra.mxu0 0
          %1927 = vmatprep.subr.bf16.mxu0 0
          %1928 = vmatpush1.bf16.msra.mxu0 0
          %1929 = vmatprep.subr.bf16.mxu0 %v1903
          %1930 = vmatpush1.bf16.msra.mxu0 %v1902
          %1931 = vmatprep.subr.bf16.mxu0 %v1899
          %1932 = vmatpush1.bf16.msra.mxu0 %v1898
          %1933 = vmatprep.subr.bf16.mxu0 0
          %1934 = vmatpush2.bf16.msra.mxu0 0
          %1935 = vmatprep.subr.bf16.mxu0 0
          %1936 = vmatpush2.bf16.msra.mxu0 0
          %1937 = vmatprep.subr.bf16.mxu0 0
          %1938 = vmatpush2.bf16.msra.mxu0 0
          %1939 = vmatprep.subr.bf16.mxu0 0
          %1940 = vmatpush2.bf16.msra.mxu0 0
          %1941 = vmatprep.subr.bf16.mxu0 0
          %1942 = vmatpush2.bf16.msra.mxu0 0
          %1943 = vmatprep.subr.bf16.mxu0 0
          %1944 = vmatpush2.bf16.msra.mxu0 0
          %1945 = vmatprep.subr.bf16.mxu0 0
          %1946 = vmatpush2.bf16.msra.mxu0 0
          %1947 = vmatprep.subr.bf16.mxu0 0
          %1948 = vmatpush2.bf16.msra.mxu0 0
          %1949 = vmatprep.mubr.bf16.mxu0 0
          %1950 = vmatmul.mubr.bf16.gmra.mxu0 %v1915
          %v1951 = vpop.f32.mrf.mxu0
          %v1952 = vadd.f32 0.0, %v1951
          %v1953 = vpop.f32.mrf.mxu0
          %v1954 = vadd.f32 0.0, %v1953
          %v1955 = vpop.f32.mrf.mxu0
          %v1956 = vpop.f32.mrf.mxu0
          %1957 = vdwg.mxu0
          %1958 = vmatprep.subr.bf16.mxu0 0
          %1959 = vmatpush1.bf16.msra.mxu0 0
          %1960 = vmatprep.subr.bf16.mxu0 0
          %1961 = vmatpush1.bf16.msra.mxu0 0
          %1962 = vmatprep.subr.bf16.mxu0 0
          %1963 = vmatpush1.bf16.msra.mxu0 0
          %1964 = vmatprep.subr.bf16.mxu0 0
          %1965 = vmatpush1.bf16.msra.mxu0 0
          %1966 = vmatprep.subr.bf16.mxu0 0
          %1967 = vmatpush1.bf16.msra.mxu0 0
          %1968 = vmatprep.subr.bf16.mxu0 0
          %1969 = vmatpush1.bf16.msra.mxu0 0
          %1970 = vmatprep.subr.bf16.mxu0 %v1905
          %1971 = vmatpush1.bf16.msra.mxu0 %v1904
          %1972 = vmatprep.subr.bf16.mxu0 %v1901
          %1973 = vmatpush1.bf16.msra.mxu0 %v1900
          %1974 = vmatprep.subr.bf16.mxu0 0
          %1975 = vmatpush2.bf16.msra.mxu0 0
          %1976 = vmatprep.subr.bf16.mxu0 0
          %1977 = vmatpush2.bf16.msra.mxu0 0
          %1978 = vmatprep.subr.bf16.mxu0 0
          %1979 = vmatpush2.bf16.msra.mxu0 0
          %1980 = vmatprep.subr.bf16.mxu0 0
          %1981 = vmatpush2.bf16.msra.mxu0 0
          %1982 = vmatprep.subr.bf16.mxu0 0
          %1983 = vmatpush2.bf16.msra.mxu0 0
          %1984 = vmatprep.subr.bf16.mxu0 0
          %1985 = vmatpush2.bf16.msra.mxu0 0
          %1986 = vmatprep.subr.bf16.mxu0 0
          %1987 = vmatpush2.bf16.msra.mxu0 0
          %1988 = vmatprep.subr.bf16.mxu0 0
          %1989 = vmatpush2.bf16.msra.mxu0 0
          %1990 = vmatprep.mubr.bf16.mxu0 0
          %1991 = vmatmul.mubr.bf16.gmra.mxu0 %v1915
          %v1992 = vpop.f32.mrf.mxu0
          %v1993 = vadd.f32 0.0, %v1992
          %v1994 = vpop.f32.mrf.mxu0
          %v1995 = vadd.f32 0.0, %v1994
          %v1996 = vpop.f32.mrf.mxu0
          %v1997 = vpop.f32.mrf.mxu0
          %1998 = vdwg.mxu0
          %v1999 = vadd.f32 %v1761, %v1952
          %v2000 = vadd.f32 %v1762, %v1954
          %v2001 = vadd.f32 %v1763, %v1993
          %v2002 = vadd.f32 %v1764, %v1995
          %s2003 = scalar_lea.vmem [#allocation3], 192
          %v2004 = vld [vmem:[%s2003] sm:$0xff]
          %v2005 = vld [vmem:[%s2003 + $0x8] sm:$0xff]
          %v2006 = vld [vmem:[%s2003 + $0x10] sm:$0xff]
          %v2007 = vld [vmem:[%s2003 + $0x18] sm:$0xff]
          %s2008 = scalar_lea.vmem [#allocation6], 6
          %v2009 = vld [vmem:[%s2008] sm:$0x1]
          %v2011 = vlaneseq
          %v2012 = vshrl.u32 %v2011, 7
          %v2013 = vsub.s32 0, %v2012
          %v2014 = vrot.slane %v2009, %v2013
          %v2020 = vunpack.c.l.b16 %v2004
          %v2021 = vunpack.c.h.b16 %v2004
          %v2022 = vunpack.c.l.b16 %v2005
          %v2023 = vunpack.c.h.b16 %v2005
          %v2024 = vunpack.c.l.b16 %v2006
          %v2025 = vunpack.c.h.b16 %v2006
          %v2026 = vunpack.c.l.b16 %v2007
          %v2027 = vunpack.c.h.b16 %v2007
          %v2028 = vpack.c.b16 %v2022, %v2020
          %v2029 = vpack.c.b16 %v2023, %v2021
          %v2030 = vpack.c.b16 %v2026, %v2024
          %v2031 = vpack.c.b16 %v2027, %v2025
          %2036 = vmatprep.subr.bf16.mxu0 0
          %2037 = vmatpush1.bf16.xpose.msra.mxu0 0
          %2038 = vmatprep.subr.bf16.mxu0 0
          %2039 = vmatpush1.bf16.xpose.msra.mxu0 0
          %2040 = vmatprep.subr.bf16.mxu0 0
          %2041 = vmatpush1.bf16.xpose.msra.mxu0 0
          %2042 = vmatprep.subr.bf16.mxu0 0
          %2043 = vmatpush1.bf16.xpose.msra.mxu0 0
          %2044 = vmatprep.subr.bf16.mxu0 0
          %2045 = vmatpush1.bf16.xpose.msra.mxu0 0
          %2046 = vmatprep.subr.bf16.mxu0 0
          %2047 = vmatpush1.bf16.xpose.msra.mxu0 0
          %2048 = vmatprep.subr.bf16.mxu0 %v2031
          %2049 = vmatpush1.bf16.xpose.msra.mxu0 %v2030
          %2050 = vmatprep.subr.bf16.mxu0 %v2029
          %2051 = vmatpush1.bf16.xpose.msra.mxu0 %v2028
          %2052 = vmatprep.subr.bf16.mxu0 0
          %2053 = vmatpush2.bf16.xpose.msra.mxu0 0
          %2054 = vmatprep.subr.bf16.mxu0 0
          %2055 = vmatpush2.bf16.xpose.msra.mxu0 0
          %2056 = vmatprep.subr.bf16.mxu0 0
          %2057 = vmatpush2.bf16.xpose.msra.mxu0 0
          %2058 = vmatprep.subr.bf16.mxu0 0
          %2059 = vmatpush2.bf16.xpose.msra.mxu0 0
          %2060 = vmatprep.subr.bf16.mxu0 0
          %2061 = vmatpush2.bf16.xpose.msra.mxu0 0
          %2062 = vmatprep.subr.bf16.mxu0 0
          %2063 = vmatpush2.bf16.xpose.msra.mxu0 0
          %2064 = vmatprep.subr.bf16.mxu0 0
          %2065 = vmatpush2.bf16.xpose.msra.mxu0 0
          %2066 = vmatprep.subr.bf16.mxu0 0
          %2067 = vmatpush2.bf16.xpose.msra.mxu0 0
          %2068 = vmatprep.mubr.bf16.mxu0 %v580
          %2069 = vmatmul.mubr.bf16.gmra.mxu0 %v579
          %v2070 = vpop.f32.mrf.mxu0
          %v2071 = vadd.f32 %v2014, %v2070
          %v2072 = vpop.f32.mrf.mxu0
          %v2073 = vpop.f32.mrf.mxu0
          %v2074 = vpop.f32.mrf.mxu0
          %2075 = vdwg.mxu0
          %v2076 = vmul.f32 %v2071, 0.5
          %v2077 = vmul.f32 %v2071, 0.70710677
          %vm2078 = vcmp.ge.f32.partialorder %v2077, 0.0
          %v2079 = vsel %vm2078, 1.0, -1.0
          %v2080 = vand.u32 2147483647, %v2077
          %v2081 = vmul.f32 %v2080, 0.3275911
          %v2082 = vadd.f32 %v2081, 1.0
          %v2083 = vrcp.pop %v2082
          %v2084 = vmul.f32 %v2083, 1.0614054
          %v2085 = vadd.f32 %v2084, -1.4531521
          %v2086 = vmul.f32 %v2085, %v2083
          %v2087 = vadd.f32 %v2086, 1.4214138
          %v2088 = vmul.f32 %v2087, %v2083
          %v2089 = vadd.f32 %v2088, -0.28449672
          %v2090 = vmul.f32 %v2089, %v2083
          %v2091 = vadd.f32 %v2090, 0.2548296
          %v2092 = vmul.f32 %v2091, %v2083
          %v2093 = vsub.f32 0.0, %v2080
          %v2094 = vmul.f32 %v2093, %v2080
          %v2095 = vmul.f32 %v2094, 1.442695
          %v2096 = vpow.pop %v2095
          %v2097 = vmul.f32 %v2092, %v2096
          %v2098 = vsub.f32 1.0, %v2097
          %v2099 = vmul.f32 %v2079, %v2098
          %v2100 = vadd.f32 %v2099, 1.0
          %v2101 = vmul.f32 %v2076, %v2100
          %v2102 = vpack.c.bf16 %v2101, %v2101
          %s2103 = scalar_lea.vmem [#allocation8], 384
          %v2104 = vld [vmem:[%s2103] sm:$0xff]
          %v2105 = vld [vmem:[%s2103 + $0x8] sm:$0xff]
          %v2106 = vld [vmem:[%s2103 + $0x10] sm:$0xff]
          %v2107 = vld [vmem:[%s2103 + $0x18] sm:$0xff]
          %v2108 = vld [vmem:[%s2103 + $0x20] sm:$0xff]
          %v2109 = vld [vmem:[%s2103 + $0x28] sm:$0xff]
          %v2110 = vld [vmem:[%s2103 + $0x30] sm:$0xff]
          %v2111 = vld [vmem:[%s2103 + $0x38] sm:$0xff]
          %v2120 = vunpack.c.l.b16 %v2104
          %v2121 = vunpack.c.h.b16 %v2104
          %v2122 = vunpack.c.l.b16 %v2105
          %v2123 = vunpack.c.h.b16 %v2105
          %v2124 = vunpack.c.l.b16 %v2106
          %v2125 = vunpack.c.h.b16 %v2106
          %v2126 = vunpack.c.l.b16 %v2107
          %v2127 = vunpack.c.h.b16 %v2107
          %v2128 = vunpack.c.l.b16 %v2108
          %v2129 = vunpack.c.h.b16 %v2108
          %v2130 = vunpack.c.l.b16 %v2109
          %v2131 = vunpack.c.h.b16 %v2109
          %v2132 = vunpack.c.l.b16 %v2110
          %v2133 = vunpack.c.h.b16 %v2110
          %v2134 = vunpack.c.l.b16 %v2111
          %v2135 = vunpack.c.h.b16 %v2111
          %v2136 = vpack.c.b16 %v2124, %v2120
          %v2137 = vpack.c.b16 %v2125, %v2121
          %v2138 = vpack.c.b16 %v2126, %v2122
          %v2139 = vpack.c.b16 %v2127, %v2123
          %v2140 = vpack.c.b16 %v2132, %v2128
          %v2141 = vpack.c.b16 %v2133, %v2129
          %v2142 = vpack.c.b16 %v2134, %v2130
          %v2143 = vpack.c.b16 %v2135, %v2131
          %v2153 = vsel %vm840, %v2102, 0
          %2155 = vmatprep.subr.bf16.mxu0 0
          %2156 = vmatpush1.bf16.msra.mxu0 0
          %2157 = vmatprep.subr.bf16.mxu0 0
          %2158 = vmatpush1.bf16.msra.mxu0 0
          %2159 = vmatprep.subr.bf16.mxu0 0
          %2160 = vmatpush1.bf16.msra.mxu0 0
          %2161 = vmatprep.subr.bf16.mxu0 0
          %2162 = vmatpush1.bf16.msra.mxu0 0
          %2163 = vmatprep.subr.bf16.mxu0 0
          %2164 = vmatpush1.bf16.msra.mxu0 0
          %2165 = vmatprep.subr.bf16.mxu0 0
          %2166 = vmatpush1.bf16.msra.mxu0 0
          %2167 = vmatprep.subr.bf16.mxu0 %v2141
          %2168 = vmatpush1.bf16.msra.mxu0 %v2140
          %2169 = vmatprep.subr.bf16.mxu0 %v2137
          %2170 = vmatpush1.bf16.msra.mxu0 %v2136
          %2171 = vmatprep.subr.bf16.mxu0 0
          %2172 = vmatpush2.bf16.msra.mxu0 0
          %2173 = vmatprep.subr.bf16.mxu0 0
          %2174 = vmatpush2.bf16.msra.mxu0 0
          %2175 = vmatprep.subr.bf16.mxu0 0
          %2176 = vmatpush2.bf16.msra.mxu0 0
          %2177 = vmatprep.subr.bf16.mxu0 0
          %2178 = vmatpush2.bf16.msra.mxu0 0
          %2179 = vmatprep.subr.bf16.mxu0 0
          %2180 = vmatpush2.bf16.msra.mxu0 0
          %2181 = vmatprep.subr.bf16.mxu0 0
          %2182 = vmatpush2.bf16.msra.mxu0 0
          %2183 = vmatprep.subr.bf16.mxu0 0
          %2184 = vmatpush2.bf16.msra.mxu0 0
          %2185 = vmatprep.subr.bf16.mxu0 0
          %2186 = vmatpush2.bf16.msra.mxu0 0
          %2187 = vmatprep.mubr.bf16.mxu0 0
          %2188 = vmatmul.mubr.bf16.gmra.mxu0 %v2153
          %v2189 = vpop.f32.mrf.mxu0
          %v2190 = vadd.f32 0.0, %v2189
          %v2191 = vpop.f32.mrf.mxu0
          %v2192 = vadd.f32 0.0, %v2191
          %v2193 = vpop.f32.mrf.mxu0
          %v2194 = vpop.f32.mrf.mxu0
          %2195 = vdwg.mxu0
          %2196 = vmatprep.subr.bf16.mxu0 0
          %2197 = vmatpush1.bf16.msra.mxu0 0
          %2198 = vmatprep.subr.bf16.mxu0 0
          %2199 = vmatpush1.bf16.msra.mxu0 0
          %2200 = vmatprep.subr.bf16.mxu0 0
          %2201 = vmatpush1.bf16.msra.mxu0 0
          %2202 = vmatprep.subr.bf16.mxu0 0
          %2203 = vmatpush1.bf16.msra.mxu0 0
          %2204 = vmatprep.subr.bf16.mxu0 0
          %2205 = vmatpush1.bf16.msra.mxu0 0
          %2206 = vmatprep.subr.bf16.mxu0 0
          %2207 = vmatpush1.bf16.msra.mxu0 0
          %2208 = vmatprep.subr.bf16.mxu0 %v2143
          %2209 = vmatpush1.bf16.msra.mxu0 %v2142
          %2210 = vmatprep.subr.bf16.mxu0 %v2139
          %2211 = vmatpush1.bf16.msra.mxu0 %v2138
          %2212 = vmatprep.subr.bf16.mxu0 0
          %2213 = vmatpush2.bf16.msra.mxu0 0
          %2214 = vmatprep.subr.bf16.mxu0 0
          %2215 = vmatpush2.bf16.msra.mxu0 0
          %2216 = vmatprep.subr.bf16.mxu0 0
          %2217 = vmatpush2.bf16.msra.mxu0 0
          %2218 = vmatprep.subr.bf16.mxu0 0
          %2219 = vmatpush2.bf16.msra.mxu0 0
          %2220 = vmatprep.subr.bf16.mxu0 0
          %2221 = vmatpush2.bf16.msra.mxu0 0
          %2222 = vmatprep.subr.bf16.mxu0 0
          %2223 = vmatpush2.bf16.msra.mxu0 0
          %2224 = vmatprep.subr.bf16.mxu0 0
          %2225 = vmatpush2.bf16.msra.mxu0 0
          %2226 = vmatprep.subr.bf16.mxu0 0
          %2227 = vmatpush2.bf16.msra.mxu0 0
          %2228 = vmatprep.mubr.bf16.mxu0 0
          %2229 = vmatmul.mubr.bf16.gmra.mxu0 %v2153
          %v2230 = vpop.f32.mrf.mxu0
          %v2231 = vadd.f32 0.0, %v2230
          %v2232 = vpop.f32.mrf.mxu0
          %v2233 = vadd.f32 0.0, %v2232
          %v2234 = vpop.f32.mrf.mxu0
          %v2235 = vpop.f32.mrf.mxu0
          %2236 = vdwg.mxu0
          %v2237 = vadd.f32 %v1999, %v2190
          %v2238 = vadd.f32 %v2000, %v2192
          %v2239 = vadd.f32 %v2001, %v2231
          %v2240 = vadd.f32 %v2002, %v2233
          %s2241 = scalar_lea.vmem [#allocation3], 224
          %v2242 = vld [vmem:[%s2241] sm:$0xff]
          %v2243 = vld [vmem:[%s2241 + $0x8] sm:$0xff]
          %v2244 = vld [vmem:[%s2241 + $0x10] sm:$0xff]
          %v2245 = vld [vmem:[%s2241 + $0x18] sm:$0xff]
          %s2246 = scalar_lea.vmem [#allocation6], 7
          %v2247 = vld [vmem:[%s2246] sm:$0x1]
          %v2249 = vlaneseq
          %v2250 = vshrl.u32 %v2249, 7
          %v2251 = vsub.s32 0, %v2250
          %v2252 = vrot.slane %v2247, %v2251
          %v2258 = vunpack.c.l.b16 %v2242
          %v2259 = vunpack.c.h.b16 %v2242
          %v2260 = vunpack.c.l.b16 %v2243
          %v2261 = vunpack.c.h.b16 %v2243
          %v2262 = vunpack.c.l.b16 %v2244
          %v2263 = vunpack.c.h.b16 %v2244
          %v2264 = vunpack.c.l.b16 %v2245
          %v2265 = vunpack.c.h.b16 %v2245
          %v2266 = vpack.c.b16 %v2260, %v2258
          %v2267 = vpack.c.b16 %v2261, %v2259
          %v2268 = vpack.c.b16 %v2264, %v2262
          %v2269 = vpack.c.b16 %v2265, %v2263
          %2274 = vmatprep.subr.bf16.mxu0 0
          %2275 = vmatpush1.bf16.xpose.msra.mxu0 0
          %2276 = vmatprep.subr.bf16.mxu0 0
          %2277 = vmatpush1.bf16.xpose.msra.mxu0 0
          %2278 = vmatprep.subr.bf16.mxu0 0
          %2279 = vmatpush1.bf16.xpose.msra.mxu0 0
          %2280 = vmatprep.subr.bf16.mxu0 0
          %2281 = vmatpush1.bf16.xpose.msra.mxu0 0
          %2282 = vmatprep.subr.bf16.mxu0 0
          %2283 = vmatpush1.bf16.xpose.msra.mxu0 0
          %2284 = vmatprep.subr.bf16.mxu0 0
          %2285 = vmatpush1.bf16.xpose.msra.mxu0 0
          %2286 = vmatprep.subr.bf16.mxu0 %v2269
          %2287 = vmatpush1.bf16.xpose.msra.mxu0 %v2268
          %2288 = vmatprep.subr.bf16.mxu0 %v2267
          %2289 = vmatpush1.bf16.xpose.msra.mxu0 %v2266
          %2290 = vmatprep.subr.bf16.mxu0 0
          %2291 = vmatpush2.bf16.xpose.msra.mxu0 0
          %2292 = vmatprep.subr.bf16.mxu0 0
          %2293 = vmatpush2.bf16.xpose.msra.mxu0 0
          %2294 = vmatprep.subr.bf16.mxu0 0
          %2295 = vmatpush2.bf16.xpose.msra.mxu0 0
          %2296 = vmatprep.subr.bf16.mxu0 0
          %2297 = vmatpush2.bf16.xpose.msra.mxu0 0
          %2298 = vmatprep.subr.bf16.mxu0 0
          %2299 = vmatpush2.bf16.xpose.msra.mxu0 0
          %2300 = vmatprep.subr.bf16.mxu0 0
          %2301 = vmatpush2.bf16.xpose.msra.mxu0 0
          %2302 = vmatprep.subr.bf16.mxu0 0
          %2303 = vmatpush2.bf16.xpose.msra.mxu0 0
          %2304 = vmatprep.subr.bf16.mxu0 0
          %2305 = vmatpush2.bf16.xpose.msra.mxu0 0
          %2306 = vmatprep.mubr.bf16.mxu0 %v582
          %2307 = vmatmul.mubr.bf16.gmra.mxu0 %v581
          %v2308 = vpop.f32.mrf.mxu0
          %v2309 = vadd.f32 %v2252, %v2308
          %v2310 = vpop.f32.mrf.mxu0
          %v2311 = vpop.f32.mrf.mxu0
          %v2312 = vpop.f32.mrf.mxu0
          %2313 = vdwg.mxu0
          %v2314 = vmul.f32 %v2309, 0.5
          %v2315 = vmul.f32 %v2309, 0.70710677
          %vm2316 = vcmp.ge.f32.partialorder %v2315, 0.0
          %v2317 = vsel %vm2316, 1.0, -1.0
          %v2318 = vand.u32 2147483647, %v2315
          %v2319 = vmul.f32 %v2318, 0.3275911
          %v2320 = vadd.f32 %v2319, 1.0
          %v2321 = vrcp.pop %v2320
          %v2322 = vmul.f32 %v2321, 1.0614054
          %v2323 = vadd.f32 %v2322, -1.4531521
          %v2324 = vmul.f32 %v2323, %v2321
          %v2325 = vadd.f32 %v2324, 1.4214138
          %v2326 = vmul.f32 %v2325, %v2321
          %v2327 = vadd.f32 %v2326, -0.28449672
          %v2328 = vmul.f32 %v2327, %v2321
          %v2329 = vadd.f32 %v2328, 0.2548296
          %v2330 = vmul.f32 %v2329, %v2321
          %v2331 = vsub.f32 0.0, %v2318
          %v2332 = vmul.f32 %v2331, %v2318
          %v2333 = vmul.f32 %v2332, 1.442695
          %v2334 = vpow.pop %v2333
          %v2335 = vmul.f32 %v2330, %v2334
          %v2336 = vsub.f32 1.0, %v2335
          %v2337 = vmul.f32 %v2317, %v2336
          %v2338 = vadd.f32 %v2337, 1.0
          %v2339 = vmul.f32 %v2314, %v2338
          %v2340 = vpack.c.bf16 %v2339, %v2339
          %s2341 = scalar_lea.vmem [#allocation8], 448
          %v2342 = vld [vmem:[%s2341] sm:$0xff]
          %v2343 = vld [vmem:[%s2341 + $0x8] sm:$0xff]
          %v2344 = vld [vmem:[%s2341 + $0x10] sm:$0xff]
          %v2345 = vld [vmem:[%s2341 + $0x18] sm:$0xff]
          %v2346 = vld [vmem:[%s2341 + $0x20] sm:$0xff]
          %v2347 = vld [vmem:[%s2341 + $0x28] sm:$0xff]
          %v2348 = vld [vmem:[%s2341 + $0x30] sm:$0xff]
          %v2349 = vld [vmem:[%s2341 + $0x38] sm:$0xff]
          %v2358 = vunpack.c.l.b16 %v2342
          %v2359 = vunpack.c.h.b16 %v2342
          %v2360 = vunpack.c.l.b16 %v2343
          %v2361 = vunpack.c.h.b16 %v2343
          %v2362 = vunpack.c.l.b16 %v2344
          %v2363 = vunpack.c.h.b16 %v2344
          %v2364 = vunpack.c.l.b16 %v2345
          %v2365 = vunpack.c.h.b16 %v2345
          %v2366 = vunpack.c.l.b16 %v2346
          %v2367 = vunpack.c.h.b16 %v2346
          %v2368 = vunpack.c.l.b16 %v2347
          %v2369 = vunpack.c.h.b16 %v2347
          %v2370 = vunpack.c.l.b16 %v2348
          %v2371 = vunpack.c.h.b16 %v2348
          %v2372 = vunpack.c.l.b16 %v2349
          %v2373 = vunpack.c.h.b16 %v2349
          %v2374 = vpack.c.b16 %v2362, %v2358
          %v2375 = vpack.c.b16 %v2363, %v2359
          %v2376 = vpack.c.b16 %v2364, %v2360
          %v2377 = vpack.c.b16 %v2365, %v2361
          %v2378 = vpack.c.b16 %v2370, %v2366
          %v2379 = vpack.c.b16 %v2371, %v2367
          %v2380 = vpack.c.b16 %v2372, %v2368
          %v2381 = vpack.c.b16 %v2373, %v2369
          %v2391 = vsel %vm840, %v2340, 0
          %2393 = vmatprep.subr.bf16.mxu0 0
          %2394 = vmatpush1.bf16.msra.mxu0 0
          %2395 = vmatprep.subr.bf16.mxu0 0
          %2396 = vmatpush1.bf16.msra.mxu0 0
          %2397 = vmatprep.subr.bf16.mxu0 0
          %2398 = vmatpush1.bf16.msra.mxu0 0
          %2399 = vmatprep.subr.bf16.mxu0 0
          %2400 = vmatpush1.bf16.msra.mxu0 0
          %2401 = vmatprep.subr.bf16.mxu0 0
          %2402 = vmatpush1.bf16.msra.mxu0 0
          %2403 = vmatprep.subr.bf16.mxu0 0
          %2404 = vmatpush1.bf16.msra.mxu0 0
          %2405 = vmatprep.subr.bf16.mxu0 %v2379
          %2406 = vmatpush1.bf16.msra.mxu0 %v2378
          %2407 = vmatprep.subr.bf16.mxu0 %v2375
          %2408 = vmatpush1.bf16.msra.mxu0 %v2374
          %2409 = vmatprep.subr.bf16.mxu0 0
          %2410 = vmatpush2.bf16.msra.mxu0 0
          %2411 = vmatprep.subr.bf16.mxu0 0
          %2412 = vmatpush2.bf16.msra.mxu0 0
          %2413 = vmatprep.subr.bf16.mxu0 0
          %2414 = vmatpush2.bf16.msra.mxu0 0
          %2415 = vmatprep.subr.bf16.mxu0 0
          %2416 = vmatpush2.bf16.msra.mxu0 0
          %2417 = vmatprep.subr.bf16.mxu0 0
          %2418 = vmatpush2.bf16.msra.mxu0 0
          %2419 = vmatprep.subr.bf16.mxu0 0
          %2420 = vmatpush2.bf16.msra.mxu0 0
          %2421 = vmatprep.subr.bf16.mxu0 0
          %2422 = vmatpush2.bf16.msra.mxu0 0
          %2423 = vmatprep.subr.bf16.mxu0 0
          %2424 = vmatpush2.bf16.msra.mxu0 0
          %2425 = vmatprep.mubr.bf16.mxu0 0
          %2426 = vmatmul.mubr.bf16.gmra.mxu0 %v2391
          %v2427 = vpop.f32.mrf.mxu0
          %v2428 = vadd.f32 0.0, %v2427
          %v2429 = vpop.f32.mrf.mxu0
          %v2430 = vadd.f32 0.0, %v2429
          %v2431 = vpop.f32.mrf.mxu0
          %v2432 = vpop.f32.mrf.mxu0
          %2433 = vdwg.mxu0
          %2434 = vmatprep.subr.bf16.mxu0 0
          %2435 = vmatpush1.bf16.msra.mxu0 0
          %2436 = vmatprep.subr.bf16.mxu0 0
          %2437 = vmatpush1.bf16.msra.mxu0 0
          %2438 = vmatprep.subr.bf16.mxu0 0
          %2439 = vmatpush1.bf16.msra.mxu0 0
          %2440 = vmatprep.subr.bf16.mxu0 0
          %2441 = vmatpush1.bf16.msra.mxu0 0
          %2442 = vmatprep.subr.bf16.mxu0 0
          %2443 = vmatpush1.bf16.msra.mxu0 0
          %2444 = vmatprep.subr.bf16.mxu0 0
          %2445 = vmatpush1.bf16.msra.mxu0 0
          %2446 = vmatprep.subr.bf16.mxu0 %v2381
          %2447 = vmatpush1.bf16.msra.mxu0 %v2380
          %2448 = vmatprep.subr.bf16.mxu0 %v2377
          %2449 = vmatpush1.bf16.msra.mxu0 %v2376
          %2450 = vmatprep.subr.bf16.mxu0 0
          %2451 = vmatpush2.bf16.msra.mxu0 0
          %2452 = vmatprep.subr.bf16.mxu0 0
          %2453 = vmatpush2.bf16.msra.mxu0 0
          %2454 = vmatprep.subr.bf16.mxu0 0
          %2455 = vmatpush2.bf16.msra.mxu0 0
          %2456 = vmatprep.subr.bf16.mxu0 0
          %2457 = vmatpush2.bf16.msra.mxu0 0
          %2458 = vmatprep.subr.bf16.mxu0 0
          %2459 = vmatpush2.bf16.msra.mxu0 0
          %2460 = vmatprep.subr.bf16.mxu0 0
          %2461 = vmatpush2.bf16.msra.mxu0 0
          %2462 = vmatprep.subr.bf16.mxu0 0
          %2463 = vmatpush2.bf16.msra.mxu0 0
          %2464 = vmatprep.subr.bf16.mxu0 0
          %2465 = vmatpush2.bf16.msra.mxu0 0
          %2466 = vmatprep.mubr.bf16.mxu0 0
          %2467 = vmatmul.mubr.bf16.gmra.mxu0 %v2391
          %v2468 = vpop.f32.mrf.mxu0
          %v2469 = vadd.f32 0.0, %v2468
          %v2470 = vpop.f32.mrf.mxu0
          %v2471 = vadd.f32 0.0, %v2470
          %v2472 = vpop.f32.mrf.mxu0
          %v2473 = vpop.f32.mrf.mxu0
          %2474 = vdwg.mxu0
          %v2475 = vadd.f32 %v2237, %v2428
          %v2476 = vadd.f32 %v2238, %v2430
          %v2477 = vadd.f32 %v2239, %v2469
          %v2478 = vadd.f32 %v2240, %v2471
          %s2479 = scalar_lea.vmem [#allocation3], 256
          %v2480 = vld [vmem:[%s2479] sm:$0xff]
          %v2481 = vld [vmem:[%s2479 + $0x8] sm:$0xff]
          %v2482 = vld [vmem:[%s2479 + $0x10] sm:$0xff]
          %v2483 = vld [vmem:[%s2479 + $0x18] sm:$0xff]
          %s2484 = scalar_lea.vmem [#allocation6], 8
          %v2485 = vld [vmem:[%s2484] sm:$0x1]
          %v2487 = vlaneseq
          %v2488 = vshrl.u32 %v2487, 7
          %v2489 = vsub.s32 0, %v2488
          %v2490 = vrot.slane %v2485, %v2489
          %v2496 = vunpack.c.l.b16 %v2480
          %v2497 = vunpack.c.h.b16 %v2480
          %v2498 = vunpack.c.l.b16 %v2481
          %v2499 = vunpack.c.h.b16 %v2481
          %v2500 = vunpack.c.l.b16 %v2482
          %v2501 = vunpack.c.h.b16 %v2482
          %v2502 = vunpack.c.l.b16 %v2483
          %v2503 = vunpack.c.h.b16 %v2483
          %v2504 = vpack.c.b16 %v2498, %v2496
          %v2505 = vpack.c.b16 %v2499, %v2497
          %v2506 = vpack.c.b16 %v2502, %v2500
          %v2507 = vpack.c.b16 %v2503, %v2501
          %2512 = vmatprep.subr.bf16.mxu0 0
          %2513 = vmatpush1.bf16.xpose.msra.mxu0 0
          %2514 = vmatprep.subr.bf16.mxu0 0
          %2515 = vmatpush1.bf16.xpose.msra.mxu0 0
          %2516 = vmatprep.subr.bf16.mxu0 0
          %2517 = vmatpush1.bf16.xpose.msra.mxu0 0
          %2518 = vmatprep.subr.bf16.mxu0 0
          %2519 = vmatpush1.bf16.xpose.msra.mxu0 0
          %2520 = vmatprep.subr.bf16.mxu0 0
          %2521 = vmatpush1.bf16.xpose.msra.mxu0 0
          %2522 = vmatprep.subr.bf16.mxu0 0
          %2523 = vmatpush1.bf16.xpose.msra.mxu0 0
          %2524 = vmatprep.subr.bf16.mxu0 %v2507
          %2525 = vmatpush1.bf16.xpose.msra.mxu0 %v2506
          %2526 = vmatprep.subr.bf16.mxu0 %v2505
          %2527 = vmatpush1.bf16.xpose.msra.mxu0 %v2504
          %2528 = vmatprep.subr.bf16.mxu0 0
          %2529 = vmatpush2.bf16.xpose.msra.mxu0 0
          %2530 = vmatprep.subr.bf16.mxu0 0
          %2531 = vmatpush2.bf16.xpose.msra.mxu0 0
          %2532 = vmatprep.subr.bf16.mxu0 0
          %2533 = vmatpush2.bf16.xpose.msra.mxu0 0
          %2534 = vmatprep.subr.bf16.mxu0 0
          %2535 = vmatpush2.bf16.xpose.msra.mxu0 0
          %2536 = vmatprep.subr.bf16.mxu0 0
          %2537 = vmatpush2.bf16.xpose.msra.mxu0 0
          %2538 = vmatprep.subr.bf16.mxu0 0
          %2539 = vmatpush2.bf16.xpose.msra.mxu0 0
          %2540 = vmatprep.subr.bf16.mxu0 0
          %2541 = vmatpush2.bf16.xpose.msra.mxu0 0
          %2542 = vmatprep.subr.bf16.mxu0 0
          %2543 = vmatpush2.bf16.xpose.msra.mxu0 0
          %2544 = vmatprep.mubr.bf16.mxu0 %v584
          %2545 = vmatmul.mubr.bf16.gmra.mxu0 %v583
          %v2546 = vpop.f32.mrf.mxu0
          %v2547 = vadd.f32 %v2490, %v2546
          %v2548 = vpop.f32.mrf.mxu0
          %v2549 = vpop.f32.mrf.mxu0
          %v2550 = vpop.f32.mrf.mxu0
          %2551 = vdwg.mxu0
          %v2552 = vmul.f32 %v2547, 0.5
          %v2553 = vmul.f32 %v2547, 0.70710677
          %vm2554 = vcmp.ge.f32.partialorder %v2553, 0.0
          %v2555 = vsel %vm2554, 1.0, -1.0
          %v2556 = vand.u32 2147483647, %v2553
          %v2557 = vmul.f32 %v2556, 0.3275911
          %v2558 = vadd.f32 %v2557, 1.0
          %v2559 = vrcp.pop %v2558
          %v2560 = vmul.f32 %v2559, 1.0614054
          %v2561 = vadd.f32 %v2560, -1.4531521
          %v2562 = vmul.f32 %v2561, %v2559
          %v2563 = vadd.f32 %v2562, 1.4214138
          %v2564 = vmul.f32 %v2563, %v2559
          %v2565 = vadd.f32 %v2564, -0.28449672
          %v2566 = vmul.f32 %v2565, %v2559
          %v2567 = vadd.f32 %v2566, 0.2548296
          %v2568 = vmul.f32 %v2567, %v2559
          %v2569 = vsub.f32 0.0, %v2556
          %v2570 = vmul.f32 %v2569, %v2556
          %v2571 = vmul.f32 %v2570, 1.442695
          %v2572 = vpow.pop %v2571
          %v2573 = vmul.f32 %v2568, %v2572
          %v2574 = vsub.f32 1.0, %v2573
          %v2575 = vmul.f32 %v2555, %v2574
          %v2576 = vadd.f32 %v2575, 1.0
          %v2577 = vmul.f32 %v2552, %v2576
          %v2578 = vpack.c.bf16 %v2577, %v2577
          %s2579 = scalar_lea.vmem [#allocation8], 512
          %v2580 = vld [vmem:[%s2579] sm:$0xff]
          %v2581 = vld [vmem:[%s2579 + $0x8] sm:$0xff]
          %v2582 = vld [vmem:[%s2579 + $0x10] sm:$0xff]
          %v2583 = vld [vmem:[%s2579 + $0x18] sm:$0xff]
          %v2584 = vld [vmem:[%s2579 + $0x20] sm:$0xff]
          %v2585 = vld [vmem:[%s2579 + $0x28] sm:$0xff]
          %v2586 = vld [vmem:[%s2579 + $0x30] sm:$0xff]
          %v2587 = vld [vmem:[%s2579 + $0x38] sm:$0xff]
          %v2596 = vunpack.c.l.b16 %v2580
          %v2597 = vunpack.c.h.b16 %v2580
          %v2598 = vunpack.c.l.b16 %v2581
          %v2599 = vunpack.c.h.b16 %v2581
          %v2600 = vunpack.c.l.b16 %v2582
          %v2601 = vunpack.c.h.b16 %v2582
          %v2602 = vunpack.c.l.b16 %v2583
          %v2603 = vunpack.c.h.b16 %v2583
          %v2604 = vunpack.c.l.b16 %v2584
          %v2605 = vunpack.c.h.b16 %v2584
          %v2606 = vunpack.c.l.b16 %v2585
          %v2607 = vunpack.c.h.b16 %v2585
          %v2608 = vunpack.c.l.b16 %v2586
          %v2609 = vunpack.c.h.b16 %v2586
          %v2610 = vunpack.c.l.b16 %v2587
          %v2611 = vunpack.c.h.b16 %v2587
          %v2612 = vpack.c.b16 %v2600, %v2596
          %v2613 = vpack.c.b16 %v2601, %v2597
          %v2614 = vpack.c.b16 %v2602, %v2598
          %v2615 = vpack.c.b16 %v2603, %v2599
          %v2616 = vpack.c.b16 %v2608, %v2604
          %v2617 = vpack.c.b16 %v2609, %v2605
          %v2618 = vpack.c.b16 %v2610, %v2606
          %v2619 = vpack.c.b16 %v2611, %v2607
          %v2629 = vsel %vm840, %v2578, 0
          %2631 = vmatprep.subr.bf16.mxu0 0
          %2632 = vmatpush1.bf16.msra.mxu0 0
          %2633 = vmatprep.subr.bf16.mxu0 0
          %2634 = vmatpush1.bf16.msra.mxu0 0
          %2635 = vmatprep.subr.bf16.mxu0 0
          %2636 = vmatpush1.bf16.msra.mxu0 0
          %2637 = vmatprep.subr.bf16.mxu0 0
          %2638 = vmatpush1.bf16.msra.mxu0 0
          %2639 = vmatprep.subr.bf16.mxu0 0
          %2640 = vmatpush1.bf16.msra.mxu0 0
          %2641 = vmatprep.subr.bf16.mxu0 0
          %2642 = vmatpush1.bf16.msra.mxu0 0
          %2643 = vmatprep.subr.bf16.mxu0 %v2617
          %2644 = vmatpush1.bf16.msra.mxu0 %v2616
          %2645 = vmatprep.subr.bf16.mxu0 %v2613
          %2646 = vmatpush1.bf16.msra.mxu0 %v2612
          %2647 = vmatprep.subr.bf16.mxu0 0
          %2648 = vmatpush2.bf16.msra.mxu0 0
          %2649 = vmatprep.subr.bf16.mxu0 0
          %2650 = vmatpush2.bf16.msra.mxu0 0
          %2651 = vmatprep.subr.bf16.mxu0 0
          %2652 = vmatpush2.bf16.msra.mxu0 0
          %2653 = vmatprep.subr.bf16.mxu0 0
          %2654 = vmatpush2.bf16.msra.mxu0 0
          %2655 = vmatprep.subr.bf16.mxu0 0
          %2656 = vmatpush2.bf16.msra.mxu0 0
          %2657 = vmatprep.subr.bf16.mxu0 0
          %2658 = vmatpush2.bf16.msra.mxu0 0
          %2659 = vmatprep.subr.bf16.mxu0 0
          %2660 = vmatpush2.bf16.msra.mxu0 0
          %2661 = vmatprep.subr.bf16.mxu0 0
          %2662 = vmatpush2.bf16.msra.mxu0 0
          %2663 = vmatprep.mubr.bf16.mxu0 0
          %2664 = vmatmul.mubr.bf16.gmra.mxu0 %v2629
          %v2665 = vpop.f32.mrf.mxu0
          %v2666 = vadd.f32 0.0, %v2665
          %v2667 = vpop.f32.mrf.mxu0
          %v2668 = vadd.f32 0.0, %v2667
          %v2669 = vpop.f32.mrf.mxu0
          %v2670 = vpop.f32.mrf.mxu0
          %2671 = vdwg.mxu0
          %2672 = vmatprep.subr.bf16.mxu0 0
          %2673 = vmatpush1.bf16.msra.mxu0 0
          %2674 = vmatprep.subr.bf16.mxu0 0
          %2675 = vmatpush1.bf16.msra.mxu0 0
          %2676 = vmatprep.subr.bf16.mxu0 0
          %2677 = vmatpush1.bf16.msra.mxu0 0
          %2678 = vmatprep.subr.bf16.mxu0 0
          %2679 = vmatpush1.bf16.msra.mxu0 0
          %2680 = vmatprep.subr.bf16.mxu0 0
          %2681 = vmatpush1.bf16.msra.mxu0 0
          %2682 = vmatprep.subr.bf16.mxu0 0
          %2683 = vmatpush1.bf16.msra.mxu0 0
          %2684 = vmatprep.subr.bf16.mxu0 %v2619
          %2685 = vmatpush1.bf16.msra.mxu0 %v2618
          %2686 = vmatprep.subr.bf16.mxu0 %v2615
          %2687 = vmatpush1.bf16.msra.mxu0 %v2614
          %2688 = vmatprep.subr.bf16.mxu0 0
          %2689 = vmatpush2.bf16.msra.mxu0 0
          %2690 = vmatprep.subr.bf16.mxu0 0
          %2691 = vmatpush2.bf16.msra.mxu0 0
          %2692 = vmatprep.subr.bf16.mxu0 0
          %2693 = vmatpush2.bf16.msra.mxu0 0
          %2694 = vmatprep.subr.bf16.mxu0 0
          %2695 = vmatpush2.bf16.msra.mxu0 0
          %2696 = vmatprep.subr.bf16.mxu0 0
          %2697 = vmatpush2.bf16.msra.mxu0 0
          %2698 = vmatprep.subr.bf16.mxu0 0
          %2699 = vmatpush2.bf16.msra.mxu0 0
          %2700 = vmatprep.subr.bf16.mxu0 0
          %2701 = vmatpush2.bf16.msra.mxu0 0
          %2702 = vmatprep.subr.bf16.mxu0 0
          %2703 = vmatpush2.bf16.msra.mxu0 0
          %2704 = vmatprep.mubr.bf16.mxu0 0
          %2705 = vmatmul.mubr.bf16.gmra.mxu0 %v2629
          %v2706 = vpop.f32.mrf.mxu0
          %v2707 = vadd.f32 0.0, %v2706
          %v2708 = vpop.f32.mrf.mxu0
          %v2709 = vadd.f32 0.0, %v2708
          %v2710 = vpop.f32.mrf.mxu0
          %v2711 = vpop.f32.mrf.mxu0
          %2712 = vdwg.mxu0
          %v2713 = vadd.f32 %v2475, %v2666
          %v2714 = vadd.f32 %v2476, %v2668
          %v2715 = vadd.f32 %v2477, %v2707
          %v2716 = vadd.f32 %v2478, %v2709
          %v2717 = vld [vmem:[#allocation9] sm:$0xf]
          %v2719 = vlaneseq
          %v2720 = vshrl.u32 %v2719, 7
          %v2721 = vsub.s32 0, %v2720
          %v2722 = vrot.slane %v2717, %v2721
          %v2723 = vlaneseq
          %v2724 = vshrl.u32 %v2723, 7
          %v2725 = vsub.s32 1, %v2724
          %v2726 = vrot.slane %v2717, %v2725
          %v2727 = vlaneseq
          %v2728 = vshrl.u32 %v2727, 7
          %v2729 = vsub.s32 2, %v2728
          %v2730 = vrot.slane %v2717, %v2729
          %v2731 = vlaneseq
          %v2732 = vshrl.u32 %v2731, 7
          %v2733 = vsub.s32 3, %v2732
          %v2734 = vrot.slane %v2717, %v2733
          %v2739 = vadd.f32 %v2713, %v2722
          %v2740 = vadd.f32 %v2714, %v2726
          %v2741 = vadd.f32 %v2715, %v2730
          %v2742 = vadd.f32 %v2716, %v2734
          %v2743 = vmul.f32 %v2739, 0.5
          %v2744 = vmul.f32 %v2740, 0.5
          %v2745 = vmul.f32 %v2741, 0.5
          %v2746 = vmul.f32 %v2742, 0.5
          %v2747 = vmul.f32 %v2739, 0.70710677
          %v2748 = vmul.f32 %v2740, 0.70710677
          %v2749 = vmul.f32 %v2741, 0.70710677
          %v2750 = vmul.f32 %v2742, 0.70710677
          %vm2751 = vcmp.ge.f32.partialorder %v2747, 0.0
          %vm2752 = vcmp.ge.f32.partialorder %v2748, 0.0
          %vm2753 = vcmp.ge.f32.partialorder %v2749, 0.0
          %vm2754 = vcmp.ge.f32.partialorder %v2750, 0.0
          %v2755 = vsel %vm2751, 1.0, -1.0
          %v2756 = vsel %vm2752, 1.0, -1.0
          %v2757 = vsel %vm2753, 1.0, -1.0
          %v2758 = vsel %vm2754, 1.0, -1.0
          %v2759 = vand.u32 2147483647, %v2747
          %v2760 = vand.u32 2147483647, %v2748
          %v2761 = vand.u32 2147483647, %v2749
          %v2762 = vand.u32 2147483647, %v2750
          %v2763 = vmul.f32 %v2759, 0.3275911
          %v2764 = vmul.f32 %v2760, 0.3275911
          %v2765 = vmul.f32 %v2761, 0.3275911
          %v2766 = vmul.f32 %v2762, 0.3275911
          %v2767 = vadd.f32 %v2763, 1.0
          %v2768 = vadd.f32 %v2764, 1.0
          %v2769 = vadd.f32 %v2765, 1.0
          %v2770 = vadd.f32 %v2766, 1.0
          %v2771 = vrcp.pop %v2767
          %v2772 = vrcp.pop %v2768
          %v2773 = vrcp.pop %v2769
          %v2774 = vrcp.pop %v2770
          %v2775 = vmul.f32 %v2771, 1.0614054
          %v2776 = vmul.f32 %v2772, 1.0614054
          %v2777 = vmul.f32 %v2773, 1.0614054
          %v2778 = vmul.f32 %v2774, 1.0614054
          %v2779 = vadd.f32 %v2775, -1.4531521
          %v2780 = vadd.f32 %v2776, -1.4531521
          %v2781 = vadd.f32 %v2777, -1.4531521
          %v2782 = vadd.f32 %v2778, -1.4531521
          %v2783 = vmul.f32 %v2779, %v2771
          %v2784 = vmul.f32 %v2780, %v2772
          %v2785 = vmul.f32 %v2781, %v2773
          %v2786 = vmul.f32 %v2782, %v2774
          %v2787 = vadd.f32 %v2783, 1.4214138
          %v2788 = vadd.f32 %v2784, 1.4214138
          %v2789 = vadd.f32 %v2785, 1.4214138
          %v2790 = vadd.f32 %v2786, 1.4214138
          %v2791 = vmul.f32 %v2787, %v2771
          %v2792 = vmul.f32 %v2788, %v2772
          %v2793 = vmul.f32 %v2789, %v2773
          %v2794 = vmul.f32 %v2790, %v2774
          %v2795 = vadd.f32 %v2791, -0.28449672
          %v2796 = vadd.f32 %v2792, -0.28449672
          %v2797 = vadd.f32 %v2793, -0.28449672
          %v2798 = vadd.f32 %v2794, -0.28449672
          %v2799 = vmul.f32 %v2795, %v2771
          %v2800 = vmul.f32 %v2796, %v2772
          %v2801 = vmul.f32 %v2797, %v2773
          %v2802 = vmul.f32 %v2798, %v2774
          %v2803 = vadd.f32 %v2799, 0.2548296
          %v2804 = vadd.f32 %v2800, 0.2548296
          %v2805 = vadd.f32 %v2801, 0.2548296
          %v2806 = vadd.f32 %v2802, 0.2548296
          %v2807 = vmul.f32 %v2803, %v2771
          %v2808 = vmul.f32 %v2804, %v2772
          %v2809 = vmul.f32 %v2805, %v2773
          %v2810 = vmul.f32 %v2806, %v2774
          %v2811 = vsub.f32 0.0, %v2759
          %v2812 = vsub.f32 0.0, %v2760
          %v2813 = vsub.f32 0.0, %v2761
          %v2814 = vsub.f32 0.0, %v2762
          %v2815 = vmul.f32 %v2811, %v2759
          %v2816 = vmul.f32 %v2812, %v2760
          %v2817 = vmul.f32 %v2813, %v2761
          %v2818 = vmul.f32 %v2814, %v2762
          %v2819 = vmul.f32 %v2815, 1.442695
          %v2820 = vpow.pop %v2819
          %v2821 = vmul.f32 %v2816, 1.442695
          %v2822 = vpow.pop %v2821
          %v2823 = vmul.f32 %v2817, 1.442695
          %v2824 = vpow.pop %v2823
          %v2825 = vmul.f32 %v2818, 1.442695
          %v2826 = vpow.pop %v2825
          %v2827 = vmul.f32 %v2807, %v2820
          %v2828 = vmul.f32 %v2808, %v2822
          %v2829 = vmul.f32 %v2809, %v2824
          %v2830 = vmul.f32 %v2810, %v2826
          %v2831 = vsub.f32 1.0, %v2827
          %v2832 = vsub.f32 1.0, %v2828
          %v2833 = vsub.f32 1.0, %v2829
          %v2834 = vsub.f32 1.0, %v2830
          %v2835 = vmul.f32 %v2755, %v2831
          %v2836 = vmul.f32 %v2756, %v2832
          %v2837 = vmul.f32 %v2757, %v2833
          %v2838 = vmul.f32 %v2758, %v2834
          %v2839 = vadd.f32 %v2835, 1.0
          %v2840 = vadd.f32 %v2836, 1.0
          %v2841 = vadd.f32 %v2837, 1.0
          %v2842 = vadd.f32 %v2838, 1.0
          %v2843 = vmul.f32 %v2743, %v2839
          %v2844 = vmul.f32 %v2744, %v2840
          %v2845 = vmul.f32 %v2745, %v2841
          %v2846 = vmul.f32 %v2746, %v2842
          %v2851 = vcombine.low %v2843, %v2844
          %v2852 = vcombine.low %v2845, %v2846
          %v2854 = vunpack.c.l.s4 1983009808
          %v2855 = vunpack.c.0.s8 %v2854
          %v2856 = vlaneseq
          %v2857 = vshrl.u32 %v2856, 7
          %v2858 = vsub.s32 %v2855, %v2857
          %v2859 = vrot.slane %v2851, %v2858
          %v2861 = vunpack.c.l.s4 1983009808
          %v2862 = vunpack.c.0.s8 %v2861
          %v2863 = vlaneseq
          %v2864 = vshrl.u32 %v2863, 7
          %v2865 = vsub.s32 %v2862, %v2864
          %v2866 = vrot.slane %v2852, %v2865
          %v2867 = vcombine.low %v2859, %v2866
          %2869 = vst [vmem:[#allocation2] sm:$0xff] %v2867
        $region92: #{ind_mlp_forward.1} parent=55 // pred_fallthru
          _
        %v2870 = vld [vmem:[#allocation2] sm:$0xff]
        %v2872 = vcombine.high %v2870, %v2870
        %v2874 = vunpack.c.l.s4 1983009808
        %v2875 = vunpack.c.0.s8 %v2874
        %v2876 = vlaneseq
        %v2877 = vshrl.u32 %v2876, 7
        %v2878 = vsub.s32 %v2875, %v2877
        %v2879 = vrot.slane %v2870, %v2878
        %v2881 = vunpack.c.l.s4 1983009808
        %v2882 = vunpack.c.0.s8 %v2881
        %v2883 = vlaneseq
        %v2884 = vshrl.u32 %v2883, 7
        %v2885 = vsub.s32 %v2882, %v2884
        %v2886 = vrot.slane %v2872, %v2885
        %v2887 = vcombine.high %v2879, %v2879
        %v2888 = vcombine.high %v2886, %v2886
        %v2893 = vpack.c.bf16 %v2879, %v2879
        %v2894 = vpack.c.bf16 %v2887, %v2887
        %v2895 = vpack.c.bf16 %v2886, %v2886
        %v2896 = vpack.c.bf16 %v2888, %v2888
        %v2897 = vld [vmem:[%s404] sm:$0xff]
        %v2898 = vld [vmem:[%s404 + $0x8] sm:$0xff]
        %v2899 = vld [vmem:[%s404 + $0x10] sm:$0xff]
        %v2900 = vld [vmem:[%s404 + $0x18] sm:$0xff]
        %v2901 = vld [vmem:[%s404 + $0x20] sm:$0xff]
        %v2902 = vld [vmem:[%s404 + $0x28] sm:$0xff]
        %v2903 = vld [vmem:[%s404 + $0x30] sm:$0xff]
        %v2904 = vld [vmem:[%s404 + $0x38] sm:$0xff]
        %v2905 = vld [vmem:[%s404 + $0x40] sm:$0xff]
        %v2906 = vld [vmem:[%s404 + $0x48] sm:$0xff]
        %v2907 = vld [vmem:[%s404 + $0x50] sm:$0xff]
        %v2908 = vld [vmem:[%s404 + $0x58] sm:$0xff]
        %v2909 = vld [vmem:[%s404 + $0x60] sm:$0xff]
        %v2910 = vld [vmem:[%s404 + $0x68] sm:$0xff]
        %v2911 = vld [vmem:[%s404 + $0x70] sm:$0xff]
        %v2912 = vld [vmem:[%s404 + $0x78] sm:$0xff]
        %v2913 = vld [vmem:[%s404 + $0x80] sm:$0xff]
        %v2914 = vld [vmem:[%s404 + $0x88] sm:$0xff]
        %v2915 = vld [vmem:[%s404 + $0x90] sm:$0xff]
        %v2916 = vld [vmem:[%s404 + $0x98] sm:$0xff]
        %v2917 = vld [vmem:[%s404 + $0xa0] sm:$0xff]
        %v2918 = vld [vmem:[%s404 + $0xa8] sm:$0xff]
        %v2919 = vld [vmem:[%s404 + $0xb0] sm:$0xff]
        %v2920 = vld [vmem:[%s404 + $0xb8] sm:$0xff]
        %v2921 = vld [vmem:[%s404 + $0xc0] sm:$0xff]
        %v2922 = vld [vmem:[%s404 + $0xc8] sm:$0xff]
        %v2923 = vld [vmem:[%s404 + $0xd0] sm:$0xff]
        %v2924 = vld [vmem:[%s404 + $0xd8] sm:$0xff]
        %v2925 = vld [vmem:[%s404 + $0xe0] sm:$0xff]
        %v2926 = vld [vmem:[%s404 + $0xe8] sm:$0xff]
        %v2927 = vld [vmem:[%s404 + $0xf0] sm:$0xff]
        %v2928 = vld [vmem:[%s404 + $0xf8] sm:$0xff]
        %v2929 = vld [vmem:[%s404 + $0x100] sm:$0xff]
        %v2930 = vld [vmem:[%s404 + $0x108] sm:$0xff]
        %v2931 = vld [vmem:[%s404 + $0x110] sm:$0xff]
        %v2932 = vld [vmem:[%s404 + $0x118] sm:$0xff]
        %v2933 = vld [vmem:[%s404 + $0x120] sm:$0xff]
        %v2934 = vld [vmem:[%s404 + $0x128] sm:$0xff]
        %v2935 = vld [vmem:[%s404 + $0x130] sm:$0xff]
        %v2936 = vld [vmem:[%s404 + $0x138] sm:$0xff]
        %v2937 = vld [vmem:[%s404 + $0x140] sm:$0xff]
        %v2938 = vld [vmem:[%s404 + $0x148] sm:$0xff]
        %v2939 = vld [vmem:[%s404 + $0x150] sm:$0xff]
        %v2940 = vld [vmem:[%s404 + $0x158] sm:$0xff]
        %v2941 = vld [vmem:[%s404 + $0x160] sm:$0xff]
        %v2942 = vld [vmem:[%s404 + $0x168] sm:$0xff]
        %v2943 = vld [vmem:[%s404 + $0x170] sm:$0xff]
        %v2944 = vld [vmem:[%s404 + $0x178] sm:$0xff]
        %v2945 = vld [vmem:[%s404 + $0x180] sm:$0xff]
        %v2946 = vld [vmem:[%s404 + $0x188] sm:$0xff]
        %v2947 = vld [vmem:[%s404 + $0x190] sm:$0xff]
        %v2948 = vld [vmem:[%s404 + $0x198] sm:$0xff]
        %v2949 = vld [vmem:[%s404 + $0x1a0] sm:$0xff]
        %v2950 = vld [vmem:[%s404 + $0x1a8] sm:$0xff]
        %v2951 = vld [vmem:[%s404 + $0x1b0] sm:$0xff]
        %v2952 = vld [vmem:[%s404 + $0x1b8] sm:$0xff]
        %v2953 = vld [vmem:[%s404 + $0x1c0] sm:$0xff]
        %v2954 = vld [vmem:[%s404 + $0x1c8] sm:$0xff]
        %v2955 = vld [vmem:[%s404 + $0x1d0] sm:$0xff]
        %v2956 = vld [vmem:[%s404 + $0x1d8] sm:$0xff]
        %v2957 = vld [vmem:[%s404 + $0x1e0] sm:$0xff]
        %v2958 = vld [vmem:[%s404 + $0x1e8] sm:$0xff]
        %v2959 = vld [vmem:[%s404 + $0x1f0] sm:$0xff]
        %v2960 = vld [vmem:[%s404 + $0x1f8] sm:$0xff]
        %v2961 = vld [vmem:[%s404 + $0x200] sm:$0xff]
        %v2962 = vld [vmem:[%s404 + $0x208] sm:$0xff]
        %v2963 = vld [vmem:[%s404 + $0x210] sm:$0xff]
        %v2964 = vld [vmem:[%s404 + $0x218] sm:$0xff]
        %v2965 = vld [vmem:[%s404 + $0x220] sm:$0xff]
        %v2966 = vld [vmem:[%s404 + $0x228] sm:$0xff]
        %v2967 = vld [vmem:[%s404 + $0x230] sm:$0xff]
        %v2968 = vld [vmem:[%s404 + $0x238] sm:$0xff]
        %v2969 = vld [vmem:[%s404 + $0x240] sm:$0xff]
        %v2970 = vld [vmem:[%s404 + $0x248] sm:$0xff]
        %v2971 = vld [vmem:[%s404 + $0x250] sm:$0xff]
        %v2972 = vld [vmem:[%s404 + $0x258] sm:$0xff]
        %v2973 = vld [vmem:[%s404 + $0x260] sm:$0xff]
        %v2974 = vld [vmem:[%s404 + $0x268] sm:$0xff]
        %v2975 = vld [vmem:[%s404 + $0x270] sm:$0xff]
        %v2976 = vld [vmem:[%s404 + $0x278] sm:$0xff]
        %v2977 = vld [vmem:[%s404 + $0x280] sm:$0xff]
        %v2978 = vld [vmem:[%s404 + $0x288] sm:$0xff]
        %v2979 = vld [vmem:[%s404 + $0x290] sm:$0xff]
        %v2980 = vld [vmem:[%s404 + $0x298] sm:$0xff]
        %v2981 = vld [vmem:[%s404 + $0x2a0] sm:$0xff]
        %v2982 = vld [vmem:[%s404 + $0x2a8] sm:$0xff]
        %v2983 = vld [vmem:[%s404 + $0x2b0] sm:$0xff]
        %v2984 = vld [vmem:[%s404 + $0x2b8] sm:$0xff]
        %v2985 = vld [vmem:[%s404 + $0x2c0] sm:$0xff]
        %v2986 = vld [vmem:[%s404 + $0x2c8] sm:$0xff]
        %v2987 = vld [vmem:[%s404 + $0x2d0] sm:$0xff]
        %v2988 = vld [vmem:[%s404 + $0x2d8] sm:$0xff]
        %v2989 = vld [vmem:[%s404 + $0x2e0] sm:$0xff]
        %v2990 = vld [vmem:[%s404 + $0x2e8] sm:$0xff]
        %v2991 = vld [vmem:[%s404 + $0x2f0] sm:$0xff]
        %v2992 = vld [vmem:[%s404 + $0x2f8] sm:$0xff]
        %v2993 = vld [vmem:[%s404 + $0x300] sm:$0xff]
        %v2994 = vld [vmem:[%s404 + $0x308] sm:$0xff]
        %v2995 = vld [vmem:[%s404 + $0x310] sm:$0xff]
        %v2996 = vld [vmem:[%s404 + $0x318] sm:$0xff]
        %v2997 = vld [vmem:[%s404 + $0x320] sm:$0xff]
        %v2998 = vld [vmem:[%s404 + $0x328] sm:$0xff]
        %v2999 = vld [vmem:[%s404 + $0x330] sm:$0xff]
        %v3000 = vld [vmem:[%s404 + $0x338] sm:$0xff]
        %v3001 = vld [vmem:[%s404 + $0x340] sm:$0xff]
        %v3002 = vld [vmem:[%s404 + $0x348] sm:$0xff]
        %v3003 = vld [vmem:[%s404 + $0x350] sm:$0xff]
        %v3004 = vld [vmem:[%s404 + $0x358] sm:$0xff]
        %v3005 = vld [vmem:[%s404 + $0x360] sm:$0xff]
        %v3006 = vld [vmem:[%s404 + $0x368] sm:$0xff]
        %v3007 = vld [vmem:[%s404 + $0x370] sm:$0xff]
        %v3008 = vld [vmem:[%s404 + $0x378] sm:$0xff]
        %v3009 = vld [vmem:[%s404 + $0x380] sm:$0xff]
        %v3010 = vld [vmem:[%s404 + $0x388] sm:$0xff]
        %v3011 = vld [vmem:[%s404 + $0x390] sm:$0xff]
        %v3012 = vld [vmem:[%s404 + $0x398] sm:$0xff]
        %v3013 = vld [vmem:[%s404 + $0x3a0] sm:$0xff]
        %v3014 = vld [vmem:[%s404 + $0x3a8] sm:$0xff]
        %v3015 = vld [vmem:[%s404 + $0x3b0] sm:$0xff]
        %v3016 = vld [vmem:[%s404 + $0x3b8] sm:$0xff]
        %v3017 = vld [vmem:[%s404 + $0x3c0] sm:$0xff]
        %v3018 = vld [vmem:[%s404 + $0x3c8] sm:$0xff]
        %v3019 = vld [vmem:[%s404 + $0x3d0] sm:$0xff]
        %v3020 = vld [vmem:[%s404 + $0x3d8] sm:$0xff]
        %v3021 = vld [vmem:[%s404 + $0x3e0] sm:$0xff]
        %v3022 = vld [vmem:[%s404 + $0x3e8] sm:$0xff]
        %v3023 = vld [vmem:[%s404 + $0x3f0] sm:$0xff]
        %v3024 = vld [vmem:[%s404 + $0x3f8] sm:$0xff]
        %v3025 = vld [vmem:[%s413] sm:$0xf]
        %v3027 = vlaneseq
        %v3028 = vshrl.u32 %v3027, 7
        %v3029 = vsub.s32 0, %v3028
        %v3030 = vrot.slane %v3025, %v3029
        %v3031 = vlaneseq
        %v3032 = vshrl.u32 %v3031, 7
        %v3033 = vsub.s32 1, %v3032
        %v3034 = vrot.slane %v3025, %v3033
        %v3035 = vlaneseq
        %v3036 = vshrl.u32 %v3035, 7
        %v3037 = vsub.s32 2, %v3036
        %v3038 = vrot.slane %v3025, %v3037
        %v3039 = vlaneseq
        %v3040 = vshrl.u32 %v3039, 7
        %v3041 = vsub.s32 3, %v3040
        %v3042 = vrot.slane %v3025, %v3041
        %v3175 = vunpack.c.l.b16 %v2897
        %v3176 = vunpack.c.h.b16 %v2897
        %v3177 = vunpack.c.l.b16 %v2898
        %v3178 = vunpack.c.h.b16 %v2898
        %v3179 = vunpack.c.l.b16 %v2899
        %v3180 = vunpack.c.h.b16 %v2899
        %v3181 = vunpack.c.l.b16 %v2900
        %v3182 = vunpack.c.h.b16 %v2900
        %v3183 = vunpack.c.l.b16 %v2901
        %v3184 = vunpack.c.h.b16 %v2901
        %v3185 = vunpack.c.l.b16 %v2902
        %v3186 = vunpack.c.h.b16 %v2902
        %v3187 = vunpack.c.l.b16 %v2903
        %v3188 = vunpack.c.h.b16 %v2903
        %v3189 = vunpack.c.l.b16 %v2904
        %v3190 = vunpack.c.h.b16 %v2904
        %v3191 = vunpack.c.l.b16 %v2905
        %v3192 = vunpack.c.h.b16 %v2905
        %v3193 = vunpack.c.l.b16 %v2906
        %v3194 = vunpack.c.h.b16 %v2906
        %v3195 = vunpack.c.l.b16 %v2907
        %v3196 = vunpack.c.h.b16 %v2907
        %v3197 = vunpack.c.l.b16 %v2908
        %v3198 = vunpack.c.h.b16 %v2908
        %v3199 = vunpack.c.l.b16 %v2909
        %v3200 = vunpack.c.h.b16 %v2909
        %v3201 = vunpack.c.l.b16 %v2910
        %v3202 = vunpack.c.h.b16 %v2910
        %v3203 = vunpack.c.l.b16 %v2911
        %v3204 = vunpack.c.h.b16 %v2911
        %v3205 = vunpack.c.l.b16 %v2912
        %v3206 = vunpack.c.h.b16 %v2912
        %v3207 = vunpack.c.l.b16 %v2913
        %v3208 = vunpack.c.h.b16 %v2913
        %v3209 = vunpack.c.l.b16 %v2914
        %v3210 = vunpack.c.h.b16 %v2914
        %v3211 = vunpack.c.l.b16 %v2915
        %v3212 = vunpack.c.h.b16 %v2915
        %v3213 = vunpack.c.l.b16 %v2916
        %v3214 = vunpack.c.h.b16 %v2916
        %v3215 = vunpack.c.l.b16 %v2917
        %v3216 = vunpack.c.h.b16 %v2917
        %v3217 = vunpack.c.l.b16 %v2918
        %v3218 = vunpack.c.h.b16 %v2918
        %v3219 = vunpack.c.l.b16 %v2919
        %v3220 = vunpack.c.h.b16 %v2919
        %v3221 = vunpack.c.l.b16 %v2920
        %v3222 = vunpack.c.h.b16 %v2920
        %v3223 = vunpack.c.l.b16 %v2921
        %v3224 = vunpack.c.h.b16 %v2921
        %v3225 = vunpack.c.l.b16 %v2922
        %v3226 = vunpack.c.h.b16 %v2922
        %v3227 = vunpack.c.l.b16 %v2923
        %v3228 = vunpack.c.h.b16 %v2923
        %v3229 = vunpack.c.l.b16 %v2924
        %v3230 = vunpack.c.h.b16 %v2924
        %v3231 = vunpack.c.l.b16 %v2925
        %v3232 = vunpack.c.h.b16 %v2925
        %v3233 = vunpack.c.l.b16 %v2926
        %v3234 = vunpack.c.h.b16 %v2926
        %v3235 = vunpack.c.l.b16 %v2927
        %v3236 = vunpack.c.h.b16 %v2927
        %v3237 = vunpack.c.l.b16 %v2928
        %v3238 = vunpack.c.h.b16 %v2928
        %v3239 = vunpack.c.l.b16 %v2929
        %v3240 = vunpack.c.h.b16 %v2929
        %v3241 = vunpack.c.l.b16 %v2930
        %v3242 = vunpack.c.h.b16 %v2930
        %v3243 = vunpack.c.l.b16 %v2931
        %v3244 = vunpack.c.h.b16 %v2931
        %v3245 = vunpack.c.l.b16 %v2932
        %v3246 = vunpack.c.h.b16 %v2932
        %v3247 = vunpack.c.l.b16 %v2933
        %v3248 = vunpack.c.h.b16 %v2933
        %v3249 = vunpack.c.l.b16 %v2934
        %v3250 = vunpack.c.h.b16 %v2934
        %v3251 = vunpack.c.l.b16 %v2935
        %v3252 = vunpack.c.h.b16 %v2935
        %v3253 = vunpack.c.l.b16 %v2936
        %v3254 = vunpack.c.h.b16 %v2936
        %v3255 = vunpack.c.l.b16 %v2937
        %v3256 = vunpack.c.h.b16 %v2937
        %v3257 = vunpack.c.l.b16 %v2938
        %v3258 = vunpack.c.h.b16 %v2938
        %v3259 = vunpack.c.l.b16 %v2939
        %v3260 = vunpack.c.h.b16 %v2939
        %v3261 = vunpack.c.l.b16 %v2940
        %v3262 = vunpack.c.h.b16 %v2940
        %v3263 = vunpack.c.l.b16 %v2941
        %v3264 = vunpack.c.h.b16 %v2941
        %v3265 = vunpack.c.l.b16 %v2942
        %v3266 = vunpack.c.h.b16 %v2942
        %v3267 = vunpack.c.l.b16 %v2943
        %v3268 = vunpack.c.h.b16 %v2943
        %v3269 = vunpack.c.l.b16 %v2944
        %v3270 = vunpack.c.h.b16 %v2944
        %v3271 = vunpack.c.l.b16 %v2945
        %v3272 = vunpack.c.h.b16 %v2945
        %v3273 = vunpack.c.l.b16 %v2946
        %v3274 = vunpack.c.h.b16 %v2946
        %v3275 = vunpack.c.l.b16 %v2947
        %v3276 = vunpack.c.h.b16 %v2947
        %v3277 = vunpack.c.l.b16 %v2948
        %v3278 = vunpack.c.h.b16 %v2948
        %v3279 = vunpack.c.l.b16 %v2949
        %v3280 = vunpack.c.h.b16 %v2949
        %v3281 = vunpack.c.l.b16 %v2950
        %v3282 = vunpack.c.h.b16 %v2950
        %v3283 = vunpack.c.l.b16 %v2951
        %v3284 = vunpack.c.h.b16 %v2951
        %v3285 = vunpack.c.l.b16 %v2952
        %v3286 = vunpack.c.h.b16 %v2952
        %v3287 = vunpack.c.l.b16 %v2953
        %v3288 = vunpack.c.h.b16 %v2953
        %v3289 = vunpack.c.l.b16 %v2954
        %v3290 = vunpack.c.h.b16 %v2954
        %v3291 = vunpack.c.l.b16 %v2955
        %v3292 = vunpack.c.h.b16 %v2955
        %v3293 = vunpack.c.l.b16 %v2956
        %v3294 = vunpack.c.h.b16 %v2956
        %v3295 = vunpack.c.l.b16 %v2957
        %v3296 = vunpack.c.h.b16 %v2957
        %v3297 = vunpack.c.l.b16 %v2958
        %v3298 = vunpack.c.h.b16 %v2958
        %v3299 = vunpack.c.l.b16 %v2959
        %v3300 = vunpack.c.h.b16 %v2959
        %v3301 = vunpack.c.l.b16 %v2960
        %v3302 = vunpack.c.h.b16 %v2960
        %v3303 = vunpack.c.l.b16 %v2961
        %v3304 = vunpack.c.h.b16 %v2961
        %v3305 = vunpack.c.l.b16 %v2962
        %v3306 = vunpack.c.h.b16 %v2962
        %v3307 = vunpack.c.l.b16 %v2963
        %v3308 = vunpack.c.h.b16 %v2963
        %v3309 = vunpack.c.l.b16 %v2964
        %v3310 = vunpack.c.h.b16 %v2964
        %v3311 = vunpack.c.l.b16 %v2965
        %v3312 = vunpack.c.h.b16 %v2965
        %v3313 = vunpack.c.l.b16 %v2966
        %v3314 = vunpack.c.h.b16 %v2966
        %v3315 = vunpack.c.l.b16 %v2967
        %v3316 = vunpack.c.h.b16 %v2967
        %v3317 = vunpack.c.l.b16 %v2968
        %v3318 = vunpack.c.h.b16 %v2968
        %v3319 = vunpack.c.l.b16 %v2969
        %v3320 = vunpack.c.h.b16 %v2969
        %v3321 = vunpack.c.l.b16 %v2970
        %v3322 = vunpack.c.h.b16 %v2970
        %v3323 = vunpack.c.l.b16 %v2971
        %v3324 = vunpack.c.h.b16 %v2971
        %v3325 = vunpack.c.l.b16 %v2972
        %v3326 = vunpack.c.h.b16 %v2972
        %v3327 = vunpack.c.l.b16 %v2973
        %v3328 = vunpack.c.h.b16 %v2973
        %v3329 = vunpack.c.l.b16 %v2974
        %v3330 = vunpack.c.h.b16 %v2974
        %v3331 = vunpack.c.l.b16 %v2975
        %v3332 = vunpack.c.h.b16 %v2975
        %v3333 = vunpack.c.l.b16 %v2976
        %v3334 = vunpack.c.h.b16 %v2976
        %v3335 = vunpack.c.l.b16 %v2977
        %v3336 = vunpack.c.h.b16 %v2977
        %v3337 = vunpack.c.l.b16 %v2978
        %v3338 = vunpack.c.h.b16 %v2978
        %v3339 = vunpack.c.l.b16 %v2979
        %v3340 = vunpack.c.h.b16 %v2979
        %v3341 = vunpack.c.l.b16 %v2980
        %v3342 = vunpack.c.h.b16 %v2980
        %v3343 = vunpack.c.l.b16 %v2981
        %v3344 = vunpack.c.h.b16 %v2981
        %v3345 = vunpack.c.l.b16 %v2982
        %v3346 = vunpack.c.h.b16 %v2982
        %v3347 = vunpack.c.l.b16 %v2983
        %v3348 = vunpack.c.h.b16 %v2983
        %v3349 = vunpack.c.l.b16 %v2984
        %v3350 = vunpack.c.h.b16 %v2984
        %v3351 = vunpack.c.l.b16 %v2985
        %v3352 = vunpack.c.h.b16 %v2985
        %v3353 = vunpack.c.l.b16 %v2986
        %v3354 = vunpack.c.h.b16 %v2986
        %v3355 = vunpack.c.l.b16 %v2987
        %v3356 = vunpack.c.h.b16 %v2987
        %v3357 = vunpack.c.l.b16 %v2988
        %v3358 = vunpack.c.h.b16 %v2988
        %v3359 = vunpack.c.l.b16 %v2989
        %v3360 = vunpack.c.h.b16 %v2989
        %v3361 = vunpack.c.l.b16 %v2990
        %v3362 = vunpack.c.h.b16 %v2990
        %v3363 = vunpack.c.l.b16 %v2991
        %v3364 = vunpack.c.h.b16 %v2991
        %v3365 = vunpack.c.l.b16 %v2992
        %v3366 = vunpack.c.h.b16 %v2992
        %v3367 = vunpack.c.l.b16 %v2993
        %v3368 = vunpack.c.h.b16 %v2993
        %v3369 = vunpack.c.l.b16 %v2994
        %v3370 = vunpack.c.h.b16 %v2994
        %v3371 = vunpack.c.l.b16 %v2995
        %v3372 = vunpack.c.h.b16 %v2995
        %v3373 = vunpack.c.l.b16 %v2996
        %v3374 = vunpack.c.h.b16 %v2996
        %v3375 = vunpack.c.l.b16 %v2997
        %v3376 = vunpack.c.h.b16 %v2997
        %v3377 = vunpack.c.l.b16 %v2998
        %v3378 = vunpack.c.h.b16 %v2998
        %v3379 = vunpack.c.l.b16 %v2999
        %v3380 = vunpack.c.h.b16 %v2999
        %v3381 = vunpack.c.l.b16 %v3000
        %v3382 = vunpack.c.h.b16 %v3000
        %v3383 = vunpack.c.l.b16 %v3001
        %v3384 = vunpack.c.h.b16 %v3001
        %v3385 = vunpack.c.l.b16 %v3002
        %v3386 = vunpack.c.h.b16 %v3002
        %v3387 = vunpack.c.l.b16 %v3003
        %v3388 = vunpack.c.h.b16 %v3003
        %v3389 = vunpack.c.l.b16 %v3004
        %v3390 = vunpack.c.h.b16 %v3004
        %v3391 = vunpack.c.l.b16 %v3005
        %v3392 = vunpack.c.h.b16 %v3005
        %v3393 = vunpack.c.l.b16 %v3006
        %v3394 = vunpack.c.h.b16 %v3006
        %v3395 = vunpack.c.l.b16 %v3007
        %v3396 = vunpack.c.h.b16 %v3007
        %v3397 = vunpack.c.l.b16 %v3008
        %v3398 = vunpack.c.h.b16 %v3008
        %v3399 = vunpack.c.l.b16 %v3009
        %v3400 = vunpack.c.h.b16 %v3009
        %v3401 = vunpack.c.l.b16 %v3010
        %v3402 = vunpack.c.h.b16 %v3010
        %v3403 = vunpack.c.l.b16 %v3011
        %v3404 = vunpack.c.h.b16 %v3011
        %v3405 = vunpack.c.l.b16 %v3012
        %v3406 = vunpack.c.h.b16 %v3012
        %v3407 = vunpack.c.l.b16 %v3013
        %v3408 = vunpack.c.h.b16 %v3013
        %v3409 = vunpack.c.l.b16 %v3014
        %v3410 = vunpack.c.h.b16 %v3014
        %v3411 = vunpack.c.l.b16 %v3015
        %v3412 = vunpack.c.h.b16 %v3015
        %v3413 = vunpack.c.l.b16 %v3016
        %v3414 = vunpack.c.h.b16 %v3016
        %v3415 = vunpack.c.l.b16 %v3017
        %v3416 = vunpack.c.h.b16 %v3017
        %v3417 = vunpack.c.l.b16 %v3018
        %v3418 = vunpack.c.h.b16 %v3018
        %v3419 = vunpack.c.l.b16 %v3019
        %v3420 = vunpack.c.h.b16 %v3019
        %v3421 = vunpack.c.l.b16 %v3020
        %v3422 = vunpack.c.h.b16 %v3020
        %v3423 = vunpack.c.l.b16 %v3021
        %v3424 = vunpack.c.h.b16 %v3021
        %v3425 = vunpack.c.l.b16 %v3022
        %v3426 = vunpack.c.h.b16 %v3022
        %v3427 = vunpack.c.l.b16 %v3023
        %v3428 = vunpack.c.h.b16 %v3023
        %v3429 = vunpack.c.l.b16 %v3024
        %v3430 = vunpack.c.h.b16 %v3024
        %v3431 = vpack.c.b16 %v3179, %v3175
        %v3432 = vpack.c.b16 %v3180, %v3176
        %v3433 = vpack.c.b16 %v3181, %v3177
        %v3434 = vpack.c.b16 %v3182, %v3178
        %v3435 = vpack.c.b16 %v3187, %v3183
        %v3436 = vpack.c.b16 %v3188, %v3184
        %v3437 = vpack.c.b16 %v3189, %v3185
        %v3438 = vpack.c.b16 %v3190, %v3186
        %v3439 = vpack.c.b16 %v3195, %v3191
        %v3440 = vpack.c.b16 %v3196, %v3192
        %v3441 = vpack.c.b16 %v3197, %v3193
        %v3442 = vpack.c.b16 %v3198, %v3194
        %v3443 = vpack.c.b16 %v3203, %v3199
        %v3444 = vpack.c.b16 %v3204, %v3200
        %v3445 = vpack.c.b16 %v3205, %v3201
        %v3446 = vpack.c.b16 %v3206, %v3202
        %v3447 = vpack.c.b16 %v3211, %v3207
        %v3448 = vpack.c.b16 %v3212, %v3208
        %v3449 = vpack.c.b16 %v3213, %v3209
        %v3450 = vpack.c.b16 %v3214, %v3210
        %v3451 = vpack.c.b16 %v3219, %v3215
        %v3452 = vpack.c.b16 %v3220, %v3216
        %v3453 = vpack.c.b16 %v3221, %v3217
        %v3454 = vpack.c.b16 %v3222, %v3218
        %v3455 = vpack.c.b16 %v3227, %v3223
        %v3456 = vpack.c.b16 %v3228, %v3224
        %v3457 = vpack.c.b16 %v3229, %v3225
        %v3458 = vpack.c.b16 %v3230, %v3226
        %v3459 = vpack.c.b16 %v3235, %v3231
        %v3460 = vpack.c.b16 %v3236, %v3232
        %v3461 = vpack.c.b16 %v3237, %v3233
        %v3462 = vpack.c.b16 %v3238, %v3234
        %v3463 = vpack.c.b16 %v3243, %v3239
        %v3464 = vpack.c.b16 %v3244, %v3240
        %v3465 = vpack.c.b16 %v3245, %v3241
        %v3466 = vpack.c.b16 %v3246, %v3242
        %v3467 = vpack.c.b16 %v3251, %v3247
        %v3468 = vpack.c.b16 %v3252, %v3248
        %v3469 = vpack.c.b16 %v3253, %v3249
        %v3470 = vpack.c.b16 %v3254, %v3250
        %v3471 = vpack.c.b16 %v3259, %v3255
        %v3472 = vpack.c.b16 %v3260, %v3256
        %v3473 = vpack.c.b16 %v3261, %v3257
        %v3474 = vpack.c.b16 %v3262, %v3258
        %v3475 = vpack.c.b16 %v3267, %v3263
        %v3476 = vpack.c.b16 %v3268, %v3264
        %v3477 = vpack.c.b16 %v3269, %v3265
        %v3478 = vpack.c.b16 %v3270, %v3266
        %v3479 = vpack.c.b16 %v3275, %v3271
        %v3480 = vpack.c.b16 %v3276, %v3272
        %v3481 = vpack.c.b16 %v3277, %v3273
        %v3482 = vpack.c.b16 %v3278, %v3274
        %v3483 = vpack.c.b16 %v3283, %v3279
        %v3484 = vpack.c.b16 %v3284, %v3280
        %v3485 = vpack.c.b16 %v3285, %v3281
        %v3486 = vpack.c.b16 %v3286, %v3282
        %v3487 = vpack.c.b16 %v3291, %v3287
        %v3488 = vpack.c.b16 %v3292, %v3288
        %v3489 = vpack.c.b16 %v3293, %v3289
        %v3490 = vpack.c.b16 %v3294, %v3290
        %v3491 = vpack.c.b16 %v3299, %v3295
        %v3492 = vpack.c.b16 %v3300, %v3296
        %v3493 = vpack.c.b16 %v3301, %v3297
        %v3494 = vpack.c.b16 %v3302, %v3298
        %v3495 = vpack.c.b16 %v3307, %v3303
        %v3496 = vpack.c.b16 %v3308, %v3304
        %v3497 = vpack.c.b16 %v3309, %v3305
        %v3498 = vpack.c.b16 %v3310, %v3306
        %v3499 = vpack.c.b16 %v3315, %v3311
        %v3500 = vpack.c.b16 %v3316, %v3312
        %v3501 = vpack.c.b16 %v3317, %v3313
        %v3502 = vpack.c.b16 %v3318, %v3314
        %v3503 = vpack.c.b16 %v3323, %v3319
        %v3504 = vpack.c.b16 %v3324, %v3320
        %v3505 = vpack.c.b16 %v3325, %v3321
        %v3506 = vpack.c.b16 %v3326, %v3322
        %v3507 = vpack.c.b16 %v3331, %v3327
        %v3508 = vpack.c.b16 %v3332, %v3328
        %v3509 = vpack.c.b16 %v3333, %v3329
        %v3510 = vpack.c.b16 %v3334, %v3330
        %v3511 = vpack.c.b16 %v3339, %v3335
        %v3512 = vpack.c.b16 %v3340, %v3336
        %v3513 = vpack.c.b16 %v3341, %v3337
        %v3514 = vpack.c.b16 %v3342, %v3338
        %v3515 = vpack.c.b16 %v3347, %v3343
        %v3516 = vpack.c.b16 %v3348, %v3344
        %v3517 = vpack.c.b16 %v3349, %v3345
        %v3518 = vpack.c.b16 %v3350, %v3346
        %v3519 = vpack.c.b16 %v3355, %v3351
        %v3520 = vpack.c.b16 %v3356, %v3352
        %v3521 = vpack.c.b16 %v3357, %v3353
        %v3522 = vpack.c.b16 %v3358, %v3354
        %v3523 = vpack.c.b16 %v3363, %v3359
        %v3524 = vpack.c.b16 %v3364, %v3360
        %v3525 = vpack.c.b16 %v3365, %v3361
        %v3526 = vpack.c.b16 %v3366, %v3362
        %v3527 = vpack.c.b16 %v3371, %v3367
        %v3528 = vpack.c.b16 %v3372, %v3368
        %v3529 = vpack.c.b16 %v3373, %v3369
        %v3530 = vpack.c.b16 %v3374, %v3370
        %v3531 = vpack.c.b16 %v3379, %v3375
        %v3532 = vpack.c.b16 %v3380, %v3376
        %v3533 = vpack.c.b16 %v3381, %v3377
        %v3534 = vpack.c.b16 %v3382, %v3378
        %v3535 = vpack.c.b16 %v3387, %v3383
        %v3536 = vpack.c.b16 %v3388, %v3384
        %v3537 = vpack.c.b16 %v3389, %v3385
        %v3538 = vpack.c.b16 %v3390, %v3386
        %v3539 = vpack.c.b16 %v3395, %v3391
        %v3540 = vpack.c.b16 %v3396, %v3392
        %v3541 = vpack.c.b16 %v3397, %v3393
        %v3542 = vpack.c.b16 %v3398, %v3394
        %v3543 = vpack.c.b16 %v3403, %v3399
        %v3544 = vpack.c.b16 %v3404, %v3400
        %v3545 = vpack.c.b16 %v3405, %v3401
        %v3546 = vpack.c.b16 %v3406, %v3402
        %v3547 = vpack.c.b16 %v3411, %v3407
        %v3548 = vpack.c.b16 %v3412, %v3408
        %v3549 = vpack.c.b16 %v3413, %v3409
        %v3550 = vpack.c.b16 %v3414, %v3410
        %v3551 = vpack.c.b16 %v3419, %v3415
        %v3552 = vpack.c.b16 %v3420, %v3416
        %v3553 = vpack.c.b16 %v3421, %v3417
        %v3554 = vpack.c.b16 %v3422, %v3418
        %v3555 = vpack.c.b16 %v3427, %v3423
        %v3556 = vpack.c.b16 %v3428, %v3424
        %v3557 = vpack.c.b16 %v3429, %v3425
        %v3558 = vpack.c.b16 %v3430, %v3426
        %3687 = vmatprep.subr.bf16.mxu0 %v3460
        %3688 = vmatpush1.bf16.msra.mxu0 %v3459
        %3689 = vmatprep.subr.bf16.mxu0 %v3456
        %3690 = vmatpush1.bf16.msra.mxu0 %v3455
        %3691 = vmatprep.subr.bf16.mxu0 %v3452
        %3692 = vmatpush1.bf16.msra.mxu0 %v3451
        %3693 = vmatprep.subr.bf16.mxu0 %v3448
        %3694 = vmatpush1.bf16.msra.mxu0 %v3447
        %3695 = vmatprep.subr.bf16.mxu0 %v3444
        %3696 = vmatpush1.bf16.msra.mxu0 %v3443
        %3697 = vmatprep.subr.bf16.mxu0 %v3440
        %3698 = vmatpush1.bf16.msra.mxu0 %v3439
        %3699 = vmatprep.subr.bf16.mxu0 %v3436
        %3700 = vmatpush1.bf16.msra.mxu0 %v3435
        %3701 = vmatprep.subr.bf16.mxu0 %v3432
        %3702 = vmatpush1.bf16.msra.mxu0 %v3431
        %3703 = vmatprep.subr.bf16.mxu0 %v3492
        %3704 = vmatpush2.bf16.msra.mxu0 %v3491
        %3705 = vmatprep.subr.bf16.mxu0 %v3488
        %3706 = vmatpush2.bf16.msra.mxu0 %v3487
        %3707 = vmatprep.subr.bf16.mxu0 %v3484
        %3708 = vmatpush2.bf16.msra.mxu0 %v3483
        %3709 = vmatprep.subr.bf16.mxu0 %v3480
        %3710 = vmatpush2.bf16.msra.mxu0 %v3479
        %3711 = vmatprep.subr.bf16.mxu0 %v3476
        %3712 = vmatpush2.bf16.msra.mxu0 %v3475
        %3713 = vmatprep.subr.bf16.mxu0 %v3472
        %3714 = vmatpush2.bf16.msra.mxu0 %v3471
        %3715 = vmatprep.subr.bf16.mxu0 %v3468
        %3716 = vmatpush2.bf16.msra.mxu0 %v3467
        %3717 = vmatprep.subr.bf16.mxu0 %v3464
        %3718 = vmatpush2.bf16.msra.mxu0 %v3463
        %3719 = vmatprep.mubr.bf16.mxu0 %v2894
        %3720 = vmatmul.mubr.bf16.gmra.mxu0 %v2893
        %v3721 = vpop.f32.mrf.mxu0
        %v3722 = vadd.f32 %v3030, %v3721
        %v3723 = vpop.f32.mrf.mxu0
        %v3724 = vadd.f32 %v3034, %v3723
        %v3725 = vpop.f32.mrf.mxu0
        %v3726 = vpop.f32.mrf.mxu0
        %3727 = vdwg.mxu0
        %3728 = vmatprep.subr.bf16.mxu0 %v3524
        %3729 = vmatpush1.bf16.msra.mxu0 %v3523
        %3730 = vmatprep.subr.bf16.mxu0 %v3520
        %3731 = vmatpush1.bf16.msra.mxu0 %v3519
        %3732 = vmatprep.subr.bf16.mxu0 %v3516
        %3733 = vmatpush1.bf16.msra.mxu0 %v3515
        %3734 = vmatprep.subr.bf16.mxu0 %v3512
        %3735 = vmatpush1.bf16.msra.mxu0 %v3511
        %3736 = vmatprep.subr.bf16.mxu0 %v3508
        %3737 = vmatpush1.bf16.msra.mxu0 %v3507
        %3738 = vmatprep.subr.bf16.mxu0 %v3504
        %3739 = vmatpush1.bf16.msra.mxu0 %v3503
        %3740 = vmatprep.subr.bf16.mxu0 %v3500
        %3741 = vmatpush1.bf16.msra.mxu0 %v3499
        %3742 = vmatprep.subr.bf16.mxu0 %v3496
        %3743 = vmatpush1.bf16.msra.mxu0 %v3495
        %3744 = vmatprep.subr.bf16.mxu0 %v3556
        %3745 = vmatpush2.bf16.msra.mxu0 %v3555
        %3746 = vmatprep.subr.bf16.mxu0 %v3552
        %3747 = vmatpush2.bf16.msra.mxu0 %v3551
        %3748 = vmatprep.subr.bf16.mxu0 %v3548
        %3749 = vmatpush2.bf16.msra.mxu0 %v3547
        %3750 = vmatprep.subr.bf16.mxu0 %v3544
        %3751 = vmatpush2.bf16.msra.mxu0 %v3543
        %3752 = vmatprep.subr.bf16.mxu0 %v3540
        %3753 = vmatpush2.bf16.msra.mxu0 %v3539
        %3754 = vmatprep.subr.bf16.mxu0 %v3536
        %3755 = vmatpush2.bf16.msra.mxu0 %v3535
        %3756 = vmatprep.subr.bf16.mxu0 %v3532
        %3757 = vmatpush2.bf16.msra.mxu0 %v3531
        %3758 = vmatprep.subr.bf16.mxu0 %v3528
        %3759 = vmatpush2.bf16.msra.mxu0 %v3527
        %3760 = vmatprep.mubr.bf16.mxu0 %v2896
        %3761 = vmatmul.mubr.bf16.gmra.mxu0 %v2895
        %v3762 = vpop.f32.mrf.mxu0
        %v3763 = vadd.f32 %v3722, %v3762
        %v3764 = vpop.f32.mrf.mxu0
        %v3765 = vadd.f32 %v3724, %v3764
        %v3766 = vpop.f32.mrf.mxu0
        %v3767 = vpop.f32.mrf.mxu0
        %3768 = vdwg.mxu0
        %3769 = vmatprep.subr.bf16.mxu0 %v3462
        %3770 = vmatpush1.bf16.msra.mxu0 %v3461
        %3771 = vmatprep.subr.bf16.mxu0 %v3458
        %3772 = vmatpush1.bf16.msra.mxu0 %v3457
        %3773 = vmatprep.subr.bf16.mxu0 %v3454
        %3774 = vmatpush1.bf16.msra.mxu0 %v3453
        %3775 = vmatprep.subr.bf16.mxu0 %v3450
        %3776 = vmatpush1.bf16.msra.mxu0 %v3449
        %3777 = vmatprep.subr.bf16.mxu0 %v3446
        %3778 = vmatpush1.bf16.msra.mxu0 %v3445
        %3779 = vmatprep.subr.bf16.mxu0 %v3442
        %3780 = vmatpush1.bf16.msra.mxu0 %v3441
        %3781 = vmatprep.subr.bf16.mxu0 %v3438
        %3782 = vmatpush1.bf16.msra.mxu0 %v3437
        %3783 = vmatprep.subr.bf16.mxu0 %v3434
        %3784 = vmatpush1.bf16.msra.mxu0 %v3433
        %3785 = vmatprep.subr.bf16.mxu0 %v3494
        %3786 = vmatpush2.bf16.msra.mxu0 %v3493
        %3787 = vmatprep.subr.bf16.mxu0 %v3490
        %3788 = vmatpush2.bf16.msra.mxu0 %v3489
        %3789 = vmatprep.subr.bf16.mxu0 %v3486
        %3790 = vmatpush2.bf16.msra.mxu0 %v3485
        %3791 = vmatprep.subr.bf16.mxu0 %v3482
        %3792 = vmatpush2.bf16.msra.mxu0 %v3481
        %3793 = vmatprep.subr.bf16.mxu0 %v3478
        %3794 = vmatpush2.bf16.msra.mxu0 %v3477
        %3795 = vmatprep.subr.bf16.mxu0 %v3474
        %3796 = vmatpush2.bf16.msra.mxu0 %v3473
        %3797 = vmatprep.subr.bf16.mxu0 %v3470
        %3798 = vmatpush2.bf16.msra.mxu0 %v3469
        %3799 = vmatprep.subr.bf16.mxu0 %v3466
        %3800 = vmatpush2.bf16.msra.mxu0 %v3465
        %3801 = vmatprep.mubr.bf16.mxu0 %v2894
        %3802 = vmatmul.mubr.bf16.gmra.mxu0 %v2893
        %v3803 = vpop.f32.mrf.mxu0
        %v3804 = vadd.f32 %v3038, %v3803
        %v3805 = vpop.f32.mrf.mxu0
        %v3806 = vadd.f32 %v3042, %v3805
        %v3807 = vpop.f32.mrf.mxu0
        %v3808 = vpop.f32.mrf.mxu0
        %3809 = vdwg.mxu0
        %3810 = vmatprep.subr.bf16.mxu0 %v3526
        %3811 = vmatpush1.bf16.msra.mxu0 %v3525
        %3812 = vmatprep.subr.bf16.mxu0 %v3522
        %3813 = vmatpush1.bf16.msra.mxu0 %v3521
        %3814 = vmatprep.subr.bf16.mxu0 %v3518
        %3815 = vmatpush1.bf16.msra.mxu0 %v3517
        %3816 = vmatprep.subr.bf16.mxu0 %v3514
        %3817 = vmatpush1.bf16.msra.mxu0 %v3513
        %3818 = vmatprep.subr.bf16.mxu0 %v3510
        %3819 = vmatpush1.bf16.msra.mxu0 %v3509
        %3820 = vmatprep.subr.bf16.mxu0 %v3506
        %3821 = vmatpush1.bf16.msra.mxu0 %v3505
        %3822 = vmatprep.subr.bf16.mxu0 %v3502
        %3823 = vmatpush1.bf16.msra.mxu0 %v3501
        %3824 = vmatprep.subr.bf16.mxu0 %v3498
        %3825 = vmatpush1.bf16.msra.mxu0 %v3497
        %3826 = vmatprep.subr.bf16.mxu0 %v3558
        %3827 = vmatpush2.bf16.msra.mxu0 %v3557
        %3828 = vmatprep.subr.bf16.mxu0 %v3554
        %3829 = vmatpush2.bf16.msra.mxu0 %v3553
        %3830 = vmatprep.subr.bf16.mxu0 %v3550
        %3831 = vmatpush2.bf16.msra.mxu0 %v3549
        %3832 = vmatprep.subr.bf16.mxu0 %v3546
        %3833 = vmatpush2.bf16.msra.mxu0 %v3545
        %3834 = vmatprep.subr.bf16.mxu0 %v3542
        %3835 = vmatpush2.bf16.msra.mxu0 %v3541
        %3836 = vmatprep.subr.bf16.mxu0 %v3538
        %3837 = vmatpush2.bf16.msra.mxu0 %v3537
        %3838 = vmatprep.subr.bf16.mxu0 %v3534
        %3839 = vmatpush2.bf16.msra.mxu0 %v3533
        %3840 = vmatprep.subr.bf16.mxu0 %v3530
        %3841 = vmatpush2.bf16.msra.mxu0 %v3529
        %3842 = vmatprep.mubr.bf16.mxu0 %v2896
        %3843 = vmatmul.mubr.bf16.gmra.mxu0 %v2895
        %v3844 = vpop.f32.mrf.mxu0
        %v3845 = vadd.f32 %v3804, %v3844
        %v3846 = vpop.f32.mrf.mxu0
        %v3847 = vadd.f32 %v3806, %v3846
        %v3848 = vpop.f32.mrf.mxu0
        %v3849 = vpop.f32.mrf.mxu0
        %3850 = vdwg.mxu0
        %v3851 = vmul.f32 %v3763, 0.5
        %v3852 = vmul.f32 %v3765, 0.5
        %v3853 = vmul.f32 %v3845, 0.5
        %v3854 = vmul.f32 %v3847, 0.5
        %v3855 = vmul.f32 %v3763, 0.70710677
        %v3856 = vmul.f32 %v3765, 0.70710677
        %v3857 = vmul.f32 %v3845, 0.70710677
        %v3858 = vmul.f32 %v3847, 0.70710677
        %vm3859 = vcmp.ge.f32.partialorder %v3855, 0.0
        %vm3860 = vcmp.ge.f32.partialorder %v3856, 0.0
        %vm3861 = vcmp.ge.f32.partialorder %v3857, 0.0
        %vm3862 = vcmp.ge.f32.partialorder %v3858, 0.0
        %v3863 = vsel %vm3859, 1.0, -1.0
        %v3864 = vsel %vm3860, 1.0, -1.0
        %v3865 = vsel %vm3861, 1.0, -1.0
        %v3866 = vsel %vm3862, 1.0, -1.0
        %v3867 = vand.u32 2147483647, %v3855
        %v3868 = vand.u32 2147483647, %v3856
        %v3869 = vand.u32 2147483647, %v3857
        %v3870 = vand.u32 2147483647, %v3858
        %v3871 = vmul.f32 %v3867, 0.3275911
        %v3872 = vmul.f32 %v3868, 0.3275911
        %v3873 = vmul.f32 %v3869, 0.3275911
        %v3874 = vmul.f32 %v3870, 0.3275911
        %v3875 = vadd.f32 %v3871, 1.0
        %v3876 = vadd.f32 %v3872, 1.0
        %v3877 = vadd.f32 %v3873, 1.0
        %v3878 = vadd.f32 %v3874, 1.0
        %v3879 = vrcp.pop %v3875
        %v3880 = vrcp.pop %v3876
        %v3881 = vrcp.pop %v3877
        %v3882 = vrcp.pop %v3878
        %v3883 = vmul.f32 %v3879, 1.0614054
        %v3884 = vmul.f32 %v3880, 1.0614054
        %v3885 = vmul.f32 %v3881, 1.0614054
        %v3886 = vmul.f32 %v3882, 1.0614054
        %v3887 = vadd.f32 %v3883, -1.4531521
        %v3888 = vadd.f32 %v3884, -1.4531521
        %v3889 = vadd.f32 %v3885, -1.4531521
        %v3890 = vadd.f32 %v3886, -1.4531521
        %v3891 = vmul.f32 %v3887, %v3879
        %v3892 = vmul.f32 %v3888, %v3880
        %v3893 = vmul.f32 %v3889, %v3881
        %v3894 = vmul.f32 %v3890, %v3882
        %v3895 = vadd.f32 %v3891, 1.4214138
        %v3896 = vadd.f32 %v3892, 1.4214138
        %v3897 = vadd.f32 %v3893, 1.4214138
        %v3898 = vadd.f32 %v3894, 1.4214138
        %v3899 = vmul.f32 %v3895, %v3879
        %v3900 = vmul.f32 %v3896, %v3880
        %v3901 = vmul.f32 %v3897, %v3881
        %v3902 = vmul.f32 %v3898, %v3882
        %v3903 = vadd.f32 %v3899, -0.28449672
        %v3904 = vadd.f32 %v3900, -0.28449672
        %v3905 = vadd.f32 %v3901, -0.28449672
        %v3906 = vadd.f32 %v3902, -0.28449672
        %v3907 = vmul.f32 %v3903, %v3879
        %v3908 = vmul.f32 %v3904, %v3880
        %v3909 = vmul.f32 %v3905, %v3881
        %v3910 = vmul.f32 %v3906, %v3882
        %v3911 = vadd.f32 %v3907, 0.2548296
        %v3912 = vadd.f32 %v3908, 0.2548296
        %v3913 = vadd.f32 %v3909, 0.2548296
        %v3914 = vadd.f32 %v3910, 0.2548296
        %v3915 = vmul.f32 %v3911, %v3879
        %v3916 = vmul.f32 %v3912, %v3880
        %v3917 = vmul.f32 %v3913, %v3881
        %v3918 = vmul.f32 %v3914, %v3882
        %v3919 = vsub.f32 0.0, %v3867
        %v3920 = vsub.f32 0.0, %v3868
        %v3921 = vsub.f32 0.0, %v3869
        %v3922 = vsub.f32 0.0, %v3870
        %v3923 = vmul.f32 %v3919, %v3867
        %v3924 = vmul.f32 %v3920, %v3868
        %v3925 = vmul.f32 %v3921, %v3869
        %v3926 = vmul.f32 %v3922, %v3870
        %v3927 = vmul.f32 %v3923, 1.442695
        %v3928 = vpow.pop %v3927
        %v3929 = vmul.f32 %v3924, 1.442695
        %v3930 = vpow.pop %v3929
        %v3931 = vmul.f32 %v3925, 1.442695
        %v3932 = vpow.pop %v3931
        %v3933 = vmul.f32 %v3926, 1.442695
        %v3934 = vpow.pop %v3933
        %v3935 = vmul.f32 %v3915, %v3928
        %v3936 = vmul.f32 %v3916, %v3930
        %v3937 = vmul.f32 %v3917, %v3932
        %v3938 = vmul.f32 %v3918, %v3934
        %v3939 = vsub.f32 1.0, %v3935
        %v3940 = vsub.f32 1.0, %v3936
        %v3941 = vsub.f32 1.0, %v3937
        %v3942 = vsub.f32 1.0, %v3938
        %v3943 = vmul.f32 %v3863, %v3939
        %v3944 = vmul.f32 %v3864, %v3940
        %v3945 = vmul.f32 %v3865, %v3941
        %v3946 = vmul.f32 %v3866, %v3942
        %v3947 = vadd.f32 %v3943, 1.0
        %v3948 = vadd.f32 %v3944, 1.0
        %v3949 = vadd.f32 %v3945, 1.0
        %v3950 = vadd.f32 %v3946, 1.0
        %v3951 = vmul.f32 %v3851, %v3947
        %v3952 = vmul.f32 %v3852, %v3948
        %v3953 = vmul.f32 %v3853, %v3949
        %v3954 = vmul.f32 %v3854, %v3950
        %v3955 = vpack.c.bf16 %v3951, %v3951
        %v3956 = vpack.c.bf16 %v3952, %v3952
        %v3957 = vpack.c.bf16 %v3953, %v3953
        %v3958 = vpack.c.bf16 %v3954, %v3954
        %s3959 = scalar_lea.vmem %s404, 1024 [#allocation11]
        %v3960 = vld [vmem:[%s3959] sm:$0xff]
        %v3961 = vld [vmem:[%s3959 + $0x8] sm:$0xff]
        %v3962 = vld [vmem:[%s3959 + $0x10] sm:$0xff]
        %v3963 = vld [vmem:[%s3959 + $0x18] sm:$0xff]
        %v3964 = vld [vmem:[%s3959 + $0x20] sm:$0xff]
        %v3965 = vld [vmem:[%s3959 + $0x28] sm:$0xff]
        %v3966 = vld [vmem:[%s3959 + $0x30] sm:$0xff]
        %v3967 = vld [vmem:[%s3959 + $0x38] sm:$0xff]
        %v3968 = vld [vmem:[%s3959 + $0x40] sm:$0xff]
        %v3969 = vld [vmem:[%s3959 + $0x48] sm:$0xff]
        %v3970 = vld [vmem:[%s3959 + $0x50] sm:$0xff]
        %v3971 = vld [vmem:[%s3959 + $0x58] sm:$0xff]
        %v3972 = vld [vmem:[%s3959 + $0x60] sm:$0xff]
        %v3973 = vld [vmem:[%s3959 + $0x68] sm:$0xff]
        %v3974 = vld [vmem:[%s3959 + $0x70] sm:$0xff]
        %v3975 = vld [vmem:[%s3959 + $0x78] sm:$0xff]
        %v3976 = vld [vmem:[%s3959 + $0x80] sm:$0xff]
        %v3977 = vld [vmem:[%s3959 + $0x88] sm:$0xff]
        %v3978 = vld [vmem:[%s3959 + $0x90] sm:$0xff]
        %v3979 = vld [vmem:[%s3959 + $0x98] sm:$0xff]
        %v3980 = vld [vmem:[%s3959 + $0xa0] sm:$0xff]
        %v3981 = vld [vmem:[%s3959 + $0xa8] sm:$0xff]
        %v3982 = vld [vmem:[%s3959 + $0xb0] sm:$0xff]
        %v3983 = vld [vmem:[%s3959 + $0xb8] sm:$0xff]
        %v3984 = vld [vmem:[%s3959 + $0xc0] sm:$0xff]
        %v3985 = vld [vmem:[%s3959 + $0xc8] sm:$0xff]
        %v3986 = vld [vmem:[%s3959 + $0xd0] sm:$0xff]
        %v3987 = vld [vmem:[%s3959 + $0xd8] sm:$0xff]
        %v3988 = vld [vmem:[%s3959 + $0xe0] sm:$0xff]
        %v3989 = vld [vmem:[%s3959 + $0xe8] sm:$0xff]
        %v3990 = vld [vmem:[%s3959 + $0xf0] sm:$0xff]
        %v3991 = vld [vmem:[%s3959 + $0xf8] sm:$0xff]
        %v3992 = vld [vmem:[%s3959 + $0x100] sm:$0xff]
        %v3993 = vld [vmem:[%s3959 + $0x108] sm:$0xff]
        %v3994 = vld [vmem:[%s3959 + $0x110] sm:$0xff]
        %v3995 = vld [vmem:[%s3959 + $0x118] sm:$0xff]
        %v3996 = vld [vmem:[%s3959 + $0x120] sm:$0xff]
        %v3997 = vld [vmem:[%s3959 + $0x128] sm:$0xff]
        %v3998 = vld [vmem:[%s3959 + $0x130] sm:$0xff]
        %v3999 = vld [vmem:[%s3959 + $0x138] sm:$0xff]
        %v4000 = vld [vmem:[%s3959 + $0x140] sm:$0xff]
        %v4001 = vld [vmem:[%s3959 + $0x148] sm:$0xff]
        %v4002 = vld [vmem:[%s3959 + $0x150] sm:$0xff]
        %v4003 = vld [vmem:[%s3959 + $0x158] sm:$0xff]
        %v4004 = vld [vmem:[%s3959 + $0x160] sm:$0xff]
        %v4005 = vld [vmem:[%s3959 + $0x168] sm:$0xff]
        %v4006 = vld [vmem:[%s3959 + $0x170] sm:$0xff]
        %v4007 = vld [vmem:[%s3959 + $0x178] sm:$0xff]
        %v4008 = vld [vmem:[%s3959 + $0x180] sm:$0xff]
        %v4009 = vld [vmem:[%s3959 + $0x188] sm:$0xff]
        %v4010 = vld [vmem:[%s3959 + $0x190] sm:$0xff]
        %v4011 = vld [vmem:[%s3959 + $0x198] sm:$0xff]
        %v4012 = vld [vmem:[%s3959 + $0x1a0] sm:$0xff]
        %v4013 = vld [vmem:[%s3959 + $0x1a8] sm:$0xff]
        %v4014 = vld [vmem:[%s3959 + $0x1b0] sm:$0xff]
        %v4015 = vld [vmem:[%s3959 + $0x1b8] sm:$0xff]
        %v4016 = vld [vmem:[%s3959 + $0x1c0] sm:$0xff]
        %v4017 = vld [vmem:[%s3959 + $0x1c8] sm:$0xff]
        %v4018 = vld [vmem:[%s3959 + $0x1d0] sm:$0xff]
        %v4019 = vld [vmem:[%s3959 + $0x1d8] sm:$0xff]
        %v4020 = vld [vmem:[%s3959 + $0x1e0] sm:$0xff]
        %v4021 = vld [vmem:[%s3959 + $0x1e8] sm:$0xff]
        %v4022 = vld [vmem:[%s3959 + $0x1f0] sm:$0xff]
        %v4023 = vld [vmem:[%s3959 + $0x1f8] sm:$0xff]
        %v4024 = vld [vmem:[%s3959 + $0x200] sm:$0xff]
        %v4025 = vld [vmem:[%s3959 + $0x208] sm:$0xff]
        %v4026 = vld [vmem:[%s3959 + $0x210] sm:$0xff]
        %v4027 = vld [vmem:[%s3959 + $0x218] sm:$0xff]
        %v4028 = vld [vmem:[%s3959 + $0x220] sm:$0xff]
        %v4029 = vld [vmem:[%s3959 + $0x228] sm:$0xff]
        %v4030 = vld [vmem:[%s3959 + $0x230] sm:$0xff]
        %v4031 = vld [vmem:[%s3959 + $0x238] sm:$0xff]
        %v4032 = vld [vmem:[%s3959 + $0x240] sm:$0xff]
        %v4033 = vld [vmem:[%s3959 + $0x248] sm:$0xff]
        %v4034 = vld [vmem:[%s3959 + $0x250] sm:$0xff]
        %v4035 = vld [vmem:[%s3959 + $0x258] sm:$0xff]
        %v4036 = vld [vmem:[%s3959 + $0x260] sm:$0xff]
        %v4037 = vld [vmem:[%s3959 + $0x268] sm:$0xff]
        %v4038 = vld [vmem:[%s3959 + $0x270] sm:$0xff]
        %v4039 = vld [vmem:[%s3959 + $0x278] sm:$0xff]
        %v4040 = vld [vmem:[%s3959 + $0x280] sm:$0xff]
        %v4041 = vld [vmem:[%s3959 + $0x288] sm:$0xff]
        %v4042 = vld [vmem:[%s3959 + $0x290] sm:$0xff]
        %v4043 = vld [vmem:[%s3959 + $0x298] sm:$0xff]
        %v4044 = vld [vmem:[%s3959 + $0x2a0] sm:$0xff]
        %v4045 = vld [vmem:[%s3959 + $0x2a8] sm:$0xff]
        %v4046 = vld [vmem:[%s3959 + $0x2b0] sm:$0xff]
        %v4047 = vld [vmem:[%s3959 + $0x2b8] sm:$0xff]
        %v4048 = vld [vmem:[%s3959 + $0x2c0] sm:$0xff]
        %v4049 = vld [vmem:[%s3959 + $0x2c8] sm:$0xff]
        %v4050 = vld [vmem:[%s3959 + $0x2d0] sm:$0xff]
        %v4051 = vld [vmem:[%s3959 + $0x2d8] sm:$0xff]
        %v4052 = vld [vmem:[%s3959 + $0x2e0] sm:$0xff]
        %v4053 = vld [vmem:[%s3959 + $0x2e8] sm:$0xff]
        %v4054 = vld [vmem:[%s3959 + $0x2f0] sm:$0xff]
        %v4055 = vld [vmem:[%s3959 + $0x2f8] sm:$0xff]
        %v4056 = vld [vmem:[%s3959 + $0x300] sm:$0xff]
        %v4057 = vld [vmem:[%s3959 + $0x308] sm:$0xff]
        %v4058 = vld [vmem:[%s3959 + $0x310] sm:$0xff]
        %v4059 = vld [vmem:[%s3959 + $0x318] sm:$0xff]
        %v4060 = vld [vmem:[%s3959 + $0x320] sm:$0xff]
        %v4061 = vld [vmem:[%s3959 + $0x328] sm:$0xff]
        %v4062 = vld [vmem:[%s3959 + $0x330] sm:$0xff]
        %v4063 = vld [vmem:[%s3959 + $0x338] sm:$0xff]
        %v4064 = vld [vmem:[%s3959 + $0x340] sm:$0xff]
        %v4065 = vld [vmem:[%s3959 + $0x348] sm:$0xff]
        %v4066 = vld [vmem:[%s3959 + $0x350] sm:$0xff]
        %v4067 = vld [vmem:[%s3959 + $0x358] sm:$0xff]
        %v4068 = vld [vmem:[%s3959 + $0x360] sm:$0xff]
        %v4069 = vld [vmem:[%s3959 + $0x368] sm:$0xff]
        %v4070 = vld [vmem:[%s3959 + $0x370] sm:$0xff]
        %v4071 = vld [vmem:[%s3959 + $0x378] sm:$0xff]
        %v4072 = vld [vmem:[%s3959 + $0x380] sm:$0xff]
        %v4073 = vld [vmem:[%s3959 + $0x388] sm:$0xff]
        %v4074 = vld [vmem:[%s3959 + $0x390] sm:$0xff]
        %v4075 = vld [vmem:[%s3959 + $0x398] sm:$0xff]
        %v4076 = vld [vmem:[%s3959 + $0x3a0] sm:$0xff]
        %v4077 = vld [vmem:[%s3959 + $0x3a8] sm:$0xff]
        %v4078 = vld [vmem:[%s3959 + $0x3b0] sm:$0xff]
        %v4079 = vld [vmem:[%s3959 + $0x3b8] sm:$0xff]
        %v4080 = vld [vmem:[%s3959 + $0x3c0] sm:$0xff]
        %v4081 = vld [vmem:[%s3959 + $0x3c8] sm:$0xff]
        %v4082 = vld [vmem:[%s3959 + $0x3d0] sm:$0xff]
        %v4083 = vld [vmem:[%s3959 + $0x3d8] sm:$0xff]
        %v4084 = vld [vmem:[%s3959 + $0x3e0] sm:$0xff]
        %v4085 = vld [vmem:[%s3959 + $0x3e8] sm:$0xff]
        %v4086 = vld [vmem:[%s3959 + $0x3f0] sm:$0xff]
        %v4087 = vld [vmem:[%s3959 + $0x3f8] sm:$0xff]
        %s4088 = scalar_lea.vmem %s413, 4 [#allocation12]
        %v4089 = vld [vmem:[%s4088] sm:$0xf]
        %v4091 = vlaneseq
        %v4092 = vshrl.u32 %v4091, 7
        %v4093 = vsub.s32 0, %v4092
        %v4094 = vrot.slane %v4089, %v4093
        %v4095 = vlaneseq
        %v4096 = vshrl.u32 %v4095, 7
        %v4097 = vsub.s32 1, %v4096
        %v4098 = vrot.slane %v4089, %v4097
        %v4099 = vlaneseq
        %v4100 = vshrl.u32 %v4099, 7
        %v4101 = vsub.s32 2, %v4100
        %v4102 = vrot.slane %v4089, %v4101
        %v4103 = vlaneseq
        %v4104 = vshrl.u32 %v4103, 7
        %v4105 = vsub.s32 3, %v4104
        %v4106 = vrot.slane %v4089, %v4105
        %v4239 = vunpack.c.l.b16 %v3960
        %v4240 = vunpack.c.h.b16 %v3960
        %v4241 = vunpack.c.l.b16 %v3961
        %v4242 = vunpack.c.h.b16 %v3961
        %v4243 = vunpack.c.l.b16 %v3962
        %v4244 = vunpack.c.h.b16 %v3962
        %v4245 = vunpack.c.l.b16 %v3963
        %v4246 = vunpack.c.h.b16 %v3963
        %v4247 = vunpack.c.l.b16 %v3964
        %v4248 = vunpack.c.h.b16 %v3964
        %v4249 = vunpack.c.l.b16 %v3965
        %v4250 = vunpack.c.h.b16 %v3965
        %v4251 = vunpack.c.l.b16 %v3966
        %v4252 = vunpack.c.h.b16 %v3966
        %v4253 = vunpack.c.l.b16 %v3967
        %v4254 = vunpack.c.h.b16 %v3967
        %v4255 = vunpack.c.l.b16 %v3968
        %v4256 = vunpack.c.h.b16 %v3968
        %v4257 = vunpack.c.l.b16 %v3969
        %v4258 = vunpack.c.h.b16 %v3969
        %v4259 = vunpack.c.l.b16 %v3970
        %v4260 = vunpack.c.h.b16 %v3970
        %v4261 = vunpack.c.l.b16 %v3971
        %v4262 = vunpack.c.h.b16 %v3971
        %v4263 = vunpack.c.l.b16 %v3972
        %v4264 = vunpack.c.h.b16 %v3972
        %v4265 = vunpack.c.l.b16 %v3973
        %v4266 = vunpack.c.h.b16 %v3973
        %v4267 = vunpack.c.l.b16 %v3974
        %v4268 = vunpack.c.h.b16 %v3974
        %v4269 = vunpack.c.l.b16 %v3975
        %v4270 = vunpack.c.h.b16 %v3975
        %v4271 = vunpack.c.l.b16 %v3976
        %v4272 = vunpack.c.h.b16 %v3976
        %v4273 = vunpack.c.l.b16 %v3977
        %v4274 = vunpack.c.h.b16 %v3977
        %v4275 = vunpack.c.l.b16 %v3978
        %v4276 = vunpack.c.h.b16 %v3978
        %v4277 = vunpack.c.l.b16 %v3979
        %v4278 = vunpack.c.h.b16 %v3979
        %v4279 = vunpack.c.l.b16 %v3980
        %v4280 = vunpack.c.h.b16 %v3980
        %v4281 = vunpack.c.l.b16 %v3981
        %v4282 = vunpack.c.h.b16 %v3981
        %v4283 = vunpack.c.l.b16 %v3982
        %v4284 = vunpack.c.h.b16 %v3982
        %v4285 = vunpack.c.l.b16 %v3983
        %v4286 = vunpack.c.h.b16 %v3983
        %v4287 = vunpack.c.l.b16 %v3984
        %v4288 = vunpack.c.h.b16 %v3984
        %v4289 = vunpack.c.l.b16 %v3985
        %v4290 = vunpack.c.h.b16 %v3985
        %v4291 = vunpack.c.l.b16 %v3986
        %v4292 = vunpack.c.h.b16 %v3986
        %v4293 = vunpack.c.l.b16 %v3987
        %v4294 = vunpack.c.h.b16 %v3987
        %v4295 = vunpack.c.l.b16 %v3988
        %v4296 = vunpack.c.h.b16 %v3988
        %v4297 = vunpack.c.l.b16 %v3989
        %v4298 = vunpack.c.h.b16 %v3989
        %v4299 = vunpack.c.l.b16 %v3990
        %v4300 = vunpack.c.h.b16 %v3990
        %v4301 = vunpack.c.l.b16 %v3991
        %v4302 = vunpack.c.h.b16 %v3991
        %v4303 = vunpack.c.l.b16 %v3992
        %v4304 = vunpack.c.h.b16 %v3992
        %v4305 = vunpack.c.l.b16 %v3993
        %v4306 = vunpack.c.h.b16 %v3993
        %v4307 = vunpack.c.l.b16 %v3994
        %v4308 = vunpack.c.h.b16 %v3994
        %v4309 = vunpack.c.l.b16 %v3995
        %v4310 = vunpack.c.h.b16 %v3995
        %v4311 = vunpack.c.l.b16 %v3996
        %v4312 = vunpack.c.h.b16 %v3996
        %v4313 = vunpack.c.l.b16 %v3997
        %v4314 = vunpack.c.h.b16 %v3997
        %v4315 = vunpack.c.l.b16 %v3998
        %v4316 = vunpack.c.h.b16 %v3998
        %v4317 = vunpack.c.l.b16 %v3999
        %v4318 = vunpack.c.h.b16 %v3999
        %v4319 = vunpack.c.l.b16 %v4000
        %v4320 = vunpack.c.h.b16 %v4000
        %v4321 = vunpack.c.l.b16 %v4001
        %v4322 = vunpack.c.h.b16 %v4001
        %v4323 = vunpack.c.l.b16 %v4002
        %v4324 = vunpack.c.h.b16 %v4002
        %v4325 = vunpack.c.l.b16 %v4003
        %v4326 = vunpack.c.h.b16 %v4003
        %v4327 = vunpack.c.l.b16 %v4004
        %v4328 = vunpack.c.h.b16 %v4004
        %v4329 = vunpack.c.l.b16 %v4005
        %v4330 = vunpack.c.h.b16 %v4005
        %v4331 = vunpack.c.l.b16 %v4006
        %v4332 = vunpack.c.h.b16 %v4006
        %v4333 = vunpack.c.l.b16 %v4007
        %v4334 = vunpack.c.h.b16 %v4007
        %v4335 = vunpack.c.l.b16 %v4008
        %v4336 = vunpack.c.h.b16 %v4008
        %v4337 = vunpack.c.l.b16 %v4009
        %v4338 = vunpack.c.h.b16 %v4009
        %v4339 = vunpack.c.l.b16 %v4010
        %v4340 = vunpack.c.h.b16 %v4010
        %v4341 = vunpack.c.l.b16 %v4011
        %v4342 = vunpack.c.h.b16 %v4011
        %v4343 = vunpack.c.l.b16 %v4012
        %v4344 = vunpack.c.h.b16 %v4012
        %v4345 = vunpack.c.l.b16 %v4013
        %v4346 = vunpack.c.h.b16 %v4013
        %v4347 = vunpack.c.l.b16 %v4014
        %v4348 = vunpack.c.h.b16 %v4014
        %v4349 = vunpack.c.l.b16 %v4015
        %v4350 = vunpack.c.h.b16 %v4015
        %v4351 = vunpack.c.l.b16 %v4016
        %v4352 = vunpack.c.h.b16 %v4016
        %v4353 = vunpack.c.l.b16 %v4017
        %v4354 = vunpack.c.h.b16 %v4017
        %v4355 = vunpack.c.l.b16 %v4018
        %v4356 = vunpack.c.h.b16 %v4018
        %v4357 = vunpack.c.l.b16 %v4019
        %v4358 = vunpack.c.h.b16 %v4019
        %v4359 = vunpack.c.l.b16 %v4020
        %v4360 = vunpack.c.h.b16 %v4020
        %v4361 = vunpack.c.l.b16 %v4021
        %v4362 = vunpack.c.h.b16 %v4021
        %v4363 = vunpack.c.l.b16 %v4022
        %v4364 = vunpack.c.h.b16 %v4022
        %v4365 = vunpack.c.l.b16 %v4023
        %v4366 = vunpack.c.h.b16 %v4023
        %v4367 = vunpack.c.l.b16 %v4024
        %v4368 = vunpack.c.h.b16 %v4024
        %v4369 = vunpack.c.l.b16 %v4025
        %v4370 = vunpack.c.h.b16 %v4025
        %v4371 = vunpack.c.l.b16 %v4026
        %v4372 = vunpack.c.h.b16 %v4026
        %v4373 = vunpack.c.l.b16 %v4027
        %v4374 = vunpack.c.h.b16 %v4027
        %v4375 = vunpack.c.l.b16 %v4028
        %v4376 = vunpack.c.h.b16 %v4028
        %v4377 = vunpack.c.l.b16 %v4029
        %v4378 = vunpack.c.h.b16 %v4029
        %v4379 = vunpack.c.l.b16 %v4030
        %v4380 = vunpack.c.h.b16 %v4030
        %v4381 = vunpack.c.l.b16 %v4031
        %v4382 = vunpack.c.h.b16 %v4031
        %v4383 = vunpack.c.l.b16 %v4032
        %v4384 = vunpack.c.h.b16 %v4032
        %v4385 = vunpack.c.l.b16 %v4033
        %v4386 = vunpack.c.h.b16 %v4033
        %v4387 = vunpack.c.l.b16 %v4034
        %v4388 = vunpack.c.h.b16 %v4034
        %v4389 = vunpack.c.l.b16 %v4035
        %v4390 = vunpack.c.h.b16 %v4035
        %v4391 = vunpack.c.l.b16 %v4036
        %v4392 = vunpack.c.h.b16 %v4036
        %v4393 = vunpack.c.l.b16 %v4037
        %v4394 = vunpack.c.h.b16 %v4037
        %v4395 = vunpack.c.l.b16 %v4038
        %v4396 = vunpack.c.h.b16 %v4038
        %v4397 = vunpack.c.l.b16 %v4039
        %v4398 = vunpack.c.h.b16 %v4039
        %v4399 = vunpack.c.l.b16 %v4040
        %v4400 = vunpack.c.h.b16 %v4040
        %v4401 = vunpack.c.l.b16 %v4041
        %v4402 = vunpack.c.h.b16 %v4041
        %v4403 = vunpack.c.l.b16 %v4042
        %v4404 = vunpack.c.h.b16 %v4042
        %v4405 = vunpack.c.l.b16 %v4043
        %v4406 = vunpack.c.h.b16 %v4043
        %v4407 = vunpack.c.l.b16 %v4044
        %v4408 = vunpack.c.h.b16 %v4044
        %v4409 = vunpack.c.l.b16 %v4045
        %v4410 = vunpack.c.h.b16 %v4045
        %v4411 = vunpack.c.l.b16 %v4046
        %v4412 = vunpack.c.h.b16 %v4046
        %v4413 = vunpack.c.l.b16 %v4047
        %v4414 = vunpack.c.h.b16 %v4047
        %v4415 = vunpack.c.l.b16 %v4048
        %v4416 = vunpack.c.h.b16 %v4048
        %v4417 = vunpack.c.l.b16 %v4049
        %v4418 = vunpack.c.h.b16 %v4049
        %v4419 = vunpack.c.l.b16 %v4050
        %v4420 = vunpack.c.h.b16 %v4050
        %v4421 = vunpack.c.l.b16 %v4051
        %v4422 = vunpack.c.h.b16 %v4051
        %v4423 = vunpack.c.l.b16 %v4052
        %v4424 = vunpack.c.h.b16 %v4052
        %v4425 = vunpack.c.l.b16 %v4053
        %v4426 = vunpack.c.h.b16 %v4053
        %v4427 = vunpack.c.l.b16 %v4054
        %v4428 = vunpack.c.h.b16 %v4054
        %v4429 = vunpack.c.l.b16 %v4055
        %v4430 = vunpack.c.h.b16 %v4055
        %v4431 = vunpack.c.l.b16 %v4056
        %v4432 = vunpack.c.h.b16 %v4056
        %v4433 = vunpack.c.l.b16 %v4057
        %v4434 = vunpack.c.h.b16 %v4057
        %v4435 = vunpack.c.l.b16 %v4058
        %v4436 = vunpack.c.h.b16 %v4058
        %v4437 = vunpack.c.l.b16 %v4059
        %v4438 = vunpack.c.h.b16 %v4059
        %v4439 = vunpack.c.l.b16 %v4060
        %v4440 = vunpack.c.h.b16 %v4060
        %v4441 = vunpack.c.l.b16 %v4061
        %v4442 = vunpack.c.h.b16 %v4061
        %v4443 = vunpack.c.l.b16 %v4062
        %v4444 = vunpack.c.h.b16 %v4062
        %v4445 = vunpack.c.l.b16 %v4063
        %v4446 = vunpack.c.h.b16 %v4063
        %v4447 = vunpack.c.l.b16 %v4064
        %v4448 = vunpack.c.h.b16 %v4064
        %v4449 = vunpack.c.l.b16 %v4065
        %v4450 = vunpack.c.h.b16 %v4065
        %v4451 = vunpack.c.l.b16 %v4066
        %v4452 = vunpack.c.h.b16 %v4066
        %v4453 = vunpack.c.l.b16 %v4067
        %v4454 = vunpack.c.h.b16 %v4067
        %v4455 = vunpack.c.l.b16 %v4068
        %v4456 = vunpack.c.h.b16 %v4068
        %v4457 = vunpack.c.l.b16 %v4069
        %v4458 = vunpack.c.h.b16 %v4069
        %v4459 = vunpack.c.l.b16 %v4070
        %v4460 = vunpack.c.h.b16 %v4070
        %v4461 = vunpack.c.l.b16 %v4071
        %v4462 = vunpack.c.h.b16 %v4071
        %v4463 = vunpack.c.l.b16 %v4072
        %v4464 = vunpack.c.h.b16 %v4072
        %v4465 = vunpack.c.l.b16 %v4073
        %v4466 = vunpack.c.h.b16 %v4073
        %v4467 = vunpack.c.l.b16 %v4074
        %v4468 = vunpack.c.h.b16 %v4074
        %v4469 = vunpack.c.l.b16 %v4075
        %v4470 = vunpack.c.h.b16 %v4075
        %v4471 = vunpack.c.l.b16 %v4076
        %v4472 = vunpack.c.h.b16 %v4076
        %v4473 = vunpack.c.l.b16 %v4077
        %v4474 = vunpack.c.h.b16 %v4077
        %v4475 = vunpack.c.l.b16 %v4078
        %v4476 = vunpack.c.h.b16 %v4078
        %v4477 = vunpack.c.l.b16 %v4079
        %v4478 = vunpack.c.h.b16 %v4079
        %v4479 = vunpack.c.l.b16 %v4080
        %v4480 = vunpack.c.h.b16 %v4080
        %v4481 = vunpack.c.l.b16 %v4081
        %v4482 = vunpack.c.h.b16 %v4081
        %v4483 = vunpack.c.l.b16 %v4082
        %v4484 = vunpack.c.h.b16 %v4082
        %v4485 = vunpack.c.l.b16 %v4083
        %v4486 = vunpack.c.h.b16 %v4083
        %v4487 = vunpack.c.l.b16 %v4084
        %v4488 = vunpack.c.h.b16 %v4084
        %v4489 = vunpack.c.l.b16 %v4085
        %v4490 = vunpack.c.h.b16 %v4085
        %v4491 = vunpack.c.l.b16 %v4086
        %v4492 = vunpack.c.h.b16 %v4086
        %v4493 = vunpack.c.l.b16 %v4087
        %v4494 = vunpack.c.h.b16 %v4087
        %v4495 = vpack.c.b16 %v4243, %v4239
        %v4496 = vpack.c.b16 %v4244, %v4240
        %v4497 = vpack.c.b16 %v4245, %v4241
        %v4498 = vpack.c.b16 %v4246, %v4242
        %v4499 = vpack.c.b16 %v4251, %v4247
        %v4500 = vpack.c.b16 %v4252, %v4248
        %v4501 = vpack.c.b16 %v4253, %v4249
        %v4502 = vpack.c.b16 %v4254, %v4250
        %v4503 = vpack.c.b16 %v4259, %v4255
        %v4504 = vpack.c.b16 %v4260, %v4256
        %v4505 = vpack.c.b16 %v4261, %v4257
        %v4506 = vpack.c.b16 %v4262, %v4258
        %v4507 = vpack.c.b16 %v4267, %v4263
        %v4508 = vpack.c.b16 %v4268, %v4264
        %v4509 = vpack.c.b16 %v4269, %v4265
        %v4510 = vpack.c.b16 %v4270, %v4266
        %v4511 = vpack.c.b16 %v4275, %v4271
        %v4512 = vpack.c.b16 %v4276, %v4272
        %v4513 = vpack.c.b16 %v4277, %v4273
        %v4514 = vpack.c.b16 %v4278, %v4274
        %v4515 = vpack.c.b16 %v4283, %v4279
        %v4516 = vpack.c.b16 %v4284, %v4280
        %v4517 = vpack.c.b16 %v4285, %v4281
        %v4518 = vpack.c.b16 %v4286, %v4282
        %v4519 = vpack.c.b16 %v4291, %v4287
        %v4520 = vpack.c.b16 %v4292, %v4288
        %v4521 = vpack.c.b16 %v4293, %v4289
        %v4522 = vpack.c.b16 %v4294, %v4290
        %v4523 = vpack.c.b16 %v4299, %v4295
        %v4524 = vpack.c.b16 %v4300, %v4296
        %v4525 = vpack.c.b16 %v4301, %v4297
        %v4526 = vpack.c.b16 %v4302, %v4298
        %v4527 = vpack.c.b16 %v4307, %v4303
        %v4528 = vpack.c.b16 %v4308, %v4304
        %v4529 = vpack.c.b16 %v4309, %v4305
        %v4530 = vpack.c.b16 %v4310, %v4306
        %v4531 = vpack.c.b16 %v4315, %v4311
        %v4532 = vpack.c.b16 %v4316, %v4312
        %v4533 = vpack.c.b16 %v4317, %v4313
        %v4534 = vpack.c.b16 %v4318, %v4314
        %v4535 = vpack.c.b16 %v4323, %v4319
        %v4536 = vpack.c.b16 %v4324, %v4320
        %v4537 = vpack.c.b16 %v4325, %v4321
        %v4538 = vpack.c.b16 %v4326, %v4322
        %v4539 = vpack.c.b16 %v4331, %v4327
        %v4540 = vpack.c.b16 %v4332, %v4328
        %v4541 = vpack.c.b16 %v4333, %v4329
        %v4542 = vpack.c.b16 %v4334, %v4330
        %v4543 = vpack.c.b16 %v4339, %v4335
        %v4544 = vpack.c.b16 %v4340, %v4336
        %v4545 = vpack.c.b16 %v4341, %v4337
        %v4546 = vpack.c.b16 %v4342, %v4338
        %v4547 = vpack.c.b16 %v4347, %v4343
        %v4548 = vpack.c.b16 %v4348, %v4344
        %v4549 = vpack.c.b16 %v4349, %v4345
        %v4550 = vpack.c.b16 %v4350, %v4346
        %v4551 = vpack.c.b16 %v4355, %v4351
        %v4552 = vpack.c.b16 %v4356, %v4352
        %v4553 = vpack.c.b16 %v4357, %v4353
        %v4554 = vpack.c.b16 %v4358, %v4354
        %v4555 = vpack.c.b16 %v4363, %v4359
        %v4556 = vpack.c.b16 %v4364, %v4360
        %v4557 = vpack.c.b16 %v4365, %v4361
        %v4558 = vpack.c.b16 %v4366, %v4362
        %v4559 = vpack.c.b16 %v4371, %v4367
        %v4560 = vpack.c.b16 %v4372, %v4368
        %v4561 = vpack.c.b16 %v4373, %v4369
        %v4562 = vpack.c.b16 %v4374, %v4370
        %v4563 = vpack.c.b16 %v4379, %v4375
        %v4564 = vpack.c.b16 %v4380, %v4376
        %v4565 = vpack.c.b16 %v4381, %v4377
        %v4566 = vpack.c.b16 %v4382, %v4378
        %v4567 = vpack.c.b16 %v4387, %v4383
        %v4568 = vpack.c.b16 %v4388, %v4384
        %v4569 = vpack.c.b16 %v4389, %v4385
        %v4570 = vpack.c.b16 %v4390, %v4386
        %v4571 = vpack.c.b16 %v4395, %v4391
        %v4572 = vpack.c.b16 %v4396, %v4392
        %v4573 = vpack.c.b16 %v4397, %v4393
        %v4574 = vpack.c.b16 %v4398, %v4394
        %v4575 = vpack.c.b16 %v4403, %v4399
        %v4576 = vpack.c.b16 %v4404, %v4400
        %v4577 = vpack.c.b16 %v4405, %v4401
        %v4578 = vpack.c.b16 %v4406, %v4402
        %v4579 = vpack.c.b16 %v4411, %v4407
        %v4580 = vpack.c.b16 %v4412, %v4408
        %v4581 = vpack.c.b16 %v4413, %v4409
        %v4582 = vpack.c.b16 %v4414, %v4410
        %v4583 = vpack.c.b16 %v4419, %v4415
        %v4584 = vpack.c.b16 %v4420, %v4416
        %v4585 = vpack.c.b16 %v4421, %v4417
        %v4586 = vpack.c.b16 %v4422, %v4418
        %v4587 = vpack.c.b16 %v4427, %v4423
        %v4588 = vpack.c.b16 %v4428, %v4424
        %v4589 = vpack.c.b16 %v4429, %v4425
        %v4590 = vpack.c.b16 %v4430, %v4426
        %v4591 = vpack.c.b16 %v4435, %v4431
        %v4592 = vpack.c.b16 %v4436, %v4432
        %v4593 = vpack.c.b16 %v4437, %v4433
        %v4594 = vpack.c.b16 %v4438, %v4434
        %v4595 = vpack.c.b16 %v4443, %v4439
        %v4596 = vpack.c.b16 %v4444, %v4440
        %v4597 = vpack.c.b16 %v4445, %v4441
        %v4598 = vpack.c.b16 %v4446, %v4442
        %v4599 = vpack.c.b16 %v4451, %v4447
        %v4600 = vpack.c.b16 %v4452, %v4448
        %v4601 = vpack.c.b16 %v4453, %v4449
        %v4602 = vpack.c.b16 %v4454, %v4450
        %v4603 = vpack.c.b16 %v4459, %v4455
        %v4604 = vpack.c.b16 %v4460, %v4456
        %v4605 = vpack.c.b16 %v4461, %v4457
        %v4606 = vpack.c.b16 %v4462, %v4458
        %v4607 = vpack.c.b16 %v4467, %v4463
        %v4608 = vpack.c.b16 %v4468, %v4464
        %v4609 = vpack.c.b16 %v4469, %v4465
        %v4610 = vpack.c.b16 %v4470, %v4466
        %v4611 = vpack.c.b16 %v4475, %v4471
        %v4612 = vpack.c.b16 %v4476, %v4472
        %v4613 = vpack.c.b16 %v4477, %v4473
        %v4614 = vpack.c.b16 %v4478, %v4474
        %v4615 = vpack.c.b16 %v4483, %v4479
        %v4616 = vpack.c.b16 %v4484, %v4480
        %v4617 = vpack.c.b16 %v4485, %v4481
        %v4618 = vpack.c.b16 %v4486, %v4482
        %v4619 = vpack.c.b16 %v4491, %v4487
        %v4620 = vpack.c.b16 %v4492, %v4488
        %v4621 = vpack.c.b16 %v4493, %v4489
        %v4622 = vpack.c.b16 %v4494, %v4490
        %4751 = vmatprep.subr.bf16.mxu0 %v4524
        %4752 = vmatpush1.bf16.msra.mxu0 %v4523
        %4753 = vmatprep.subr.bf16.mxu0 %v4520
        %4754 = vmatpush1.bf16.msra.mxu0 %v4519
        %4755 = vmatprep.subr.bf16.mxu0 %v4516
        %4756 = vmatpush1.bf16.msra.mxu0 %v4515
        %4757 = vmatprep.subr.bf16.mxu0 %v4512
        %4758 = vmatpush1.bf16.msra.mxu0 %v4511
        %4759 = vmatprep.subr.bf16.mxu0 %v4508
        %4760 = vmatpush1.bf16.msra.mxu0 %v4507
        %4761 = vmatprep.subr.bf16.mxu0 %v4504
        %4762 = vmatpush1.bf16.msra.mxu0 %v4503
        %4763 = vmatprep.subr.bf16.mxu0 %v4500
        %4764 = vmatpush1.bf16.msra.mxu0 %v4499
        %4765 = vmatprep.subr.bf16.mxu0 %v4496
        %4766 = vmatpush1.bf16.msra.mxu0 %v4495
        %4767 = vmatprep.subr.bf16.mxu0 %v4556
        %4768 = vmatpush2.bf16.msra.mxu0 %v4555
        %4769 = vmatprep.subr.bf16.mxu0 %v4552
        %4770 = vmatpush2.bf16.msra.mxu0 %v4551
        %4771 = vmatprep.subr.bf16.mxu0 %v4548
        %4772 = vmatpush2.bf16.msra.mxu0 %v4547
        %4773 = vmatprep.subr.bf16.mxu0 %v4544
        %4774 = vmatpush2.bf16.msra.mxu0 %v4543
        %4775 = vmatprep.subr.bf16.mxu0 %v4540
        %4776 = vmatpush2.bf16.msra.mxu0 %v4539
        %4777 = vmatprep.subr.bf16.mxu0 %v4536
        %4778 = vmatpush2.bf16.msra.mxu0 %v4535
        %4779 = vmatprep.subr.bf16.mxu0 %v4532
        %4780 = vmatpush2.bf16.msra.mxu0 %v4531
        %4781 = vmatprep.subr.bf16.mxu0 %v4528
        %4782 = vmatpush2.bf16.msra.mxu0 %v4527
        %4783 = vmatprep.mubr.bf16.mxu0 %v3956
        %4784 = vmatmul.mubr.bf16.gmra.mxu0 %v3955
        %v4785 = vpop.f32.mrf.mxu0
        %v4786 = vadd.f32 %v4094, %v4785
        %v4787 = vpop.f32.mrf.mxu0
        %v4788 = vadd.f32 %v4098, %v4787
        %v4789 = vpop.f32.mrf.mxu0
        %v4790 = vpop.f32.mrf.mxu0
        %4791 = vdwg.mxu0
        %4792 = vmatprep.subr.bf16.mxu0 %v4588
        %4793 = vmatpush1.bf16.msra.mxu0 %v4587
        %4794 = vmatprep.subr.bf16.mxu0 %v4584
        %4795 = vmatpush1.bf16.msra.mxu0 %v4583
        %4796 = vmatprep.subr.bf16.mxu0 %v4580
        %4797 = vmatpush1.bf16.msra.mxu0 %v4579
        %4798 = vmatprep.subr.bf16.mxu0 %v4576
        %4799 = vmatpush1.bf16.msra.mxu0 %v4575
        %4800 = vmatprep.subr.bf16.mxu0 %v4572
        %4801 = vmatpush1.bf16.msra.mxu0 %v4571
        %4802 = vmatprep.subr.bf16.mxu0 %v4568
        %4803 = vmatpush1.bf16.msra.mxu0 %v4567
        %4804 = vmatprep.subr.bf16.mxu0 %v4564
        %4805 = vmatpush1.bf16.msra.mxu0 %v4563
        %4806 = vmatprep.subr.bf16.mxu0 %v4560
        %4807 = vmatpush1.bf16.msra.mxu0 %v4559
        %4808 = vmatprep.subr.bf16.mxu0 %v4620
        %4809 = vmatpush2.bf16.msra.mxu0 %v4619
        %4810 = vmatprep.subr.bf16.mxu0 %v4616
        %4811 = vmatpush2.bf16.msra.mxu0 %v4615
        %4812 = vmatprep.subr.bf16.mxu0 %v4612
        %4813 = vmatpush2.bf16.msra.mxu0 %v4611
        %4814 = vmatprep.subr.bf16.mxu0 %v4608
        %4815 = vmatpush2.bf16.msra.mxu0 %v4607
        %4816 = vmatprep.subr.bf16.mxu0 %v4604
        %4817 = vmatpush2.bf16.msra.mxu0 %v4603
        %4818 = vmatprep.subr.bf16.mxu0 %v4600
        %4819 = vmatpush2.bf16.msra.mxu0 %v4599
        %4820 = vmatprep.subr.bf16.mxu0 %v4596
        %4821 = vmatpush2.bf16.msra.mxu0 %v4595
        %4822 = vmatprep.subr.bf16.mxu0 %v4592
        %4823 = vmatpush2.bf16.msra.mxu0 %v4591
        %4824 = vmatprep.mubr.bf16.mxu0 %v3958
        %4825 = vmatmul.mubr.bf16.gmra.mxu0 %v3957
        %v4826 = vpop.f32.mrf.mxu0
        %v4827 = vadd.f32 %v4786, %v4826
        %v4828 = vpop.f32.mrf.mxu0
        %v4829 = vadd.f32 %v4788, %v4828
        %v4830 = vpop.f32.mrf.mxu0
        %v4831 = vpop.f32.mrf.mxu0
        %4832 = vdwg.mxu0
        %4833 = vmatprep.subr.bf16.mxu0 %v4526
        %4834 = vmatpush1.bf16.msra.mxu0 %v4525
        %4835 = vmatprep.subr.bf16.mxu0 %v4522
        %4836 = vmatpush1.bf16.msra.mxu0 %v4521
        %4837 = vmatprep.subr.bf16.mxu0 %v4518
        %4838 = vmatpush1.bf16.msra.mxu0 %v4517
        %4839 = vmatprep.subr.bf16.mxu0 %v4514
        %4840 = vmatpush1.bf16.msra.mxu0 %v4513
        %4841 = vmatprep.subr.bf16.mxu0 %v4510
        %4842 = vmatpush1.bf16.msra.mxu0 %v4509
        %4843 = vmatprep.subr.bf16.mxu0 %v4506
        %4844 = vmatpush1.bf16.msra.mxu0 %v4505
        %4845 = vmatprep.subr.bf16.mxu0 %v4502
        %4846 = vmatpush1.bf16.msra.mxu0 %v4501
        %4847 = vmatprep.subr.bf16.mxu0 %v4498
        %4848 = vmatpush1.bf16.msra.mxu0 %v4497
        %4849 = vmatprep.subr.bf16.mxu0 %v4558
        %4850 = vmatpush2.bf16.msra.mxu0 %v4557
        %4851 = vmatprep.subr.bf16.mxu0 %v4554
        %4852 = vmatpush2.bf16.msra.mxu0 %v4553
        %4853 = vmatprep.subr.bf16.mxu0 %v4550
        %4854 = vmatpush2.bf16.msra.mxu0 %v4549
        %4855 = vmatprep.subr.bf16.mxu0 %v4546
        %4856 = vmatpush2.bf16.msra.mxu0 %v4545
        %4857 = vmatprep.subr.bf16.mxu0 %v4542
        %4858 = vmatpush2.bf16.msra.mxu0 %v4541
        %4859 = vmatprep.subr.bf16.mxu0 %v4538
        %4860 = vmatpush2.bf16.msra.mxu0 %v4537
        %4861 = vmatprep.subr.bf16.mxu0 %v4534
        %4862 = vmatpush2.bf16.msra.mxu0 %v4533
        %4863 = vmatprep.subr.bf16.mxu0 %v4530
        %4864 = vmatpush2.bf16.msra.mxu0 %v4529
        %4865 = vmatprep.mubr.bf16.mxu0 %v3956
        %4866 = vmatmul.mubr.bf16.gmra.mxu0 %v3955
        %v4867 = vpop.f32.mrf.mxu0
        %v4868 = vadd.f32 %v4102, %v4867
        %v4869 = vpop.f32.mrf.mxu0
        %v4870 = vadd.f32 %v4106, %v4869
        %v4871 = vpop.f32.mrf.mxu0
        %v4872 = vpop.f32.mrf.mxu0
        %4873 = vdwg.mxu0
        %4874 = vmatprep.subr.bf16.mxu0 %v4590
        %4875 = vmatpush1.bf16.msra.mxu0 %v4589
        %4876 = vmatprep.subr.bf16.mxu0 %v4586
        %4877 = vmatpush1.bf16.msra.mxu0 %v4585
        %4878 = vmatprep.subr.bf16.mxu0 %v4582
        %4879 = vmatpush1.bf16.msra.mxu0 %v4581
        %4880 = vmatprep.subr.bf16.mxu0 %v4578
        %4881 = vmatpush1.bf16.msra.mxu0 %v4577
        %4882 = vmatprep.subr.bf16.mxu0 %v4574
        %4883 = vmatpush1.bf16.msra.mxu0 %v4573
        %4884 = vmatprep.subr.bf16.mxu0 %v4570
        %4885 = vmatpush1.bf16.msra.mxu0 %v4569
        %4886 = vmatprep.subr.bf16.mxu0 %v4566
        %4887 = vmatpush1.bf16.msra.mxu0 %v4565
        %4888 = vmatprep.subr.bf16.mxu0 %v4562
        %4889 = vmatpush1.bf16.msra.mxu0 %v4561
        %4890 = vmatprep.subr.bf16.mxu0 %v4622
        %4891 = vmatpush2.bf16.msra.mxu0 %v4621
        %4892 = vmatprep.subr.bf16.mxu0 %v4618
        %4893 = vmatpush2.bf16.msra.mxu0 %v4617
        %4894 = vmatprep.subr.bf16.mxu0 %v4614
        %4895 = vmatpush2.bf16.msra.mxu0 %v4613
        %4896 = vmatprep.subr.bf16.mxu0 %v4610
        %4897 = vmatpush2.bf16.msra.mxu0 %v4609
        %4898 = vmatprep.subr.bf16.mxu0 %v4606
        %4899 = vmatpush2.bf16.msra.mxu0 %v4605
        %4900 = vmatprep.subr.bf16.mxu0 %v4602
        %4901 = vmatpush2.bf16.msra.mxu0 %v4601
        %4902 = vmatprep.subr.bf16.mxu0 %v4598
        %4903 = vmatpush2.bf16.msra.mxu0 %v4597
        %4904 = vmatprep.subr.bf16.mxu0 %v4594
        %4905 = vmatpush2.bf16.msra.mxu0 %v4593
        %4906 = vmatprep.mubr.bf16.mxu0 %v3958
        %4907 = vmatmul.mubr.bf16.gmra.mxu0 %v3957
        %v4908 = vpop.f32.mrf.mxu0
        %v4909 = vadd.f32 %v4868, %v4908
        %v4910 = vpop.f32.mrf.mxu0
        %v4911 = vadd.f32 %v4870, %v4910
        %v4912 = vpop.f32.mrf.mxu0
        %v4913 = vpop.f32.mrf.mxu0
        %4914 = vdwg.mxu0
        %v4915 = vmul.f32 %v4827, 0.5
        %v4916 = vmul.f32 %v4829, 0.5
        %v4917 = vmul.f32 %v4909, 0.5
        %v4918 = vmul.f32 %v4911, 0.5
        %v4919 = vmul.f32 %v4827, 0.70710677
        %v4920 = vmul.f32 %v4829, 0.70710677
        %v4921 = vmul.f32 %v4909, 0.70710677
        %v4922 = vmul.f32 %v4911, 0.70710677
        %vm4923 = vcmp.ge.f32.partialorder %v4919, 0.0
        %vm4924 = vcmp.ge.f32.partialorder %v4920, 0.0
        %vm4925 = vcmp.ge.f32.partialorder %v4921, 0.0
        %vm4926 = vcmp.ge.f32.partialorder %v4922, 0.0
        %v4927 = vsel %vm4923, 1.0, -1.0
        %v4928 = vsel %vm4924, 1.0, -1.0
        %v4929 = vsel %vm4925, 1.0, -1.0
        %v4930 = vsel %vm4926, 1.0, -1.0
        %v4931 = vand.u32 2147483647, %v4919
        %v4932 = vand.u32 2147483647, %v4920
        %v4933 = vand.u32 2147483647, %v4921
        %v4934 = vand.u32 2147483647, %v4922
        %v4935 = vmul.f32 %v4931, 0.3275911
        %v4936 = vmul.f32 %v4932, 0.3275911
        %v4937 = vmul.f32 %v4933, 0.3275911
        %v4938 = vmul.f32 %v4934, 0.3275911
        %v4939 = vadd.f32 %v4935, 1.0
        %v4940 = vadd.f32 %v4936, 1.0
        %v4941 = vadd.f32 %v4937, 1.0
        %v4942 = vadd.f32 %v4938, 1.0
        %v4943 = vrcp.pop %v4939
        %v4944 = vrcp.pop %v4940
        %v4945 = vrcp.pop %v4941
        %v4946 = vrcp.pop %v4942
        %v4947 = vmul.f32 %v4943, 1.0614054
        %v4948 = vmul.f32 %v4944, 1.0614054
        %v4949 = vmul.f32 %v4945, 1.0614054
        %v4950 = vmul.f32 %v4946, 1.0614054
        %v4951 = vadd.f32 %v4947, -1.4531521
        %v4952 = vadd.f32 %v4948, -1.4531521
        %v4953 = vadd.f32 %v4949, -1.4531521
        %v4954 = vadd.f32 %v4950, -1.4531521
        %v4955 = vmul.f32 %v4951, %v4943
        %v4956 = vmul.f32 %v4952, %v4944
        %v4957 = vmul.f32 %v4953, %v4945
        %v4958 = vmul.f32 %v4954, %v4946
        %v4959 = vadd.f32 %v4955, 1.4214138
        %v4960 = vadd.f32 %v4956, 1.4214138
        %v4961 = vadd.f32 %v4957, 1.4214138
        %v4962 = vadd.f32 %v4958, 1.4214138
        %v4963 = vmul.f32 %v4959, %v4943
        %v4964 = vmul.f32 %v4960, %v4944
        %v4965 = vmul.f32 %v4961, %v4945
        %v4966 = vmul.f32 %v4962, %v4946
        %v4967 = vadd.f32 %v4963, -0.28449672
        %v4968 = vadd.f32 %v4964, -0.28449672
        %v4969 = vadd.f32 %v4965, -0.28449672
        %v4970 = vadd.f32 %v4966, -0.28449672
        %v4971 = vmul.f32 %v4967, %v4943
        %v4972 = vmul.f32 %v4968, %v4944
        %v4973 = vmul.f32 %v4969, %v4945
        %v4974 = vmul.f32 %v4970, %v4946
        %v4975 = vadd.f32 %v4971, 0.2548296
        %v4976 = vadd.f32 %v4972, 0.2548296
        %v4977 = vadd.f32 %v4973, 0.2548296
        %v4978 = vadd.f32 %v4974, 0.2548296
        %v4979 = vmul.f32 %v4975, %v4943
        %v4980 = vmul.f32 %v4976, %v4944
        %v4981 = vmul.f32 %v4977, %v4945
        %v4982 = vmul.f32 %v4978, %v4946
        %v4983 = vsub.f32 0.0, %v4931
        %v4984 = vsub.f32 0.0, %v4932
        %v4985 = vsub.f32 0.0, %v4933
        %v4986 = vsub.f32 0.0, %v4934
        %v4987 = vmul.f32 %v4983, %v4931
        %v4988 = vmul.f32 %v4984, %v4932
        %v4989 = vmul.f32 %v4985, %v4933
        %v4990 = vmul.f32 %v4986, %v4934
        %v4991 = vmul.f32 %v4987, 1.442695
        %v4992 = vpow.pop %v4991
        %v4993 = vmul.f32 %v4988, 1.442695
        %v4994 = vpow.pop %v4993
        %v4995 = vmul.f32 %v4989, 1.442695
        %v4996 = vpow.pop %v4995
        %v4997 = vmul.f32 %v4990, 1.442695
        %v4998 = vpow.pop %v4997
        %v4999 = vmul.f32 %v4979, %v4992
        %v5000 = vmul.f32 %v4980, %v4994
        %v5001 = vmul.f32 %v4981, %v4996
        %v5002 = vmul.f32 %v4982, %v4998
        %v5003 = vsub.f32 1.0, %v4999
        %v5004 = vsub.f32 1.0, %v5000
        %v5005 = vsub.f32 1.0, %v5001
        %v5006 = vsub.f32 1.0, %v5002
        %v5007 = vmul.f32 %v4927, %v5003
        %v5008 = vmul.f32 %v4928, %v5004
        %v5009 = vmul.f32 %v4929, %v5005
        %v5010 = vmul.f32 %v4930, %v5006
        %v5011 = vadd.f32 %v5007, 1.0
        %v5012 = vadd.f32 %v5008, 1.0
        %v5013 = vadd.f32 %v5009, 1.0
        %v5014 = vadd.f32 %v5010, 1.0
        %v5015 = vmul.f32 %v4915, %v5011
        %v5016 = vmul.f32 %v4916, %v5012
        %v5017 = vmul.f32 %v4917, %v5013
        %v5018 = vmul.f32 %v4918, %v5014
        %v5019 = vadd.f32 %v5015, %v2879
        %v5020 = vadd.f32 %v5016, %v2887
        %v5021 = vadd.f32 %v5017, %v2886
        %v5022 = vadd.f32 %v5018, %v2888
        %v5027 = vcombine.low %v5019, %v5020
        %v5028 = vcombine.low %v5021, %v5022
        %v5030 = vunpack.c.l.s4 1983009808
        %v5031 = vunpack.c.0.s8 %v5030
        %v5032 = vlaneseq
        %v5033 = vshrl.u32 %v5032, 7
        %v5034 = vsub.s32 %v5031, %v5033
        %v5035 = vrot.slane %v5027, %v5034
        %v5037 = vunpack.c.l.s4 1983009808
        %v5038 = vunpack.c.0.s8 %v5037
        %v5039 = vlaneseq
        %v5040 = vshrl.u32 %v5039, 7
        %v5041 = vsub.s32 %v5038, %v5040
        %v5042 = vrot.slane %v5028, %v5041
        %v5043 = vcombine.low %v5035, %v5042
        %5045 = vst [vmem:[#allocation2] sm:$0xff] %v5043
        %p5046 = scmp.eq.s32.totalorder %s24, 2
        // Predicated region
        $region93: #{ind_mlp_forward.1} parent=55 // pred_check
          %p5047 = pneg %p5046
        $region94: #{ind_mlp_forward.1} parent=55 // pred_check_branch
          %5049 = sbr.rel (%p5047) target = $region96
        $region95: #{ind_mlp_forward.1} parent=55 // pred_region
          %v5050 = vld [vmem:[#allocation13] sm:$0xff]
          %v5051 = vld [vmem:[#allocation14] sm:$0x1]
          %v5053 = vlaneseq
          %v5054 = vshrl.u32 %v5053, 7
          %v5055 = vsub.s32 0, %v5054
          %v5056 = vrot.slane %v5051, %v5055
          %v5059 = vcombine.high %v5050, %v5050
          %v5061 = vunpack.c.l.s4 1983009808
          %v5062 = vunpack.c.0.s8 %v5061
          %v5063 = vlaneseq
          %v5064 = vshrl.u32 %v5063, 7
          %v5065 = vsub.s32 %v5062, %v5064
          %v5066 = vrot.slane %v5050, %v5065
          %v5068 = vunpack.c.l.s4 1983009808
          %v5069 = vunpack.c.0.s8 %v5068
          %v5070 = vlaneseq
          %v5071 = vshrl.u32 %v5070, 7
          %v5072 = vsub.s32 %v5069, %v5071
          %v5073 = vrot.slane %v5059, %v5072
          %v5074 = vcombine.high %v5066, %v5066
          %v5075 = vcombine.high %v5073, %v5073
          %5080 = vmatprep.subr.mxu0 0.0
          %5081 = vmatpush1.xpose.msra.mxu0 0.0
          %5082 = vmatprep.subr.mxu0 0.0
          %5083 = vmatpush1.xpose.msra.mxu0 0.0
          %5084 = vmatprep.subr.mxu0 0.0
          %5085 = vmatpush1.xpose.msra.mxu0 0.0
          %5086 = vmatprep.subr.mxu0 0.0
          %5087 = vmatpush1.xpose.msra.mxu0 0.0
          %5088 = vmatprep.subr.mxu0 0.0
          %5089 = vmatpush1.xpose.msra.mxu0 0.0
          %5090 = vmatprep.subr.mxu0 0.0
          %5091 = vmatpush1.xpose.msra.mxu0 0.0
          %5092 = vmatprep.subr.mxu0 0.0
          %5093 = vmatpush1.xpose.msra.mxu0 0.0
          %5094 = vmatprep.subr.mxu0 0.0
          %5095 = vmatpush1.xpose.msra.mxu0 0.0
          %5096 = vmatprep.subr.mxu0 0.0
          %5097 = vmatpush1.xpose.msra.mxu0 0.0
          %5098 = vmatprep.subr.mxu0 0.0
          %5099 = vmatpush1.xpose.msra.mxu0 0.0
          %5100 = vmatprep.subr.mxu0 0.0
          %5101 = vmatpush1.xpose.msra.mxu0 0.0
          %5102 = vmatprep.subr.mxu0 0.0
          %5103 = vmatpush1.xpose.msra.mxu0 0.0
          %5104 = vmatprep.subr.mxu0 0.0
          %5105 = vmatpush1.xpose.msra.mxu0 0.0
          %5106 = vmatprep.subr.mxu0 0.0
          %5107 = vmatpush1.xpose.msra.mxu0 0.0
          %5108 = vmatprep.subr.mxu0 0.0
          %5109 = vmatpush1.xpose.msra.mxu0 0.0
          %5110 = vmatprep.subr.mxu0 %v5074
          %5111 = vmatpush1.xpose.msra.mxu0 %v5066
          %5112 = vmatprep.subr.mxu0 0.0
          %5113 = vmatpush2.xpose.msra.mxu0 0.0
          %5114 = vmatprep.subr.mxu0 0.0
          %5115 = vmatpush2.xpose.msra.mxu0 0.0
          %5116 = vmatprep.subr.mxu0 0.0
          %5117 = vmatpush2.xpose.msra.mxu0 0.0
          %5118 = vmatprep.subr.mxu0 0.0
          %5119 = vmatpush2.xpose.msra.mxu0 0.0
          %5120 = vmatprep.subr.mxu0 0.0
          %5121 = vmatpush2.xpose.msra.mxu0 0.0
          %5122 = vmatprep.subr.mxu0 0.0
          %5123 = vmatpush2.xpose.msra.mxu0 0.0
          %5124 = vmatprep.subr.mxu0 0.0
          %5125 = vmatpush2.xpose.msra.mxu0 0.0
          %5126 = vmatprep.subr.mxu0 0.0
          %5127 = vmatpush2.xpose.msra.mxu0 0.0
          %5128 = vmatprep.subr.mxu0 0.0
          %5129 = vmatpush2.xpose.msra.mxu0 0.0
          %5130 = vmatprep.subr.mxu0 0.0
          %5131 = vmatpush2.xpose.msra.mxu0 0.0
          %5132 = vmatprep.subr.mxu0 0.0
          %5133 = vmatpush2.xpose.msra.mxu0 0.0
          %5134 = vmatprep.subr.mxu0 0.0
          %5135 = vmatpush2.xpose.msra.mxu0 0.0
          %5136 = vmatprep.subr.mxu0 0.0
          %5137 = vmatpush2.xpose.msra.mxu0 0.0
          %5138 = vmatprep.subr.mxu0 0.0
          %5139 = vmatpush2.xpose.msra.mxu0 0.0
          %5140 = vmatprep.subr.mxu0 0.0
          %5141 = vmatpush2.xpose.msra.mxu0 0.0
          %5142 = vmatprep.subr.mxu0 0.0
          %5143 = vmatpush2.xpose.msra.mxu0 0.0
          %5144 = vmatprep.mubr.f32.mxu0 %v5020
          %5145 = vmatmul.mubr.f32.gmra.mxu0 %v5019
          %v5146 = vpop.f32.mrf.mxu0
          %v5147 = vadd.f32 %v5056, %v5146
          %v5148 = vpop.f32.mrf.mxu0
          %5149 = vdwg.mxu0
          %5150 = vmatprep.subr.mxu0 0.0
          %5151 = vmatpush1.xpose.msra.mxu0 0.0
          %5152 = vmatprep.subr.mxu0 0.0
          %5153 = vmatpush1.xpose.msra.mxu0 0.0
          %5154 = vmatprep.subr.mxu0 0.0
          %5155 = vmatpush1.xpose.msra.mxu0 0.0
          %5156 = vmatprep.subr.mxu0 0.0
          %5157 = vmatpush1.xpose.msra.mxu0 0.0
          %5158 = vmatprep.subr.mxu0 0.0
          %5159 = vmatpush1.xpose.msra.mxu0 0.0
          %5160 = vmatprep.subr.mxu0 0.0
          %5161 = vmatpush1.xpose.msra.mxu0 0.0
          %5162 = vmatprep.subr.mxu0 0.0
          %5163 = vmatpush1.xpose.msra.mxu0 0.0
          %5164 = vmatprep.subr.mxu0 0.0
          %5165 = vmatpush1.xpose.msra.mxu0 0.0
          %5166 = vmatprep.subr.mxu0 0.0
          %5167 = vmatpush1.xpose.msra.mxu0 0.0
          %5168 = vmatprep.subr.mxu0 0.0
          %5169 = vmatpush1.xpose.msra.mxu0 0.0
          %5170 = vmatprep.subr.mxu0 0.0
          %5171 = vmatpush1.xpose.msra.mxu0 0.0
          %5172 = vmatprep.subr.mxu0 0.0
          %5173 = vmatpush1.xpose.msra.mxu0 0.0
          %5174 = vmatprep.subr.mxu0 0.0
          %5175 = vmatpush1.xpose.msra.mxu0 0.0
          %5176 = vmatprep.subr.mxu0 0.0
          %5177 = vmatpush1.xpose.msra.mxu0 0.0
          %5178 = vmatprep.subr.mxu0 0.0
          %5179 = vmatpush1.xpose.msra.mxu0 0.0
          %5180 = vmatprep.subr.mxu0 %v5075
          %5181 = vmatpush1.xpose.msra.mxu0 %v5073
          %5182 = vmatprep.subr.mxu0 0.0
          %5183 = vmatpush2.xpose.msra.mxu0 0.0
          %5184 = vmatprep.subr.mxu0 0.0
          %5185 = vmatpush2.xpose.msra.mxu0 0.0
          %5186 = vmatprep.subr.mxu0 0.0
          %5187 = vmatpush2.xpose.msra.mxu0 0.0
          %5188 = vmatprep.subr.mxu0 0.0
          %5189 = vmatpush2.xpose.msra.mxu0 0.0
          %5190 = vmatprep.subr.mxu0 0.0
          %5191 = vmatpush2.xpose.msra.mxu0 0.0
          %5192 = vmatprep.subr.mxu0 0.0
          %5193 = vmatpush2.xpose.msra.mxu0 0.0
          %5194 = vmatprep.subr.mxu0 0.0
          %5195 = vmatpush2.xpose.msra.mxu0 0.0
          %5196 = vmatprep.subr.mxu0 0.0
          %5197 = vmatpush2.xpose.msra.mxu0 0.0
          %5198 = vmatprep.subr.mxu0 0.0
          %5199 = vmatpush2.xpose.msra.mxu0 0.0
          %5200 = vmatprep.subr.mxu0 0.0
          %5201 = vmatpush2.xpose.msra.mxu0 0.0
          %5202 = vmatprep.subr.mxu0 0.0
          %5203 = vmatpush2.xpose.msra.mxu0 0.0
          %5204 = vmatprep.subr.mxu0 0.0
          %5205 = vmatpush2.xpose.msra.mxu0 0.0
          %5206 = vmatprep.subr.mxu0 0.0
          %5207 = vmatpush2.xpose.msra.mxu0 0.0
          %5208 = vmatprep.subr.mxu0 0.0
          %5209 = vmatpush2.xpose.msra.mxu0 0.0
          %5210 = vmatprep.subr.mxu0 0.0
          %5211 = vmatpush2.xpose.msra.mxu0 0.0
          %5212 = vmatprep.subr.mxu0 0.0
          %5213 = vmatpush2.xpose.msra.mxu0 0.0
          %5214 = vmatprep.mubr.f32.mxu0 %v5022
          %5215 = vmatmul.mubr.f32.gmra.mxu0 %v5021
          %v5216 = vpop.f32.mrf.mxu0
          %v5217 = vadd.f32 %v5147, %v5216
          %v5218 = vpop.f32.mrf.mxu0
          %5219 = vdwg.mxu0
          %vm5220 = vcmask 9216
          %v5221 = vsel %vm5220, %v5217, -inf
          %5222 = vmax.xlane.f32.xlu0 %v5221
          %v5223 = vpop.xlane.xlu0 %5222
          %v5224 = vsub.f32 %v5217, %v5223
          %v5225 = vmul.f32 %v5224, 1.442695
          %v5226 = vpow.pop %v5225
          %v5227 = vsel %vm5220, %v5226, 0.0
          %5228 = vadd.xlane.f32.xlu0 %v5227
          %v5229 = vpop.xlane.xlu0 %5228
          %v5230 = vrcp.pop %v5229
          %v5231 = vmul.f32 %v5226, %v5230
          %5232 = vst.msk [vmem:[#allocation15] sm:$0x3] %vm5220, %v5231
        $region96: #{ind_mlp_forward.1} parent=55 // pred_fallthru
          _
        // Predicated region
        $region97: #{ind_mlp_forward.1} parent=55 // pred_check
          %p5233 = pneg %p236
        $region98: #{ind_mlp_forward.1} parent=55 // pred_check_branch
          %5235 = sbr.rel (%p5233) target = $region100
        $region99: #{ind_mlp_forward.1} parent=55 // pred_region
          %s5237 = ssub.s32 32, 32
          %5238 = vsyncadd [#allocation5], %s5237
          %s5240 = sshll.u32 [#allocation15], 4
          %s5241 = int_to_ptr.vmem [resolvable:$true] %s5240
          %5243 = dma.vmem_to_hbm [thread:$0]  %s5241, 32, %s9, [#allocation5]
        $region100: #{ind_mlp_forward.1} parent=55 // pred_fallthru
          _
        // Predicated region
        $region101: #{ind_mlp_forward.1} parent=55 // pred_check
          %p5244 = pneg %p236
        $region102: #{ind_mlp_forward.1} parent=55 // pred_check_branch
          %5246 = sbr.rel (%p5244) target = $region104
        $region103: #{ind_mlp_forward.1} parent=55 // pred_region
          %5247 = dma.done [#allocation5], 32
        $region104: #{ind_mlp_forward.1} parent=55 // pred_fallthru
          _
      $region56: #{ind_mlp_forward.1} parent=5 // pred_fallthru
        _
      %p5248 = scmp.le.s32.totalorder 2, %s19
      // Predicated region
      $region105: #{ind_mlp_forward.1} parent=5 // pred_check
        %p5249 = pneg %p5248
      $region106: #{ind_mlp_forward.1} parent=5 // pred_check_branch
        %5251 = sbr.rel (%p5249) target = $region108
      $region107: #{ind_mlp_forward.1} parent=5 // pred_region
        %s5252 = ssub.s32 %s19, 2
      $region108: #{ind_mlp_forward.1} parent=5 // pred_fallthru
        _
    $region6: #{ind_mlp_forward.1} parent=1 // loop_footer
      %s23 = sadd.s32 1, %s19
    $region7: #{ind_mlp_forward.1} parent=1 // loop_footer_branch
      %18 = sbr.rel target = $region3
    $region8: #{ind_mlp_forward.1} parent=1 // loop_exit
      _
    %5253 = vsyncpa [#allocation4], 1
    %s5254 = scalar_lea.sflag [#allocation4], 1
    %5255 = vsyncpa %s5254, 1
    %5256 = vsyncpa [#allocation7], 1
    %5257 = vsyncpa [#allocation10], 1
    %5258 = vsyncpa [#allocation5], 1
    %s5259 = scalar_lea.sflag [#allocation5], 1
    %5260 = vsyncpa %s5259, 1

</llo_original>
